<compile_context>
chip_gen: v6e
topology: v6e:2x2x1
jax: 0.10.0
libtpu: 0.0.40
codegen_flags: <defaults>
</compile_context>

<pallas_src>
import functools

import jax
import jax.numpy as jnp
from jax.experimental import pallas as pl
from jax.experimental.pallas import tpu as pltpu


MXU_DTYPE = jnp.bfloat16                       # MXU operand dtype (accumulation is always f32)
_K_ALIGN = 16 if MXU_DTYPE == jnp.bfloat16 else 8   # contraction-dim padding granularity


def _round_up(x, m):
    return (x + m - 1) // m * m


def _chip_vmem_bytes():
    try:
        return int(pltpu.get_tpu_info().vmem_capacity_bytes)
    except Exception:
        return 128 * 1024 * 1024


_CHIP_VMEM = _chip_vmem_bytes()
# Scoped VMEM budget: generous on 128 MiB parts (v5e/v6e), conservative on v7x (64 MiB).
_VMEM_LIMIT = max(32 * 1024 * 1024, min(64 * 1024 * 1024, _CHIP_VMEM // 2))
# GroupNorm per-grid-step block budget (bigger blocks amortize per-step overhead).
_GN_BLOCK_BYTES = 8 * 1024 * 1024 if _CHIP_VMEM >= 96 * 1024 * 1024 else 4 * 1024 * 1024


# ----------------------------------------------------------------------------
# Pallas kernels
# ----------------------------------------------------------------------------
def gn_relu_kernel(x_ref, g_ref, b_ref, o_ref, *, eps, inv_count):
    # x block: (bn, R, L) lane-dense view of per-sample flattened NHWC data.
    # GroupNorm(1, C): per-sample stats over all C*H*W elements, per-channel affine, ReLU.
    x = x_ref[...].astype(jnp.float32)
    s = jnp.sum(x, axis=2, keepdims=True)                 # reduce lanes
    mean = jnp.sum(s, axis=1, keepdims=True) * inv_count  # reduce sublanes -> (bn,1,1)
    d = x - mean
    s2 = jnp.sum(d * d, axis=2, keepdims=True)
    var = jnp.sum(s2, axis=1, keepdims=True) * inv_count
    y = d * jax.lax.rsqrt(var + eps)
    y = y * g_ref[...] + b_ref[...]                       # (1, R, L) broadcast over samples
    o_ref[...] = jnp.maximum(y, 0.0).astype(o_ref.dtype)


def _accumulate_taps(x_ref, w_ref, taps, ho, wo):
    # x_ref: (PP, Hb, Wb, Cp) padded (phase-split) NHWC sample; w_ref: (9, Cp, Cout).
    # Accumulate the 9 shifted-window matmuls in an f32 value (no HBM round trip).
    cin = x_ref.shape[-1]
    acc = None
    for t, (p, oy, ox) in enumerate(taps):
        patch = x_ref[p, pl.ds(oy, ho), pl.ds(ox, wo), :]       # (ho, wo, Cp) in VMEM
        patch = patch.reshape(ho * wo, cin)
        d = jnp.dot(patch, w_ref[t], preferred_element_type=jnp.float32)
        acc = d if acc is None else acc + d
    return acc                                                  # (ho*wo, Cout) f32


def conv3x3_kernel(x_ref, w_ref, o_ref, *, taps, ho, wo):
    acc = _accumulate_taps(x_ref, w_ref, taps, ho, wo)
    o_ref[...] = acc.reshape(o_ref.shape).astype(o_ref.dtype)


def conv3x3_proj_kernel(x_ref, w_ref, s_ref, ws_ref, o_ref, *, taps, ho, wo):
    # conv2 + fused 1x1 projection shortcut (extra "tap": s @ ws added to the accumulator).
    acc = _accumulate_taps(x_ref, w_ref, taps, ho, wo)
    acc = acc + jnp.dot(s_ref[0], ws_ref[...], preferred_element_type=jnp.float32)
    o_ref[...] = acc.reshape(o_ref.shape).astype(o_ref.dtype)


def conv3x3_res_kernel(x_ref, w_ref, r_ref, o_ref, *, taps, ho, wo):
    # conv2 + identity residual added in the epilogue (f32).
    acc = _accumulate_taps(x_ref, w_ref, taps, ho, wo)
    acc = acc + r_ref[0].astype(jnp.float32)
    o_ref[...] = acc.reshape(o_ref.shape).astype(o_ref.dtype)


# ----------------------------------------------------------------------------
# Pallas wrappers
# ----------------------------------------------------------------------------
def gn_relu(x_flat, channels, gamma, beta, eps=1e-5, out_dtype=jnp.float32):
    # x_flat: (N, H*W*C) in NHWC flat order (index = (h*W + w)*C + c).
    N, HWC = x_flat.shape
    hw = HWC // channels
    g = jnp.tile(gamma.astype(jnp.float32), hw)           # (HWC,) per-channel affine, pre-tiled
    b = jnp.tile(beta.astype(jnp.float32), hw)

    # Lane-dense view: prefer an (R, 128) factorization so the out store is unmasked vst.
    if HWC % 128 == 0:
        R, L = HWC // 128, 128
    elif HWC % 8 == 0:
        R, L = HWC // 8, 8
    else:
        R, L = 1, HWC
    xr = x_flat.reshape(N, R, L)
    g = g.reshape(1, R, L)
    b = b.reshape(1, R, L)

    bytes_per_sample = HWC * x_flat.dtype.itemsize
    bn = max(1, min(N, _GN_BLOCK_BYTES // max(1, bytes_per_sample)))
    if N >= 2:
        bn = min(bn, pl.cdiv(N, 2))        # guarantee >=2 parallel grid steps (v7x megacore)
    grid = (pl.cdiv(N, bn),)

    kernel = functools.partial(gn_relu_kernel, eps=eps, inv_count=1.0 / float(HWC))
    out = pl.pallas_call(
        kernel,
        out_shape=jax.ShapeDtypeStruct((N, R, L), out_dtype),
        grid=grid,
        in_specs=[
            pl.BlockSpec((bn, R, L), lambda n: (n, 0, 0)),
            pl.BlockSpec((1, R, L), lambda n: (0, 0, 0)),
            pl.BlockSpec((1, R, L), lambda n: (0, 0, 0)),
        ],
        out_specs=pl.BlockSpec((bn, R, L), lambda n: (n, 0, 0)),
        compiler_params=pltpu.CompilerParams(
            dimension_semantics=("parallel",), vmem_limit_bytes=_VMEM_LIMIT),
    )(xr, g, b)
    return out.reshape(N, HWC)


def conv3x3_fused(x_nhwc, w, stride, shortcut=None, shortcut_w=None, residual=None,
                  out_dtype=jnp.float32):
    """3x3 conv (pad=1, no bias) with in-kernel tap accumulation.

    x_nhwc:     (N, H, W, Cin) activation (cast to MXU_DTYPE).
    w:          (Cout, Cin, 3, 3) conv weight (PyTorch OIHW).
    shortcut:   optional (N, Ho*Wo, Cs) input of a fused 1x1 projection.
    shortcut_w: optional (Cs, Cout) projection weight.
    residual:   optional (N, Ho*Wo, Cout) tensor added to the output.
    Returns (N, Ho*Wo, Cout) in out_dtype.
    """
    N, H, W, Cin = x_nhwc.shape
    Cout = w.shape[0]
    assert w.shape == (Cout, Cin, 3, 3)
    Ho = (H - 1) // stride + 1
    Wo = (W - 1) // stride + 1
    HWo = Ho * Wo

    # Zero-pad the channel (contraction) dim for clean MXU tiling, plus the 3x3 halo.
    Cp = _round_up(Cin, _K_ALIGN)
    xp = jnp.pad(x_nhwc.astype(MXU_DTYPE), ((0, 0), (1, 1), (1, 1), (0, Cp - Cin)))

    if stride == 1:
        pp, Hb, Wb = 1, H + 2, W + 2
        phases = xp
        taps = tuple((0, ky, kx) for ky in range(3) for kx in range(3))
    elif stride == 2:
        # 2x2 phase decomposition: every tap window becomes an unstrided static slice.
        Hp, Wp = H + 2, W + 2
        Hp2, Wp2 = _round_up(Hp, 2), _round_up(Wp, 2)
        xp = jnp.pad(xp, ((0, 0), (0, Hp2 - Hp), (0, Wp2 - Wp), (0, 0)))
        pp, Hb, Wb = 4, Hp2 // 2, Wp2 // 2
        phases = xp.reshape(N, Hb, 2, Wb, 2, Cp).transpose(0, 2, 4, 1, 3, 5)
        phases = phases.reshape(N * 4, Hb, Wb, Cp)
        taps = tuple(((ky % 2) * 2 + (kx % 2), ky // 2, kx // 2)
                     for ky in range(3) for kx in range(3))
    else:
        raise NotImplementedError("stride must be 1 or 2")

    # (Cout, Cin, 3, 3) -> (9, Cp, Cout); tap t = ky*3 + kx matches the `taps` ordering.
    w_taps = jnp.transpose(w, (2, 3, 1, 0)).reshape(9, Cin, Cout)
    w_taps = jnp.pad(w_taps, ((0, 0), (0, Cp - Cin), (0, 0))).astype(MXU_DTYPE)

    cparams = pltpu.CompilerParams(
        dimension_semantics=("parallel",), vmem_limit_bytes=_VMEM_LIMIT)
    x_spec = pl.BlockSpec((pp, Hb, Wb, Cp), lambda n: (n, 0, 0, 0))
    w_spec = pl.BlockSpec((9, Cp, Cout), lambda n: (0, 0, 0))
    o_spec = pl.BlockSpec((1, HWo, Cout), lambda n: (n, 0, 0))
    out_shape = jax.ShapeDtypeStruct((N, HWo, Cout), out_dtype)

    if shortcut is not None:
        cs = shortcut.shape[-1]
        csp = _round_up(cs, _K_ALIGN)
        s = jnp.pad(shortcut.astype(MXU_DTYPE), ((0, 0), (0, 0), (0, csp - cs)))
        ws = jnp.pad(shortcut_w.astype(MXU_DTYPE), ((0, csp - cs), (0, 0)))
        kernel = functools.partial(conv3x3_proj_kernel, taps=taps, ho=Ho, wo=Wo)
        return pl.pallas_call(
            kernel, out_shape=out_shape, grid=(N,),
            in_specs=[x_spec, w_spec,
                      pl.BlockSpec((1, HWo, csp), lambda n: (n, 0, 0)),
                      pl.BlockSpec((csp, Cout), lambda n: (0, 0))],
            out_specs=o_spec, compiler_params=cparams,
        )(phases, w_taps, s, ws)

    if residual is not None:
        kernel = functools.partial(conv3x3_res_kernel, taps=taps, ho=Ho, wo=Wo)
        return pl.pallas_call(
            kernel, out_shape=out_shape, grid=(N,),
            in_specs=[x_spec, w_spec,
                      pl.BlockSpec((1, HWo, Cout), lambda n: (n, 0, 0))],
            out_specs=o_spec, compiler_params=cparams,
        )(phases, w_taps, residual.astype(jnp.float32))

    kernel = functools.partial(conv3x3_kernel, taps=taps, ho=Ho, wo=Wo)
    return pl.pallas_call(
        kernel, out_shape=out_shape, grid=(N,),
        in_specs=[x_spec, w_spec],
        out_specs=o_spec, compiler_params=cparams,
    )(phases, w_taps)


# ----------------------------------------------------------------------------
# Block forward (Pallas) -- NCHW module boundary, NHWC internal pipeline
# ----------------------------------------------------------------------------
def block_forward(x, params, stride, eps=1e-5):
    N, Cin, H, W = x.shape
    w1 = params["conv1"]      # (planes, Cin, 3, 3)
    w2 = params["conv2"]      # (planes, planes, 3, 3)
    planes = w1.shape[0]
    Ho = (H - 1) // stride + 1
    Wo = (W - 1) // stride + 1

    xh = jnp.transpose(x, (0, 2, 3, 1))                   # single boundary NCHW -> NHWC pass

    # a1 = relu(n1(x))  (bf16 out: MXU operand + half the activation HBM traffic)
    a1 = gn_relu(xh.reshape(N, H * W * Cin), Cin, params["g1"], params["b1"],
                 eps, out_dtype=MXU_DTYPE).reshape(N, H, W, Cin)

    # conv1 (3x3, stride, pad 1, no bias): 9 taps accumulated inside the kernel
    y1 = conv3x3_fused(a1, w1, stride)                    # (N, Ho*Wo, planes) f32

    # a2 = relu(n2(y1))
    a2 = gn_relu(y1.reshape(N, Ho * Wo * planes), planes, params["g2"], params["b2"],
                 eps, out_dtype=MXU_DTYPE).reshape(N, Ho, Wo, planes)

    has_shortcut = (stride != 1) or (Cin != planes)
    if has_shortcut:
        # 1x1 projection of a1 (strided) fused into the conv2 kernel as an extra matmul.
        wsc = params["shortcut"].reshape(planes, Cin).T            # (Cin, planes)
        xs = a1[:, ::stride, ::stride, :].reshape(N, Ho * Wo, Cin)
        y2 = conv3x3_fused(a2, w2, 1, shortcut=xs, shortcut_w=wsc)
    else:
        # identity residual = x, added in the conv2 epilogue (f32)
        r = xh.reshape(N, H * W, Cin)
        y2 = conv3x3_fused(a2, w2, 1, residual=r)

    y2 = y2.reshape(N, Ho, Wo, planes)
    return jnp.transpose(y2, (0, 3, 1, 2))                # single boundary NHWC -> NCHW pass


# ----------------------------------------------------------------------------
# Pure-JAX reference
# ----------------------------------------------------------------------------
def gn_relu_ref(x, gamma, beta, eps=1e-5):
    N, C, H, W = x.shape
    xr = x.reshape(N, -1)
    mean = xr.mean(axis=1).reshape(N, 1, 1, 1)
    var = ((xr - xr.mean(axis=1, keepdims=True)) ** 2).mean(axis=1).reshape(N, 1, 1, 1)
    y = (x - mean) / jnp.sqrt(var + eps)
    y = y * gamma.reshape(1, C, 1, 1) + beta.reshape(1, C, 1, 1)
    return jnp.maximum(y, 0.0)


def conv_ref(x, w, stride, pad):
    return jax.lax.conv_general_dilated(
        x, w, (stride, stride), [(pad, pad), (pad, pad)],
        dimension_numbers=("NCHW", "OIHW", "NCHW"))


def block_forward_ref(x, params, stride):
    a1 = gn_relu_ref(x, params["g1"], params["b1"])
    planes = params["conv1"].shape[0]
    if stride != 1 or x.shape[1] != planes:
        sc = conv_ref(a1, params["shortcut"], stride, 0)
    else:
        sc = x
    y1 = conv_ref(a1, params["conv1"], stride, 1)
    y2 = conv_ref(gn_relu_ref(y1, params["g2"], params["b2"]), params["conv2"], 1, 1)
    return y2 + sc


# ----------------------------------------------------------------------------
# Main
# ----------------------------------------------------------------------------
if __name__ == "__main__":
    key = jax.random.PRNGKey(0)

    def make_params(k, in_planes, planes, with_shortcut):
        ks = jax.random.split(k, 8)
        p = {
            "g1": 1.0 + 0.1 * jax.random.normal(ks[0], (in_planes,), jnp.float32),
            "b1": 0.1 * jax.random.normal(ks[1], (in_planes,), jnp.float32),
            "conv1": 0.1 * jax.random.normal(ks[2], (planes, in_planes, 3, 3), jnp.float32),
            "g2": 1.0 + 0.1 * jax.random.normal(ks[3], (planes,), jnp.float32),
            "b2": 0.1 * jax.random.normal(ks[4], (planes,), jnp.float32),
            "conv2": 0.1 * jax.random.normal(ks[5], (planes, planes, 3, 3), jnp.float32),
        }
        if with_shortcut:
            p["shortcut"] = 0.1 * jax.random.normal(
                ks[6], (planes, in_planes, 1, 1), jnp.float32)
        return p

    fwd = jax.jit(block_forward, static_argnums=(2,))

    # bf16 MXU operands (f32 accumulation) => ~1e-2-scale deviations vs the f32 reference.
    tol = 5e-2 if MXU_DTYPE == jnp.bfloat16 else 1e-3

    configs = [
        # (N, in_planes, planes, H, W, stride)
        (2, 4, 8, 16, 16, 2),   # projection shortcut (stride 2, channel change)
        (2, 8, 8, 16, 16, 1),   # identity shortcut
    ]
    for idx, (N, cin, planes, H, W, stride) in enumerate(configs):
        kc = jax.random.fold_in(key, idx)
        has_sc = (stride != 1) or (cin != planes)
        params = make_params(kc, cin, planes, has_sc)
        x = jax.random.normal(jax.random.fold_in(kc, 99), (N, cin, H, W), jnp.float32)

        out = jax.block_until_ready(fwd(x, params, stride))
        ref = jax.block_until_ready(block_forward_ref(x, params, stride))

        Ho = (H + 2 - 3) // stride + 1
        Wo = (W + 2 - 3) // stride + 1
        assert out.shape == (N, planes, Ho, Wo), out.shape
        err = float(jnp.max(jnp.abs(out - ref)))
        assert jnp.allclose(out, ref, rtol=tol, atol=tol), err

    print("KERNEL_OK")
</pallas_src>

<mosaic_0001>
module attributes {stable_mosaic.version = 11 : i64} {
  func.func @gn_relu_kernel(%arg0: i32, %arg1: memref<1x8x128xf32, #tpu.memory_space<vmem>>, %arg2: memref<1x8x128xf32, #tpu.memory_space<vmem>>, %arg3: memref<1x8x128xf32, #tpu.memory_space<vmem>>, %arg4: memref<1x8x128xbf16, #tpu.memory_space<vmem>>) attributes {dimension_semantics = [#tpu.dimension_semantics<parallel>], iteration_bounds = array<i64: 2>, scalar_prefetch = 0 : i64, scratch_operands = 0 : i64, tpu.core_type = #tpu.core_type<tc>, window_params = [{transform_indices = @transform_0, window_bounds = array<i64: 1, 8, 128>}, {pipeline_mode = #tpu.pipeline_mode<synchronous>, transform_indices = @transform_1, window_bounds = array<i64: 1, 8, 128>}, {pipeline_mode = #tpu.pipeline_mode<synchronous>, transform_indices = @transform_2, window_bounds = array<i64: 1, 8, 128>}, {transform_indices = @transform_3, window_bounds = array<i64: 1, 8, 128>}]} {
    %c0 = arith.constant 0 : index
    %c0_0 = arith.constant 0 : index
    %c0_1 = arith.constant 0 : index
    %0 = vector.load %arg1[%c0, %c0_0, %c0_1] : memref<1x8x128xf32, #tpu.memory_space<vmem>>, vector<1x8x128xf32>
    %cst = arith.constant dense<0.000000e+00> : vector<1x8xf32>
    %1 = vector.multi_reduction <add>, %0, %cst [2] : vector<1x8x128xf32> to vector<1x8xf32>
    %2 = vector.shape_cast %1 : vector<1x8xf32> to vector<1x8x1xf32>
    %cst_2 = arith.constant dense<0.000000e+00> : vector<1x1xf32>
    %3 = vector.multi_reduction <add>, %2, %cst_2 [1] : vector<1x8x1xf32> to vector<1x1xf32>
    %4 = vector.shape_cast %3 : vector<1x1xf32> to vector<1x1x1xf32>
    %cst_3 = arith.constant 9.765625E-4 : f32
    %5 = vector.broadcast %cst_3 : f32 to vector<1x1x1xf32>
    %6 = arith.mulf %4, %5 : vector<1x1x1xf32>
    %7 = vector.broadcast %6 : vector<1x1x1xf32> to vector<1x8x128xf32>
    %8 = arith.subf %0, %7 : vector<1x8x128xf32>
    %9 = arith.mulf %8, %8 : vector<1x8x128xf32>
    %cst_4 = arith.constant dense<0.000000e+00> : vector<1x8xf32>
    %10 = vector.multi_reduction <add>, %9, %cst_4 [2] : vector<1x8x128xf32> to vector<1x8xf32>
    %11 = vector.shape_cast %10 : vector<1x8xf32> to vector<1x8x1xf32>
    %cst_5 = arith.constant dense<0.000000e+00> : vector<1x1xf32>
    %12 = vector.multi_reduction <add>, %11, %cst_5 [1] : vector<1x8x1xf32> to vector<1x1xf32>
    %13 = vector.shape_cast %12 : vector<1x1xf32> to vector<1x1x1xf32>
    %cst_6 = arith.constant 9.765625E-4 : f32
    %14 = vector.broadcast %cst_6 : f32 to vector<1x1x1xf32>
    %15 = arith.mulf %13, %14 : vector<1x1x1xf32>
    %cst_7 = arith.constant 9.99999974E-6 : f32
    %16 = vector.broadcast %cst_7 : f32 to vector<1x1x1xf32>
    %17 = arith.addf %15, %16 : vector<1x1x1xf32>
    %18 = math.rsqrt %17 : vector<1x1x1xf32>
    %19 = vector.broadcast %18 : vector<1x1x1xf32> to vector<1x8x128xf32>
    %20 = arith.mulf %8, %19 : vector<1x8x128xf32>
    %c0_8 = arith.constant 0 : index
    %c0_9 = arith.constant 0 : index
    %c0_10 = arith.constant 0 : index
    %21 = vector.load %arg2[%c0_8, %c0_9, %c0_10] : memref<1x8x128xf32, #tpu.memory_space<vmem>>, vector<1x8x128xf32>
    %22 = arith.mulf %20, %21 : vector<1x8x128xf32>
    %c0_11 = arith.constant 0 : index
    %c0_12 = arith.constant 0 : index
    %c0_13 = arith.constant 0 : index
    %23 = vector.load %arg3[%c0_11, %c0_12, %c0_13] : memref<1x8x128xf32, #tpu.memory_space<vmem>>, vector<1x8x128xf32>
    %24 = arith.addf %22, %23 : vector<1x8x128xf32>
    %cst_14 = arith.constant 0.000000e+00 : f32
    %25 = vector.broadcast %cst_14 : f32 to vector<1x8x128xf32>
    %26 = arith.maximumf %24, %25 : vector<1x8x128xf32>
    %27 = arith.truncf %26 : vector<1x8x128xf32> to vector<1x8x128xbf16>
    %c0_15 = arith.constant 0 : index
    %c0_16 = arith.constant 0 : index
    %c0_17 = arith.constant 0 : index
    %28 = vector.load %arg4[%c0_15, %c0_16, %c0_17] : memref<1x8x128xbf16, #tpu.memory_space<vmem>>, vector<1x8x128xbf16>
    tpu.vector_store %arg4[%c0_15, %c0_16, %c0_17], %27 {strides = array<i32>} : memref<1x8x128xbf16, #tpu.memory_space<vmem>>, vector<1x8x128xbf16>,
    return
  }
  func.func @transform_0(%arg0: i32) -> (i32, i32, i32) {
    %c0_i32 = arith.constant 0 : i32
    %c0_i32_0 = arith.constant 0 : i32
    %c0_i32_1 = arith.constant 0 : i32
    return %arg0, %c0_i32, %c0_i32_0 : i32, i32, i32
  }
  func.func @transform_1(%arg0: i32) -> (i32, i32, i32) {
    %c0_i32 = arith.constant 0 : i32
    %c0_i32_0 = arith.constant 0 : i32
    %c0_i32_1 = arith.constant 0 : i32
    %c0_i32_2 = arith.constant 0 : i32
    return %c0_i32, %c0_i32_0, %c0_i32_1 : i32, i32, i32
  }
  func.func @transform_2(%arg0: i32) -> (i32, i32, i32) {
    %c0_i32 = arith.constant 0 : i32
    %c0_i32_0 = arith.constant 0 : i32
    %c0_i32_1 = arith.constant 0 : i32
    %c0_i32_2 = arith.constant 0 : i32
    return %c0_i32, %c0_i32_0, %c0_i32_1 : i32, i32, i32
  }
  func.func @transform_3(%arg0: i32) -> (i32, i32, i32) {
    %c0_i32 = arith.constant 0 : i32
    %c0_i32_0 = arith.constant 0 : i32
    %c0_i32_1 = arith.constant 0 : i32
    return %arg0, %c0_i32, %c0_i32_0 : i32, i32, i32
  }
}

module attributes {stable_mosaic.version = 11 : i64} {
  func.func @conv3x3_kernel(%arg0: i32, %arg1: memref<4x9x9x16xbf16, #tpu.memory_space<vmem>>, %arg2: memref<9x16x8xbf16, #tpu.memory_space<vmem>>, %arg3: memref<1x64x8xf32, #tpu.memory_space<vmem>>) attributes {dimension_semantics = [#tpu.dimension_semantics<parallel>], iteration_bounds = array<i64: 2>, scalar_prefetch = 0 : i64, scratch_operands = 0 : i64, tpu.core_type = #tpu.core_type<tc>, window_params = [{transform_indices = @transform_0, window_bounds = array<i64: 4, 9, 9, 16>}, {pipeline_mode = #tpu.pipeline_mode<synchronous>, transform_indices = @transform_1, window_bounds = array<i64: 9, 16, 8>}, {transform_indices = @transform_2, window_bounds = array<i64: 1, 64, 8>}]} {
    %c0 = arith.constant 0 : index
    %c0_0 = arith.constant 0 : index
    %c0_1 = arith.constant 0 : index
    %c0_2 = arith.constant 0 : index
    %0 = vector.load %arg1[%c0, %c0_0, %c0_1, %c0_2] : memref<4x9x9x16xbf16, #tpu.memory_space<vmem>>, vector<1x8x8x16xbf16>
    %1 = vector.shape_cast %0 : vector<1x8x8x16xbf16> to vector<8x8x16xbf16>
    %2 = vector.shape_cast %1 : vector<8x8x16xbf16> to vector<64x16xbf16>
    %c0_3 = arith.constant 0 : index
    %c0_4 = arith.constant 0 : index
    %c0_5 = arith.constant 0 : index
    %3 = vector.load %arg2[%c0_3, %c0_4, %c0_5] : memref<9x16x8xbf16, #tpu.memory_space<vmem>>, vector<1x16x8xbf16>
    %4 = vector.shape_cast %3 : vector<1x16x8xbf16> to vector<16x8xbf16>
    %cst = arith.constant dense<0.000000e+00> : vector<64x8xf32>
    %5 = tpu.matmul %2, %4, %cst {dimension_numbers = #tpu.dot_dimension_numbers<[1], [0], [0], [1], [0, 0, 1, 1], [], []>} : vector<64x16xbf16>, vector<16x8xbf16>, vector<64x8xf32> -> vector<64x8xf32>
    %c1 = arith.constant 1 : index
    %c0_6 = arith.constant 0 : index
    %c0_7 = arith.constant 0 : index
    %c0_8 = arith.constant 0 : index
    %6 = vector.load %arg1[%c1, %c0_6, %c0_7, %c0_8] : memref<4x9x9x16xbf16, #tpu.memory_space<vmem>>, vector<1x8x8x16xbf16>
    %7 = vector.shape_cast %6 : vector<1x8x8x16xbf16> to vector<8x8x16xbf16>
    %8 = vector.shape_cast %7 : vector<8x8x16xbf16> to vector<64x16xbf16>
    %c1_9 = arith.constant 1 : index
    %c0_10 = arith.constant 0 : index
    %c0_11 = arith.constant 0 : index
    %9 = vector.load %arg2[%c1_9, %c0_10, %c0_11] : memref<9x16x8xbf16, #tpu.memory_space<vmem>>, vector<1x16x8xbf16>
    %10 = vector.shape_cast %9 : vector<1x16x8xbf16> to vector<16x8xbf16>
    %cst_12 = arith.constant dense<0.000000e+00> : vector<64x8xf32>
    %11 = tpu.matmul %8, %10, %cst_12 {dimension_numbers = #tpu.dot_dimension_numbers<[1], [0], [0], [1], [0, 0, 1, 1], [], []>} : vector<64x16xbf16>, vector<16x8xbf16>, vector<64x8xf32> -> vector<64x8xf32>
    %12 = arith.addf %5, %11 : vector<64x8xf32>
    %c0_13 = arith.constant 0 : index
    %c0_14 = arith.constant 0 : index
    %c1_15 = arith.constant 1 : index
    %c0_16 = arith.constant 0 : index
    %13 = vector.load %arg1[%c0_13, %c0_14, %c1_15, %c0_16] : memref<4x9x9x16xbf16, #tpu.memory_space<vmem>>, vector<1x8x8x16xbf16>
    %14 = vector.shape_cast %13 : vector<1x8x8x16xbf16> to vector<8x8x16xbf16>
    %15 = vector.shape_cast %14 : vector<8x8x16xbf16> to vector<64x16xbf16>
    %c2 = arith.constant 2 : index
    %c0_17 = arith.constant 0 : index
    %c0_18 = arith.constant 0 : index
    %16 = vector.load %arg2[%c2, %c0_17, %c0_18] : memref<9x16x8xbf16, #tpu.memory_space<vmem>>, vector<1x16x8xbf16>
    %17 = vector.shape_cast %16 : vector<1x16x8xbf16> to vector<16x8xbf16>
    %cst_19 = arith.constant dense<0.000000e+00> : vector<64x8xf32>
    %18 = tpu.matmul %15, %17, %cst_19 {dimension_numbers = #tpu.dot_dimension_numbers<[1], [0], [0], [1], [0, 0, 1, 1], [], []>} : vector<64x16xbf16>, vector<16x8xbf16>, vector<64x8xf32> -> vector<64x8xf32>
    %19 = arith.addf %12, %18 : vector<64x8xf32>
    %c2_20 = arith.constant 2 : index
    %c0_21 = arith.constant 0 : index
    %c0_22 = arith.constant 0 : index
    %c0_23 = arith.constant 0 : index
    %20 = vector.load %arg1[%c2_20, %c0_21, %c0_22, %c0_23] : memref<4x9x9x16xbf16, #tpu.memory_space<vmem>>, vector<1x8x8x16xbf16>
    %21 = vector.shape_cast %20 : vector<1x8x8x16xbf16> to vector<8x8x16xbf16>
    %22 = vector.shape_cast %21 : vector<8x8x16xbf16> to vector<64x16xbf16>
    %c3 = arith.constant 3 : index
    %c0_24 = arith.constant 0 : index
    %c0_25 = arith.constant 0 : index
    %23 = vector.load %arg2[%c3, %c0_24, %c0_25] : memref<9x16x8xbf16, #tpu.memory_space<vmem>>, vector<1x16x8xbf16>
    %24 = vector.shape_cast %23 : vector<1x16x8xbf16> to vector<16x8xbf16>
    %cst_26 = arith.constant dense<0.000000e+00> : vector<64x8xf32>
    %25 = tpu.matmul %22, %24, %cst_26 {dimension_numbers = #tpu.dot_dimension_numbers<[1], [0], [0], [1], [0, 0, 1, 1], [], []>} : vector<64x16xbf16>, vector<16x8xbf16>, vector<64x8xf32> -> vector<64x8xf32>
    %26 = arith.addf %19, %25 : vector<64x8xf32>
    %c3_27 = arith.constant 3 : index
    %c0_28 = arith.constant 0 : index
    %c0_29 = arith.constant 0 : index
    %c0_30 = arith.constant 0 : index
    %27 = vector.load %arg1[%c3_27, %c0_28, %c0_29, %c0_30] : memref<4x9x9x16xbf16, #tpu.memory_space<vmem>>, vector<1x8x8x16xbf16>
    %28 = vector.shape_cast %27 : vector<1x8x8x16xbf16> to vector<8x8x16xbf16>
    %29 = vector.shape_cast %28 : vector<8x8x16xbf16> to vector<64x16xbf16>
    %c4 = arith.constant 4 : index
    %c0_31 = arith.constant 0 : index
    %c0_32 = arith.constant 0 : index
    %30 = vector.load %arg2[%c4, %c0_31, %c0_32] : memref<9x16x8xbf16, #tpu.memory_space<vmem>>, vector<1x16x8xbf16>
    %31 = vector.shape_cast %30 : vector<1x16x8xbf16> to vector<16x8xbf16>
    %cst_33 = arith.constant dense<0.000000e+00> : vector<64x8xf32>
    %32 = tpu.matmul %29, %31, %cst_33 {dimension_numbers = #tpu.dot_dimension_numbers<[1], [0], [0], [1], [0, 0, 1, 1], [], []>} : vector<64x16xbf16>, vector<16x8xbf16>, vector<64x8xf32> -> vector<64x8xf32>
    %33 = arith.addf %26, %32 : vector<64x8xf32>
    %c2_34 = arith.constant 2 : index
    %c0_35 = arith.constant 0 : index
    %c1_36 = arith.constant 1 : index
    %c0_37 = arith.constant 0 : index
    %34 = vector.load %arg1[%c2_34, %c0_35, %c1_36, %c0_37] : memref<4x9x9x16xbf16, #tpu.memory_space<vmem>>, vector<1x8x8x16xbf16>
    %35 = vector.shape_cast %34 : vector<1x8x8x16xbf16> to vector<8x8x16xbf16>
    %36 = vector.shape_cast %35 : vector<8x8x16xbf16> to vector<64x16xbf16>
    %c5 = arith.constant 5 : index
    %c0_38 = arith.constant 0 : index
    %c0_39 = arith.constant 0 : index
    %37 = vector.load %arg2[%c5, %c0_38, %c0_39] : memref<9x16x8xbf16, #tpu.memory_space<vmem>>, vector<1x16x8xbf16>
    %38 = vector.shape_cast %37 : vector<1x16x8xbf16> to vector<16x8xbf16>
    %cst_40 = arith.constant dense<0.000000e+00> : vector<64x8xf32>
    %39 = tpu.matmul %36, %38, %cst_40 {dimension_numbers = #tpu.dot_dimension_numbers<[1], [0], [0], [1], [0, 0, 1, 1], [], []>} : vector<64x16xbf16>, vector<16x8xbf16>, vector<64x8xf32> -> vector<64x8xf32>
    %40 = arith.addf %33, %39 : vector<64x8xf32>
    %c0_41 = arith.constant 0 : index
    %c1_42 = arith.constant 1 : index
    %c0_43 = arith.constant 0 : index
    %c0_44 = arith.constant 0 : index
    %41 = vector.load %arg1[%c0_41, %c1_42, %c0_43, %c0_44] : memref<4x9x9x16xbf16, #tpu.memory_space<vmem>>, vector<1x8x8x16xbf16>
    %42 = vector.shape_cast %41 : vector<1x8x8x16xbf16> to vector<8x8x16xbf16>
    %43 = vector.shape_cast %42 : vector<8x8x16xbf16> to vector<64x16xbf16>
    %c6 = arith.constant 6 : index
    %c0_45 = arith.constant 0 : index
    %c0_46 = arith.constant 0 : index
    %44 = vector.load %arg2[%c6, %c0_45, %c0_46] : memref<9x16x8xbf16, #tpu.memory_space<vmem>>, vector<1x16x8xbf16>
    %45 = vector.shape_cast %44 : vector<1x16x8xbf16> to vector<16x8xbf16>
    %cst_47 = arith.constant dense<0.000000e+00> : vector<64x8xf32>
    %46 = tpu.matmul %43, %45, %cst_47 {dimension_numbers = #tpu.dot_dimension_numbers<[1], [0], [0], [1], [0, 0, 1, 1], [], []>} : vector<64x16xbf16>, vector<16x8xbf16>, vector<64x8xf32> -> vector<64x8xf32>
    %47 = arith.addf %40, %46 : vector<64x8xf32>
    %c1_48 = arith.constant 1 : index
    %c1_49 = arith.constant 1 : index
    %c0_50 = arith.constant 0 : index
    %c0_51 = arith.constant 0 : index
    %48 = vector.load %arg1[%c1_48, %c1_49, %c0_50, %c0_51] : memref<4x9x9x16xbf16, #tpu.memory_space<vmem>>, vector<1x8x8x16xbf16>
    %49 = vector.shape_cast %48 : vector<1x8x8x16xbf16> to vector<8x8x16xbf16>
    %50 = vector.shape_cast %49 : vector<8x8x16xbf16> to vector<64x16xbf16>
    %c7 = arith.constant 7 : index
    %c0_52 = arith.constant 0 : index
    %c0_53 = arith.constant 0 : index
    %51 = vector.load %arg2[%c7, %c0_52, %c0_53] : memref<9x16x8xbf16, #tpu.memory_space<vmem>>, vector<1x16x8xbf16>
    %52 = vector.shape_cast %51 : vector<1x16x8xbf16> to vector<16x8xbf16>
    %cst_54 = arith.constant dense<0.000000e+00> : vector<64x8xf32>
    %53 = tpu.matmul %50, %52, %cst_54 {dimension_numbers = #tpu.dot_dimension_numbers<[1], [0], [0], [1], [0, 0, 1, 1], [], []>} : vector<64x16xbf16>, vector<16x8xbf16>, vector<64x8xf32> -> vector<64x8xf32>
    %54 = arith.addf %47, %53 : vector<64x8xf32>
    %c0_55 = arith.constant 0 : index
    %c1_56 = arith.constant 1 : index
    %c1_57 = arith.constant 1 : index
    %c0_58 = arith.constant 0 : index
    %55 = vector.load %arg1[%c0_55, %c1_56, %c1_57, %c0_58] : memref<4x9x9x16xbf16, #tpu.memory_space<vmem>>, vector<1x8x8x16xbf16>
    %56 = vector.shape_cast %55 : vector<1x8x8x16xbf16> to vector<8x8x16xbf16>
    %57 = vector.shape_cast %56 : vector<8x8x16xbf16> to vector<64x16xbf16>
    %c8 = arith.constant 8 : index
    %c0_59 = arith.constant 0 : index
    %c0_60 = arith.constant 0 : index
    %58 = vector.load %arg2[%c8, %c0_59, %c0_60] : memref<9x16x8xbf16, #tpu.memory_space<vmem>>, vector<1x16x8xbf16>
    %59 = vector.shape_cast %58 : vector<1x16x8xbf16> to vector<16x8xbf16>
    %cst_61 = arith.constant dense<0.000000e+00> : vector<64x8xf32>
    %60 = tpu.matmul %57, %59, %cst_61 {dimension_numbers = #tpu.dot_dimension_numbers<[1], [0], [0], [1], [0, 0, 1, 1], [], []>} : vector<64x16xbf16>, vector<16x8xbf16>, vector<64x8xf32> -> vector<64x8xf32>
    %61 = arith.addf %54, %60 : vector<64x8xf32>
    %62 = vector.shape_cast %61 : vector<64x8xf32> to vector<1x64x8xf32>
    %c0_62 = arith.constant 0 : index
    %c0_63 = arith.constant 0 : index
    %c0_64 = arith.constant 0 : index
    %63 = vector.load %arg3[%c0_62, %c0_63, %c0_64] : memref<1x64x8xf32, #tpu.memory_space<vmem>>, vector<1x64x8xf32>
    tpu.vector_store %arg3[%c0_62, %c0_63, %c0_64], %62 {strides = array<i32>} : memref<1x64x8xf32, #tpu.memory_space<vmem>>, vector<1x64x8xf32>,
    return
  }
  func.func @transform_0(%arg0: i32) -> (i32, i32, i32, i32) {
    %c0_i32 = arith.constant 0 : i32
    %c0_i32_0 = arith.constant 0 : i32
    %c0_i32_1 = arith.constant 0 : i32
    %c0_i32_2 = arith.constant 0 : i32
    return %arg0, %c0_i32, %c0_i32_0, %c0_i32_1 : i32, i32, i32, i32
  }
  func.func @transform_1(%arg0: i32) -> (i32, i32, i32) {
    %c0_i32 = arith.constant 0 : i32
    %c0_i32_0 = arith.constant 0 : i32
    %c0_i32_1 = arith.constant 0 : i32
    %c0_i32_2 = arith.constant 0 : i32
    return %c0_i32, %c0_i32_0, %c0_i32_1 : i32, i32, i32
  }
  func.func @transform_2(%arg0: i32) -> (i32, i32, i32) {
    %c0_i32 = arith.constant 0 : i32
    %c0_i32_0 = arith.constant 0 : i32
    %c0_i32_1 = arith.constant 0 : i32
    return %arg0, %c0_i32, %c0_i32_0 : i32, i32, i32
  }
}

module attributes {stable_mosaic.version = 11 : i64} {
  func.func @gn_relu_kernel(%arg0: i32, %arg1: memref<1x4x128xf32, #tpu.memory_space<vmem>>, %arg2: memref<1x4x128xf32, #tpu.memory_space<vmem>>, %arg3: memref<1x4x128xf32, #tpu.memory_space<vmem>>, %arg4: memref<1x4x128xbf16, #tpu.memory_space<vmem>>) attributes {dimension_semantics = [#tpu.dimension_semantics<parallel>], iteration_bounds = array<i64: 2>, scalar_prefetch = 0 : i64, scratch_operands = 0 : i64, tpu.core_type = #tpu.core_type<tc>, window_params = [{transform_indices = @transform_0, window_bounds = array<i64: 1, 4, 128>}, {pipeline_mode = #tpu.pipeline_mode<synchronous>, transform_indices = @transform_1, window_bounds = array<i64: 1, 4, 128>}, {pipeline_mode = #tpu.pipeline_mode<synchronous>, transform_indices = @transform_2, window_bounds = array<i64: 1, 4, 128>}, {transform_indices = @transform_3, window_bounds = array<i64: 1, 4, 128>}]} {
    %c0 = arith.constant 0 : index
    %c0_0 = arith.constant 0 : index
    %c0_1 = arith.constant 0 : index
    %0 = vector.load %arg1[%c0, %c0_0, %c0_1] : memref<1x4x128xf32, #tpu.memory_space<vmem>>, vector<1x4x128xf32>
    %cst = arith.constant dense<0.000000e+00> : vector<1x4xf32>
    %1 = vector.multi_reduction <add>, %0, %cst [2] : vector<1x4x128xf32> to vector<1x4xf32>
    %2 = vector.shape_cast %1 : vector<1x4xf32> to vector<1x4x1xf32>
    %cst_2 = arith.constant dense<0.000000e+00> : vector<1x1xf32>
    %3 = vector.multi_reduction <add>, %2, %cst_2 [1] : vector<1x4x1xf32> to vector<1x1xf32>
    %4 = vector.shape_cast %3 : vector<1x1xf32> to vector<1x1x1xf32>
    %cst_3 = arith.constant 0.001953125 : f32
    %5 = vector.broadcast %cst_3 : f32 to vector<1x1x1xf32>
    %6 = arith.mulf %4, %5 : vector<1x1x1xf32>
    %7 = vector.broadcast %6 : vector<1x1x1xf32> to vector<1x4x128xf32>
    %8 = arith.subf %0, %7 : vector<1x4x128xf32>
    %9 = arith.mulf %8, %8 : vector<1x4x128xf32>
    %cst_4 = arith.constant dense<0.000000e+00> : vector<1x4xf32>
    %10 = vector.multi_reduction <add>, %9, %cst_4 [2] : vector<1x4x128xf32> to vector<1x4xf32>
    %11 = vector.shape_cast %10 : vector<1x4xf32> to vector<1x4x1xf32>
    %cst_5 = arith.constant dense<0.000000e+00> : vector<1x1xf32>
    %12 = vector.multi_reduction <add>, %11, %cst_5 [1] : vector<1x4x1xf32> to vector<1x1xf32>
    %13 = vector.shape_cast %12 : vector<1x1xf32> to vector<1x1x1xf32>
    %cst_6 = arith.constant 0.001953125 : f32
    %14 = vector.broadcast %cst_6 : f32 to vector<1x1x1xf32>
    %15 = arith.mulf %13, %14 : vector<1x1x1xf32>
    %cst_7 = arith.constant 9.99999974E-6 : f32
    %16 = vector.broadcast %cst_7 : f32 to vector<1x1x1xf32>
    %17 = arith.addf %15, %16 : vector<1x1x1xf32>
    %18 = math.rsqrt %17 : vector<1x1x1xf32>
    %19 = vector.broadcast %18 : vector<1x1x1xf32> to vector<1x4x128xf32>
    %20 = arith.mulf %8, %19 : vector<1x4x128xf32>
    %c0_8 = arith.constant 0 : index
    %c0_9 = arith.constant 0 : index
    %c0_10 = arith.constant 0 : index
    %21 = vector.load %arg2[%c0_8, %c0_9, %c0_10] : memref<1x4x128xf32, #tpu.memory_space<vmem>>, vector<1x4x128xf32>
    %22 = arith.mulf %20, %21 : vector<1x4x128xf32>
    %c0_11 = arith.constant 0 : index
    %c0_12 = arith.constant 0 : index
    %c0_13 = arith.constant 0 : index
    %23 = vector.load %arg3[%c0_11, %c0_12, %c0_13] : memref<1x4x128xf32, #tpu.memory_space<vmem>>, vector<1x4x128xf32>
    %24 = arith.addf %22, %23 : vector<1x4x128xf32>
    %cst_14 = arith.constant 0.000000e+00 : f32
    %25 = vector.broadcast %cst_14 : f32 to vector<1x4x128xf32>
    %26 = arith.maximumf %24, %25 : vector<1x4x128xf32>
    %27 = arith.truncf %26 : vector<1x4x128xf32> to vector<1x4x128xbf16>
    %c0_15 = arith.constant 0 : index
    %c0_16 = arith.constant 0 : index
    %c0_17 = arith.constant 0 : index
    %28 = vector.load %arg4[%c0_15, %c0_16, %c0_17] : memref<1x4x128xbf16, #tpu.memory_space<vmem>>, vector<1x4x128xbf16>
    tpu.vector_store %arg4[%c0_15, %c0_16, %c0_17], %27 {strides = array<i32>} : memref<1x4x128xbf16, #tpu.memory_space<vmem>>, vector<1x4x128xbf16>,
    return
  }
  func.func @transform_0(%arg0: i32) -> (i32, i32, i32) {
    %c0_i32 = arith.constant 0 : i32
    %c0_i32_0 = arith.constant 0 : i32
    %c0_i32_1 = arith.constant 0 : i32
    return %arg0, %c0_i32, %c0_i32_0 : i32, i32, i32
  }
  func.func @transform_1(%arg0: i32) -> (i32, i32, i32) {
    %c0_i32 = arith.constant 0 : i32
    %c0_i32_0 = arith.constant 0 : i32
    %c0_i32_1 = arith.constant 0 : i32
    %c0_i32_2 = arith.constant 0 : i32
    return %c0_i32, %c0_i32_0, %c0_i32_1 : i32, i32, i32
  }
  func.func @transform_2(%arg0: i32) -> (i32, i32, i32) {
    %c0_i32 = arith.constant 0 : i32
    %c0_i32_0 = arith.constant 0 : i32
    %c0_i32_1 = arith.constant 0 : i32
    %c0_i32_2 = arith.constant 0 : i32
    return %c0_i32, %c0_i32_0, %c0_i32_1 : i32, i32, i32
  }
  func.func @transform_3(%arg0: i32) -> (i32, i32, i32) {
    %c0_i32 = arith.constant 0 : i32
    %c0_i32_0 = arith.constant 0 : i32
    %c0_i32_1 = arith.constant 0 : i32
    return %arg0, %c0_i32, %c0_i32_0 : i32, i32, i32
  }
}

module attributes {stable_mosaic.version = 11 : i64} {
  func.func @conv3x3_proj_kernel(%arg0: i32, %arg1: memref<1x10x10x16xbf16, #tpu.memory_space<vmem>>, %arg2: memref<9x16x8xbf16, #tpu.memory_space<vmem>>, %arg3: memref<1x64x16xbf16, #tpu.memory_space<vmem>>, %arg4: memref<16x8xbf16, #tpu.memory_space<vmem>>, %arg5: memref<1x64x8xf32, #tpu.memory_space<vmem>>) attributes {dimension_semantics = [#tpu.dimension_semantics<parallel>], iteration_bounds = array<i64: 2>, scalar_prefetch = 0 : i64, scratch_operands = 0 : i64, tpu.core_type = #tpu.core_type<tc>, window_params = [{transform_indices = @transform_0, window_bounds = array<i64: 1, 10, 10, 16>}, {pipeline_mode = #tpu.pipeline_mode<synchronous>, transform_indices = @transform_1, window_bounds = array<i64: 9, 16, 8>}, {transform_indices = @transform_2, window_bounds = array<i64: 1, 64, 16>}, {pipeline_mode = #tpu.pipeline_mode<synchronous>, transform_indices = @transform_3, window_bounds = array<i64: 16, 8>}, {transform_indices = @transform_4, window_bounds = array<i64: 1, 64, 8>}]} {
    %c0 = arith.constant 0 : index
    %c0_0 = arith.constant 0 : index
    %c0_1 = arith.constant 0 : index
    %c0_2 = arith.constant 0 : index
    %0 = vector.load %arg1[%c0, %c0_0, %c0_1, %c0_2] : memref<1x10x10x16xbf16, #tpu.memory_space<vmem>>, vector<1x8x8x16xbf16>
    %1 = vector.shape_cast %0 : vector<1x8x8x16xbf16> to vector<8x8x16xbf16>
    %2 = vector.shape_cast %1 : vector<8x8x16xbf16> to vector<64x16xbf16>
    %c0_3 = arith.constant 0 : index
    %c0_4 = arith.constant 0 : index
    %c0_5 = arith.constant 0 : index
    %3 = vector.load %arg2[%c0_3, %c0_4, %c0_5] : memref<9x16x8xbf16, #tpu.memory_space<vmem>>, vector<1x16x8xbf16>
    %4 = vector.shape_cast %3 : vector<1x16x8xbf16> to vector<16x8xbf16>
    %cst = arith.constant dense<0.000000e+00> : vector<64x8xf32>
    %5 = tpu.matmul %2, %4, %cst {dimension_numbers = #tpu.dot_dimension_numbers<[1], [0], [0], [1], [0, 0, 1, 1], [], []>} : vector<64x16xbf16>, vector<16x8xbf16>, vector<64x8xf32> -> vector<64x8xf32>
    %c0_6 = arith.constant 0 : index
    %c0_7 = arith.constant 0 : index
    %c1 = arith.constant 1 : index
    %c0_8 = arith.constant 0 : index
    %6 = vector.load %arg1[%c0_6, %c0_7, %c1, %c0_8] : memref<1x10x10x16xbf16, #tpu.memory_space<vmem>>, vector<1x8x8x16xbf16>
    %7 = vector.shape_cast %6 : vector<1x8x8x16xbf16> to vector<8x8x16xbf16>
    %8 = vector.shape_cast %7 : vector<8x8x16xbf16> to vector<64x16xbf16>
    %c1_9 = arith.constant 1 : index
    %c0_10 = arith.constant 0 : index
    %c0_11 = arith.constant 0 : index
    %9 = vector.load %arg2[%c1_9, %c0_10, %c0_11] : memref<9x16x8xbf16, #tpu.memory_space<vmem>>, vector<1x16x8xbf16>
    %10 = vector.shape_cast %9 : vector<1x16x8xbf16> to vector<16x8xbf16>
    %cst_12 = arith.constant dense<0.000000e+00> : vector<64x8xf32>
    %11 = tpu.matmul %8, %10, %cst_12 {dimension_numbers = #tpu.dot_dimension_numbers<[1], [0], [0], [1], [0, 0, 1, 1], [], []>} : vector<64x16xbf16>, vector<16x8xbf16>, vector<64x8xf32> -> vector<64x8xf32>
    %12 = arith.addf %5, %11 : vector<64x8xf32>
    %c0_13 = arith.constant 0 : index
    %c0_14 = arith.constant 0 : index
    %c2 = arith.constant 2 : index
    %c0_15 = arith.constant 0 : index
    %13 = vector.load %arg1[%c0_13, %c0_14, %c2, %c0_15] : memref<1x10x10x16xbf16, #tpu.memory_space<vmem>>, vector<1x8x8x16xbf16>
    %14 = vector.shape_cast %13 : vector<1x8x8x16xbf16> to vector<8x8x16xbf16>
    %15 = vector.shape_cast %14 : vector<8x8x16xbf16> to vector<64x16xbf16>
    %c2_16 = arith.constant 2 : index
    %c0_17 = arith.constant 0 : index
    %c0_18 = arith.constant 0 : index
    %16 = vector.load %arg2[%c2_16, %c0_17, %c0_18] : memref<9x16x8xbf16, #tpu.memory_space<vmem>>, vector<1x16x8xbf16>
    %17 = vector.shape_cast %16 : vector<1x16x8xbf16> to vector<16x8xbf16>
    %cst_19 = arith.constant dense<0.000000e+00> : vector<64x8xf32>
    %18 = tpu.matmul %15, %17, %cst_19 {dimension_numbers = #tpu.dot_dimension_numbers<[1], [0], [0], [1], [0, 0, 1, 1], [], []>} : vector<64x16xbf16>, vector<16x8xbf16>, vector<64x8xf32> -> vector<64x8xf32>
    %19 = arith.addf %12, %18 : vector<64x8xf32>
    %c0_20 = arith.constant 0 : index
    %c1_21 = arith.constant 1 : index
    %c0_22 = arith.constant 0 : index
    %c0_23 = arith.constant 0 : index
    %20 = vector.load %arg1[%c0_20, %c1_21, %c0_22, %c0_23] : memref<1x10x10x16xbf16, #tpu.memory_space<vmem>>, vector<1x8x8x16xbf16>
    %21 = vector.shape_cast %20 : vector<1x8x8x16xbf16> to vector<8x8x16xbf16>
    %22 = vector.shape_cast %21 : vector<8x8x16xbf16> to vector<64x16xbf16>
    %c3 = arith.constant 3 : index
    %c0_24 = arith.constant 0 : index
    %c0_25 = arith.constant 0 : index
    %23 = vector.load %arg2[%c3, %c0_24, %c0_25] : memref<9x16x8xbf16, #tpu.memory_space<vmem>>, vector<1x16x8xbf16>
    %24 = vector.shape_cast %23 : vector<1x16x8xbf16> to vector<16x8xbf16>
    %cst_26 = arith.constant dense<0.000000e+00> : vector<64x8xf32>
    %25 = tpu.matmul %22, %24, %cst_26 {dimension_numbers = #tpu.dot_dimension_numbers<[1], [0], [0], [1], [0, 0, 1, 1], [], []>} : vector<64x16xbf16>, vector<16x8xbf16>, vector<64x8xf32> -> vector<64x8xf32>
    %26 = arith.addf %19, %25 : vector<64x8xf32>
    %c0_27 = arith.constant 0 : index
    %c1_28 = arith.constant 1 : index
    %c1_29 = arith.constant 1 : index
    %c0_30 = arith.constant 0 : index
    %27 = vector.load %arg1[%c0_27, %c1_28, %c1_29, %c0_30] : memref<1x10x10x16xbf16, #tpu.memory_space<vmem>>, vector<1x8x8x16xbf16>
    %28 = vector.shape_cast %27 : vector<1x8x8x16xbf16> to vector<8x8x16xbf16>
    %29 = vector.shape_cast %28 : vector<8x8x16xbf16> to vector<64x16xbf16>
    %c4 = arith.constant 4 : index
    %c0_31 = arith.constant 0 : index
    %c0_32 = arith.constant 0 : index
    %30 = vector.load %arg2[%c4, %c0_31, %c0_32] : memref<9x16x8xbf16, #tpu.memory_space<vmem>>, vector<1x16x8xbf16>
    %31 = vector.shape_cast %30 : vector<1x16x8xbf16> to vector<16x8xbf16>
    %cst_33 = arith.constant dense<0.000000e+00> : vector<64x8xf32>
    %32 = tpu.matmul %29, %31, %cst_33 {dimension_numbers = #tpu.dot_dimension_numbers<[1], [0], [0], [1], [0, 0, 1, 1], [], []>} : vector<64x16xbf16>, vector<16x8xbf16>, vector<64x8xf32> -> vector<64x8xf32>
    %33 = arith.addf %26, %32 : vector<64x8xf32>
    %c0_34 = arith.constant 0 : index
    %c1_35 = arith.constant 1 : index
    %c2_36 = arith.constant 2 : index
    %c0_37 = arith.constant 0 : index
    %34 = vector.load %arg1[%c0_34, %c1_35, %c2_36, %c0_37] : memref<1x10x10x16xbf16, #tpu.memory_space<vmem>>, vector<1x8x8x16xbf16>
    %35 = vector.shape_cast %34 : vector<1x8x8x16xbf16> to vector<8x8x16xbf16>
    %36 = vector.shape_cast %35 : vector<8x8x16xbf16> to vector<64x16xbf16>
    %c5 = arith.constant 5 : index
    %c0_38 = arith.constant 0 : index
    %c0_39 = arith.constant 0 : index
    %37 = vector.load %arg2[%c5, %c0_38, %c0_39] : memref<9x16x8xbf16, #tpu.memory_space<vmem>>, vector<1x16x8xbf16>
    %38 = vector.shape_cast %37 : vector<1x16x8xbf16> to vector<16x8xbf16>
    %cst_40 = arith.constant dense<0.000000e+00> : vector<64x8xf32>
    %39 = tpu.matmul %36, %38, %cst_40 {dimension_numbers = #tpu.dot_dimension_numbers<[1], [0], [0], [1], [0, 0, 1, 1], [], []>} : vector<64x16xbf16>, vector<16x8xbf16>, vector<64x8xf32> -> vector<64x8xf32>
    %40 = arith.addf %33, %39 : vector<64x8xf32>
    %c0_41 = arith.constant 0 : index
    %c2_42 = arith.constant 2 : index
    %c0_43 = arith.constant 0 : index
    %c0_44 = arith.constant 0 : index
    %41 = vector.load %arg1[%c0_41, %c2_42, %c0_43, %c0_44] : memref<1x10x10x16xbf16, #tpu.memory_space<vmem>>, vector<1x8x8x16xbf16>
    %42 = vector.shape_cast %41 : vector<1x8x8x16xbf16> to vector<8x8x16xbf16>
    %43 = vector.shape_cast %42 : vector<8x8x16xbf16> to vector<64x16xbf16>
    %c6 = arith.constant 6 : index
    %c0_45 = arith.constant 0 : index
    %c0_46 = arith.constant 0 : index
    %44 = vector.load %arg2[%c6, %c0_45, %c0_46] : memref<9x16x8xbf16, #tpu.memory_space<vmem>>, vector<1x16x8xbf16>
    %45 = vector.shape_cast %44 : vector<1x16x8xbf16> to vector<16x8xbf16>
    %cst_47 = arith.constant dense<0.000000e+00> : vector<64x8xf32>
    %46 = tpu.matmul %43, %45, %cst_47 {dimension_numbers = #tpu.dot_dimension_numbers<[1], [0], [0], [1], [0, 0, 1, 1], [], []>} : vector<64x16xbf16>, vector<16x8xbf16>, vector<64x8xf32> -> vector<64x8xf32>
    %47 = arith.addf %40, %46 : vector<64x8xf32>
    %c0_48 = arith.constant 0 : index
    %c2_49 = arith.constant 2 : index
    %c1_50 = arith.constant 1 : index
    %c0_51 = arith.constant 0 : index
    %48 = vector.load %arg1[%c0_48, %c2_49, %c1_50, %c0_51] : memref<1x10x10x16xbf16, #tpu.memory_space<vmem>>, vector<1x8x8x16xbf16>
    %49 = vector.shape_cast %48 : vector<1x8x8x16xbf16> to vector<8x8x16xbf16>
    %50 = vector.shape_cast %49 : vector<8x8x16xbf16> to vector<64x16xbf16>
    %c7 = arith.constant 7 : index
    %c0_52 = arith.constant 0 : index
    %c0_53 = arith.constant 0 : index
    %51 = vector.load %arg2[%c7, %c0_52, %c0_53] : memref<9x16x8xbf16, #tpu.memory_space<vmem>>, vector<1x16x8xbf16>
    %52 = vector.shape_cast %51 : vector<1x16x8xbf16> to vector<16x8xbf16>
    %cst_54 = arith.constant dense<0.000000e+00> : vector<64x8xf32>
    %53 = tpu.matmul %50, %52, %cst_54 {dimension_numbers = #tpu.dot_dimension_numbers<[1], [0], [0], [1], [0, 0, 1, 1], [], []>} : vector<64x16xbf16>, vector<16x8xbf16>, vector<64x8xf32> -> vector<64x8xf32>
    %54 = arith.addf %47, %53 : vector<64x8xf32>
    %c0_55 = arith.constant 0 : index
    %c2_56 = arith.constant 2 : index
    %c2_57 = arith.constant 2 : index
    %c0_58 = arith.constant 0 : index
    %55 = vector.load %arg1[%c0_55, %c2_56, %c2_57, %c0_58] : memref<1x10x10x16xbf16, #tpu.memory_space<vmem>>, vector<1x8x8x16xbf16>
    %56 = vector.shape_cast %55 : vector<1x8x8x16xbf16> to vector<8x8x16xbf16>
    %57 = vector.shape_cast %56 : vector<8x8x16xbf16> to vector<64x16xbf16>
    %c8 = arith.constant 8 : index
    %c0_59 = arith.constant 0 : index
    %c0_60 = arith.constant 0 : index
    %58 = vector.load %arg2[%c8, %c0_59, %c0_60] : memref<9x16x8xbf16, #tpu.memory_space<vmem>>, vector<1x16x8xbf16>
    %59 = vector.shape_cast %58 : vector<1x16x8xbf16> to vector<16x8xbf16>
    %cst_61 = arith.constant dense<0.000000e+00> : vector<64x8xf32>
    %60 = tpu.matmul %57, %59, %cst_61 {dimension_numbers = #tpu.dot_dimension_numbers<[1], [0], [0], [1], [0, 0, 1, 1], [], []>} : vector<64x16xbf16>, vector<16x8xbf16>, vector<64x8xf32> -> vector<64x8xf32>
    %61 = arith.addf %54, %60 : vector<64x8xf32>
    %c0_62 = arith.constant 0 : index
    %c0_63 = arith.constant 0 : index
    %c0_64 = arith.constant 0 : index
    %62 = vector.load %arg3[%c0_62, %c0_63, %c0_64] : memref<1x64x16xbf16, #tpu.memory_space<vmem>>, vector<1x64x16xbf16>
    %63 = vector.shape_cast %62 : vector<1x64x16xbf16> to vector<64x16xbf16>
    %c0_65 = arith.constant 0 : index
    %c0_66 = arith.constant 0 : index
    %64 = vector.load %arg4[%c0_65, %c0_66] : memref<16x8xbf16, #tpu.memory_space<vmem>>, vector<16x8xbf16>
    %cst_67 = arith.constant dense<0.000000e+00> : vector<64x8xf32>
    %65 = tpu.matmul %63, %64, %cst_67 {dimension_numbers = #tpu.dot_dimension_numbers<[1], [0], [0], [1], [0, 0, 1, 1], [], []>} : vector<64x16xbf16>, vector<16x8xbf16>, vector<64x8xf32> -> vector<64x8xf32>
    %66 = arith.addf %61, %65 : vector<64x8xf32>
    %67 = vector.shape_cast %66 : vector<64x8xf32> to vector<1x64x8xf32>
    %c0_68 = arith.constant 0 : index
    %c0_69 = arith.constant 0 : index
    %c0_70 = arith.constant 0 : index
    %68 = vector.load %arg5[%c0_68, %c0_69, %c0_70] : memref<1x64x8xf32, #tpu.memory_space<vmem>>, vector<1x64x8xf32>
    tpu.vector_store %arg5[%c0_68, %c0_69, %c0_70], %67 {strides = array<i32>} : memref<1x64x8xf32, #tpu.memory_space<vmem>>, vector<1x64x8xf32>,
    return
  }
  func.func @transform_0(%arg0: i32) -> (i32, i32, i32, i32) {
    %c0_i32 = arith.constant 0 : i32
    %c0_i32_0 = arith.constant 0 : i32
    %c0_i32_1 = arith.constant 0 : i32
    %c0_i32_2 = arith.constant 0 : i32
    return %arg0, %c0_i32, %c0_i32_0, %c0_i32_1 : i32, i32, i32, i32
  }
  func.func @transform_1(%arg0: i32) -> (i32, i32, i32) {
    %c0_i32 = arith.constant 0 : i32
    %c0_i32_0 = arith.constant 0 : i32
    %c0_i32_1 = arith.constant 0 : i32
    %c0_i32_2 = arith.constant 0 : i32
    return %c0_i32, %c0_i32_0, %c0_i32_1 : i32, i32, i32
  }
  func.func @transform_2(%arg0: i32) -> (i32, i32, i32) {
    %c0_i32 = arith.constant 0 : i32
    %c0_i32_0 = arith.constant 0 : i32
    %c0_i32_1 = arith.constant 0 : i32
    return %arg0, %c0_i32, %c0_i32_0 : i32, i32, i32
  }
  func.func @transform_3(%arg0: i32) -> (i32, i32) {
    %c0_i32 = arith.constant 0 : i32
    %c0_i32_0 = arith.constant 0 : i32
    %c0_i32_1 = arith.constant 0 : i32
    return %c0_i32, %c0_i32_0 : i32, i32
  }
  func.func @transform_4(%arg0: i32) -> (i32, i32, i32) {
    %c0_i32 = arith.constant 0 : i32
    %c0_i32_0 = arith.constant 0 : i32
    %c0_i32_1 = arith.constant 0 : i32
    return %arg0, %c0_i32, %c0_i32_0 : i32, i32, i32
  }
}

</mosaic_0001>

<llo_original>
// kernel: block_forward.4
$region0: #{block_forward.4}
  #allocation0 [shape = 'u32[]', space=smem, size = 0x4, offset = 0x4, fixed_abs, tag = 'smem constant byte address 0x4 - core index']
  #allocation1 [shape = 'u32[144,128]{1,0:T(1,128)}', space=vmem, size = 0x12000, scoped, tag = 'internal scratch']
  %s0 = inlined_call_operand.vmem [shape: f32[2,8,128], index: 0, kind: input, shape index: {}]
  %s1 = inlined_call_operand.vmem [shape: f32[1,8,128], index: 1, kind: input, shape index: {}]
  %s2 = inlined_call_operand.vmem [shape: f32[1,8,128], index: 2, kind: input, shape index: {}]
  %s3 = inlined_call_operand.vmem [shape: bf16[2,8,128], index: 3, kind: output, shape index: {}]
  %s4 = sld [smem:[#allocation0]]
  $region45: #{block_forward.4} parent=0
    _
  %s6 = ssub.s32 1, %s4
  %s7 = scalar_select 0, %s6, %s4
  loop: start=0, step=1, limit=4
  $region2: #{block_forward.4} parent=0 // loop_pre_header
    _
  $region3: #{block_forward.4} parent=0 // loop_header
    %s9 = sphi 0, %s13
    %p10 = scmp.ge.s32.totalorder %s9, 4
    %s19 = sphi 0, %s21
    %s22 = sphi 0, %s19
    %s23 = sphi 0, %s22
    %s39 = sphi 0, %s23
    %s43 = sphi 0, %s43
    %s45 = sphi 0, %s43
    %s46 = sphi 0, %s45
    %s60 = sphi 0, %s46
    %s64 = sphi 0, %s64
    %s66 = sphi 0, %s64
    %s67 = sphi 0, %s66
    %s81 = sphi 0, %s67
    %s87 = sphi 0, %s89
    %s90 = sphi 0, %s87
    %s91 = sphi 0, %s90
    %s107 = sphi 0, %s91
  $region4: #{block_forward.4} parent=0 // loop_header_branch
    %12 = sbr.rel (%p10) target = $region8
  $region5: #{block_forward.4} parent=0 // loop_body
    %s14 = ssub.s32 %s9, 1
    %s15 = ssub.s32 %s9, 2
    %s16 = sadd.s32 %s9, 1
    %s17 = ssub.s32 %s9, %s16
    %p18 = scmp.eq.s32.totalorder %s17, 0
    %s20 = sadd.s32 %s19, 1
    %s21 = scalar_select %p18, %s19, %s20
    %p24 = pneg %p18
    %p25 = scmp.eq.s32.totalorder %s9, 1
    %p26 = por %p24, %p25
    %p27 = scmp.ne.s32.totalorder %s19, %s22
    %p28 = scmp.eq.s32.totalorder %s9, 0
    %p29 = por %p27, %p28
    %p30 = scmp.ne.s32.totalorder %s19, %s22
    %p31 = scmp.eq.s32.totalorder %s14, 1
    %p32 = por %p30, %p31
    %p33 = scmp.ne.s32.totalorder %s22, %s23
    %p34 = scmp.eq.s32.totalorder %s14, 0
    %p35 = por %p33, %p34
    %p36 = scmp.ne.s32.totalorder %s22, %s23
    %p37 = scmp.eq.s32.totalorder %s15, 1
    %p38 = por %p36, %p37
    %p40 = scmp.ne.s32.totalorder %s23, %s39
    %p41 = scmp.eq.s32.totalorder %s15, 0
    %p42 = por %p40, %p41
    %s44 = sadd.s32 %s43, 1
    %p47 = scmp.eq.s32.totalorder %s9, 1
    %p48 = scmp.ne.s32.totalorder %s43, %s45
    %p49 = scmp.eq.s32.totalorder %s9, 0
    %p50 = por %p48, %p49
    %p51 = scmp.ne.s32.totalorder %s43, %s45
    %p52 = scmp.eq.s32.totalorder %s14, 1
    %p53 = por %p51, %p52
    %p54 = scmp.ne.s32.totalorder %s45, %s46
    %p55 = scmp.eq.s32.totalorder %s14, 0
    %p56 = por %p54, %p55
    %p57 = scmp.ne.s32.totalorder %s45, %s46
    %p58 = scmp.eq.s32.totalorder %s15, 1
    %p59 = por %p57, %p58
    %p61 = scmp.ne.s32.totalorder %s46, %s60
    %p62 = scmp.eq.s32.totalorder %s15, 0
    %p63 = por %p61, %p62
    %s65 = sadd.s32 %s64, 1
    %p68 = scmp.eq.s32.totalorder %s9, 1
    %p69 = scmp.ne.s32.totalorder %s64, %s66
    %p70 = scmp.eq.s32.totalorder %s9, 0
    %p71 = por %p69, %p70
    %p72 = scmp.ne.s32.totalorder %s64, %s66
    %p73 = scmp.eq.s32.totalorder %s14, 1
    %p74 = por %p72, %p73
    %p75 = scmp.ne.s32.totalorder %s66, %s67
    %p76 = scmp.eq.s32.totalorder %s14, 0
    %p77 = por %p75, %p76
    %p78 = scmp.ne.s32.totalorder %s66, %s67
    %p79 = scmp.eq.s32.totalorder %s15, 1
    %p80 = por %p78, %p79
    %p82 = scmp.ne.s32.totalorder %s67, %s81
    %p83 = scmp.eq.s32.totalorder %s15, 0
    %p84 = por %p82, %p83
    %s85 = ssub.s32 %s9, %s16
    %p86 = scmp.eq.s32.totalorder %s85, 0
    %s88 = sadd.s32 %s87, 1
    %s89 = scalar_select %p86, %s87, %s88
    %p92 = pneg %p86
    %p93 = scmp.eq.s32.totalorder %s9, 1
    %p94 = por %p92, %p93
    %p95 = scmp.ne.s32.totalorder %s87, %s90
    %p96 = scmp.eq.s32.totalorder %s9, 0
    %p97 = por %p95, %p96
    %p98 = scmp.ne.s32.totalorder %s87, %s90
    %p99 = scmp.eq.s32.totalorder %s14, 1
    %p100 = por %p98, %p99
    %p101 = scmp.ne.s32.totalorder %s90, %s91
    %p102 = scmp.eq.s32.totalorder %s14, 0
    %p103 = por %p101, %p102
    %p104 = scmp.ne.s32.totalorder %s90, %s91
    %p105 = scmp.eq.s32.totalorder %s15, 1
    %p106 = por %p104, %p105
    %p108 = scmp.ne.s32.totalorder %s91, %s107
    %p109 = scmp.eq.s32.totalorder %s15, 0
    %p110 = por %p108, %p109
    %p111 = scmp.le.s32.totalorder 1, %s9
    %p112 = scmp.lt.s32.totalorder %s9, 3
    %p113 = pnand %p111, %p112
    %p114 = pneg %p113
    // Predicated region
    $region9: #{block_forward.4} parent=5 // pred_check
      _
    $region10: #{block_forward.4} parent=5 // pred_check_branch
      %116 = sbr.rel (%p113) target = $region12
    $region11: #{block_forward.4} parent=5 // pred_region
      %s117 = ssub.s32 %s9, 1
      // Predicated region
      $region13: #{block_forward.4} parent=11 // pred_check
        %p118 = pneg %p56
      $region14: #{block_forward.4} parent=11 // pred_check_branch
        %120 = sbr.rel (%p118) target = $region16
      $region15: #{block_forward.4} parent=11 // pred_region
        _
      $region16: #{block_forward.4} parent=11 // pred_fallthru
        _
      // Predicated region
      $region17: #{block_forward.4} parent=11 // pred_check
        %p121 = pneg %p77
      $region18: #{block_forward.4} parent=11 // pred_check_branch
        %123 = sbr.rel (%p121) target = $region20
      $region19: #{block_forward.4} parent=11 // pred_region
        _
      $region20: #{block_forward.4} parent=11 // pred_fallthru
        _
    $region12: #{block_forward.4} parent=5 // pred_fallthru
      _
    %p124 = scmp.lt.s32.totalorder %s9, 2
    // Predicated region
    $region21: #{block_forward.4} parent=5 // pred_check
      %p125 = pneg %p124
    $region22: #{block_forward.4} parent=5 // pred_check_branch
      %127 = sbr.rel (%p125) target = $region24
    $region23: #{block_forward.4} parent=5 // pred_region
      // Predicated region
      $region25: #{block_forward.4} parent=23 // pred_check
        %p128 = pneg %p29
      $region26: #{block_forward.4} parent=23 // pred_check_branch
        %130 = sbr.rel (%p128) target = $region28
      $region27: #{block_forward.4} parent=23 // pred_region
        %p131 = scmp.lt.s32.totalorder %s9, 1
        %s132 = scalar_select %p131, %s9, 1
        %s133 = smul.addr %s132, 8
        %s134 = scalar_lea.vmem %s0, %s133
      $region28: #{block_forward.4} parent=23 // pred_fallthru
        _
    $region24: #{block_forward.4} parent=5 // pred_fallthru
      _
    %p135 = scmp.le.s32.totalorder 1, %s9
    %p136 = scmp.lt.s32.totalorder %s9, 3
    %p137 = pnand %p135, %p136
    %p138 = pneg %p137
    // Predicated region
    $region29: #{block_forward.4} parent=5 // pred_check
      _
    $region30: #{block_forward.4} parent=5 // pred_check_branch
      %140 = sbr.rel (%p137) target = $region32
    $region31: #{block_forward.4} parent=5 // pred_region
      %s141 = ssub.s32 %s9, 1
      %p142 = scmp.lt.s32.totalorder %s14, 1
      %s143 = scalar_select %p142, %s14, 1
      %s144 = smul.addr %s143, 8
      %s145 = scalar_lea.vmem %s0, %s144
      %p146 = pneg %p35
      %p147 = pneg %p32
      %p148 = pneg %p56
      %p149 = pneg %p53
      %p150 = pneg %p77
      %p151 = pneg %p74
      %p152 = pneg %p103
      %p153 = pneg %p100
      %p154 = scmp.lt.s32.totalorder %s14, 1
      %s155 = scalar_select %p154, %s14, 1
      %s156 = smul.addr %s155, 4
      %s157 = scalar_lea.vmem %s3, %s156
      %p158 = scmp.lt.s32.totalorder %s14, 1
      %s159 = scalar_select %p158, %s14, 1
      %s160 = smul.addr %s159, 8
      %s161 = scalar_lea.vmem %s0, %s160
      %p162 = scmp.lt.s32.totalorder %s14, 1
      %s163 = scalar_select %p162, %s14, 1
      %s164 = smul.addr %s163, 4
      %s165 = scalar_lea.vmem %s3, %s164
      %v166 = vld [vmem:[%s161] sm:$0xff]
      %167 = vadd.xlane.f32.xlu0 %v166
      %v168 = vpop.xlane.xlu0 %167
      %v169 = vrot.slane %v168, 4
      %v170 = vadd.f32 %v168, %v169
      %v171 = vrot.slane %v170, 2
      %v172 = vadd.f32 %v170, %v171
      %v173 = vrot.slane %v172, 1
      %v174 = vadd.f32 %v172, %v173
      %v175 = vmul.f32 %v174, 0.0009765625
      %v176 = vsub.f32 %v166, %v175
      %v177 = vmul.f32 %v176, %v176
      %178 = vadd.xlane.f32.xlu0 %v177
      %v179 = vpop.xlane.xlu0 %178
      %v180 = vrot.slane %v179, 4
      %v181 = vadd.f32 %v179, %v180
      %v182 = vrot.slane %v181, 2
      %v183 = vadd.f32 %v181, %v182
      %v184 = vrot.slane %v183, 1
      %v185 = vadd.f32 %v183, %v184
      %v186 = vmul.f32 %v185, 0.0009765625
      %v187 = vadd.f32 %v186, 1e-05
      %v188 = vrsqrt.pop %v187
      %v189 = vmul.f32 %v176, %v188
      %v190 = vld [vmem:[%s1] sm:$0xff]
      %v191 = vmul.f32 %v189, %v190
      %v192 = vld [vmem:[%s2] sm:$0xff]
      %v193 = vadd.f32 %v191, %v192
      %v194 = vmax.f32 %v193, 0.0
      %v195 = vpack.c.bf16 %v194, %v194
      %196 = vst [vmem:[%s165] sm:$0xf] %v195
      %p197 = scmp.lt.s32.totalorder %s14, 1
      %s198 = scalar_select %p197, %s14, 1
      %s199 = smul.addr %s198, 4
      %s200 = scalar_lea.vmem %s3, %s199
      // Predicated region
      $region33: #{block_forward.4} parent=31 // pred_check
        %p201 = pneg %p100
      $region34: #{block_forward.4} parent=31 // pred_check_branch
        %203 = sbr.rel (%p201) target = $region36
      $region35: #{block_forward.4} parent=31 // pred_region
        _
      $region36: #{block_forward.4} parent=31 // pred_fallthru
        _
    $region32: #{block_forward.4} parent=5 // pred_fallthru
      _
    %p204 = scmp.le.s32.totalorder 2, %s9
    // Predicated region
    $region37: #{block_forward.4} parent=5 // pred_check
      %p205 = pneg %p204
    $region38: #{block_forward.4} parent=5 // pred_check_branch
      %207 = sbr.rel (%p205) target = $region40
    $region39: #{block_forward.4} parent=5 // pred_region
      %s208 = ssub.s32 %s9, 2
      // Predicated region
      $region41: #{block_forward.4} parent=39 // pred_check
        %p209 = pneg %p106
      $region42: #{block_forward.4} parent=39 // pred_check_branch
        %211 = sbr.rel (%p209) target = $region44
      $region43: #{block_forward.4} parent=39 // pred_region
        %p212 = scmp.lt.s32.totalorder %s15, 1
        %s213 = scalar_select %p212, %s15, 1
        %s214 = smul.addr %s213, 4
        %s215 = scalar_lea.vmem %s3, %s214
      $region44: #{block_forward.4} parent=39 // pred_fallthru
        _
    $region40: #{block_forward.4} parent=5 // pred_fallthru
      _
  $region6: #{block_forward.4} parent=0 // loop_footer
    %s13 = sadd.s32 1, %s9
  $region7: #{block_forward.4} parent=0 // loop_footer_branch
    %8 = sbr.rel target = $region3
  $region8: #{block_forward.4} parent=0 // loop_exit
    _

// kernel: block_forward.6
$region0: #{block_forward.6}
  #allocation0 [shape = 'u32[]', space=smem, size = 0x4, offset = 0x4, fixed_abs, tag = 'smem constant byte address 0x4 - core index']
  #allocation1 [shape = 'u32[144,128]{1,0:T(1,128)}', space=vmem, size = 0x12000, scoped, tag = 'internal scratch']
  %s0 = inlined_call_operand.vmem [shape: f32[2,4,128], index: 0, kind: input, shape index: {}]
  %s1 = inlined_call_operand.vmem [shape: f32[1,4,128], index: 1, kind: input, shape index: {}]
  %s2 = inlined_call_operand.vmem [shape: f32[1,4,128], index: 2, kind: input, shape index: {}]
  %s3 = inlined_call_operand.vmem [shape: bf16[2,4,128], index: 3, kind: output, shape index: {}]
  %s4 = sld [smem:[#allocation0]]
  $region45: #{block_forward.6} parent=0
    _
  %s6 = ssub.s32 1, %s4
  %s7 = scalar_select 0, %s6, %s4
  loop: start=0, step=1, limit=4
  $region2: #{block_forward.6} parent=0 // loop_pre_header
    _
  $region3: #{block_forward.6} parent=0 // loop_header
    %s9 = sphi 0, %s13
    %p10 = scmp.ge.s32.totalorder %s9, 4
    %s19 = sphi 0, %s21
    %s22 = sphi 0, %s19
    %s23 = sphi 0, %s22
    %s39 = sphi 0, %s23
    %s43 = sphi 0, %s43
    %s45 = sphi 0, %s43
    %s46 = sphi 0, %s45
    %s60 = sphi 0, %s46
    %s64 = sphi 0, %s64
    %s66 = sphi 0, %s64
    %s67 = sphi 0, %s66
    %s81 = sphi 0, %s67
    %s87 = sphi 0, %s89
    %s90 = sphi 0, %s87
    %s91 = sphi 0, %s90
    %s107 = sphi 0, %s91
  $region4: #{block_forward.6} parent=0 // loop_header_branch
    %12 = sbr.rel (%p10) target = $region8
  $region5: #{block_forward.6} parent=0 // loop_body
    %s14 = ssub.s32 %s9, 1
    %s15 = ssub.s32 %s9, 2
    %s16 = sadd.s32 %s9, 1
    %s17 = ssub.s32 %s9, %s16
    %p18 = scmp.eq.s32.totalorder %s17, 0
    %s20 = sadd.s32 %s19, 1
    %s21 = scalar_select %p18, %s19, %s20
    %p24 = pneg %p18
    %p25 = scmp.eq.s32.totalorder %s9, 1
    %p26 = por %p24, %p25
    %p27 = scmp.ne.s32.totalorder %s19, %s22
    %p28 = scmp.eq.s32.totalorder %s9, 0
    %p29 = por %p27, %p28
    %p30 = scmp.ne.s32.totalorder %s19, %s22
    %p31 = scmp.eq.s32.totalorder %s14, 1
    %p32 = por %p30, %p31
    %p33 = scmp.ne.s32.totalorder %s22, %s23
    %p34 = scmp.eq.s32.totalorder %s14, 0
    %p35 = por %p33, %p34
    %p36 = scmp.ne.s32.totalorder %s22, %s23
    %p37 = scmp.eq.s32.totalorder %s15, 1
    %p38 = por %p36, %p37
    %p40 = scmp.ne.s32.totalorder %s23, %s39
    %p41 = scmp.eq.s32.totalorder %s15, 0
    %p42 = por %p40, %p41
    %s44 = sadd.s32 %s43, 1
    %p47 = scmp.eq.s32.totalorder %s9, 1
    %p48 = scmp.ne.s32.totalorder %s43, %s45
    %p49 = scmp.eq.s32.totalorder %s9, 0
    %p50 = por %p48, %p49
    %p51 = scmp.ne.s32.totalorder %s43, %s45
    %p52 = scmp.eq.s32.totalorder %s14, 1
    %p53 = por %p51, %p52
    %p54 = scmp.ne.s32.totalorder %s45, %s46
    %p55 = scmp.eq.s32.totalorder %s14, 0
    %p56 = por %p54, %p55
    %p57 = scmp.ne.s32.totalorder %s45, %s46
    %p58 = scmp.eq.s32.totalorder %s15, 1
    %p59 = por %p57, %p58
    %p61 = scmp.ne.s32.totalorder %s46, %s60
    %p62 = scmp.eq.s32.totalorder %s15, 0
    %p63 = por %p61, %p62
    %s65 = sadd.s32 %s64, 1
    %p68 = scmp.eq.s32.totalorder %s9, 1
    %p69 = scmp.ne.s32.totalorder %s64, %s66
    %p70 = scmp.eq.s32.totalorder %s9, 0
    %p71 = por %p69, %p70
    %p72 = scmp.ne.s32.totalorder %s64, %s66
    %p73 = scmp.eq.s32.totalorder %s14, 1
    %p74 = por %p72, %p73
    %p75 = scmp.ne.s32.totalorder %s66, %s67
    %p76 = scmp.eq.s32.totalorder %s14, 0
    %p77 = por %p75, %p76
    %p78 = scmp.ne.s32.totalorder %s66, %s67
    %p79 = scmp.eq.s32.totalorder %s15, 1
    %p80 = por %p78, %p79
    %p82 = scmp.ne.s32.totalorder %s67, %s81
    %p83 = scmp.eq.s32.totalorder %s15, 0
    %p84 = por %p82, %p83
    %s85 = ssub.s32 %s9, %s16
    %p86 = scmp.eq.s32.totalorder %s85, 0
    %s88 = sadd.s32 %s87, 1
    %s89 = scalar_select %p86, %s87, %s88
    %p92 = pneg %p86
    %p93 = scmp.eq.s32.totalorder %s9, 1
    %p94 = por %p92, %p93
    %p95 = scmp.ne.s32.totalorder %s87, %s90
    %p96 = scmp.eq.s32.totalorder %s9, 0
    %p97 = por %p95, %p96
    %p98 = scmp.ne.s32.totalorder %s87, %s90
    %p99 = scmp.eq.s32.totalorder %s14, 1
    %p100 = por %p98, %p99
    %p101 = scmp.ne.s32.totalorder %s90, %s91
    %p102 = scmp.eq.s32.totalorder %s14, 0
    %p103 = por %p101, %p102
    %p104 = scmp.ne.s32.totalorder %s90, %s91
    %p105 = scmp.eq.s32.totalorder %s15, 1
    %p106 = por %p104, %p105
    %p108 = scmp.ne.s32.totalorder %s91, %s107
    %p109 = scmp.eq.s32.totalorder %s15, 0
    %p110 = por %p108, %p109
    %p111 = scmp.le.s32.totalorder 1, %s9
    %p112 = scmp.lt.s32.totalorder %s9, 3
    %p113 = pnand %p111, %p112
    %p114 = pneg %p113
    // Predicated region
    $region9: #{block_forward.6} parent=5 // pred_check
      _
    $region10: #{block_forward.6} parent=5 // pred_check_branch
      %116 = sbr.rel (%p113) target = $region12
    $region11: #{block_forward.6} parent=5 // pred_region
      %s117 = ssub.s32 %s9, 1
      // Predicated region
      $region13: #{block_forward.6} parent=11 // pred_check
        %p118 = pneg %p56
      $region14: #{block_forward.6} parent=11 // pred_check_branch
        %120 = sbr.rel (%p118) target = $region16
      $region15: #{block_forward.6} parent=11 // pred_region
        _
      $region16: #{block_forward.6} parent=11 // pred_fallthru
        _
      // Predicated region
      $region17: #{block_forward.6} parent=11 // pred_check
        %p121 = pneg %p77
      $region18: #{block_forward.6} parent=11 // pred_check_branch
        %123 = sbr.rel (%p121) target = $region20
      $region19: #{block_forward.6} parent=11 // pred_region
        _
      $region20: #{block_forward.6} parent=11 // pred_fallthru
        _
    $region12: #{block_forward.6} parent=5 // pred_fallthru
      _
    %p124 = scmp.lt.s32.totalorder %s9, 2
    // Predicated region
    $region21: #{block_forward.6} parent=5 // pred_check
      %p125 = pneg %p124
    $region22: #{block_forward.6} parent=5 // pred_check_branch
      %127 = sbr.rel (%p125) target = $region24
    $region23: #{block_forward.6} parent=5 // pred_region
      // Predicated region
      $region25: #{block_forward.6} parent=23 // pred_check
        %p128 = pneg %p29
      $region26: #{block_forward.6} parent=23 // pred_check_branch
        %130 = sbr.rel (%p128) target = $region28
      $region27: #{block_forward.6} parent=23 // pred_region
        %p131 = scmp.lt.s32.totalorder %s9, 1
        %s132 = scalar_select %p131, %s9, 1
        %s133 = smul.addr %s132, 4
        %s134 = scalar_lea.vmem %s0, %s133
      $region28: #{block_forward.6} parent=23 // pred_fallthru
        _
    $region24: #{block_forward.6} parent=5 // pred_fallthru
      _
    %p135 = scmp.le.s32.totalorder 1, %s9
    %p136 = scmp.lt.s32.totalorder %s9, 3
    %p137 = pnand %p135, %p136
    %p138 = pneg %p137
    // Predicated region
    $region29: #{block_forward.6} parent=5 // pred_check
      _
    $region30: #{block_forward.6} parent=5 // pred_check_branch
      %140 = sbr.rel (%p137) target = $region32
    $region31: #{block_forward.6} parent=5 // pred_region
      %s141 = ssub.s32 %s9, 1
      %p142 = scmp.lt.s32.totalorder %s14, 1
      %s143 = scalar_select %p142, %s14, 1
      %s144 = smul.addr %s143, 4
      %s145 = scalar_lea.vmem %s0, %s144
      %p146 = pneg %p35
      %p147 = pneg %p32
      %p148 = pneg %p56
      %p149 = pneg %p53
      %p150 = pneg %p77
      %p151 = pneg %p74
      %p152 = pneg %p103
      %p153 = pneg %p100
      %p154 = scmp.lt.s32.totalorder %s14, 1
      %s155 = scalar_select %p154, %s14, 1
      %s156 = smul.addr %s155, 2
      %s157 = scalar_lea.vmem %s3, %s156
      %p158 = scmp.lt.s32.totalorder %s14, 1
      %s159 = scalar_select %p158, %s14, 1
      %s160 = smul.addr %s159, 4
      %s161 = scalar_lea.vmem %s0, %s160
      %p162 = scmp.lt.s32.totalorder %s14, 1
      %s163 = scalar_select %p162, %s14, 1
      %s164 = smul.addr %s163, 2
      %s165 = scalar_lea.vmem %s3, %s164
      %v166 = vld [vmem:[%s161] sm:$0xf]
      %vm167 = vcmask 1043456
      %v168 = vsel %vm167, %v166, 0.0
      %169 = vadd.xlane.f32.xlu0 %v168
      %v170 = vpop.xlane.xlu0 %169
      %v171 = vsel %vm167, %v170, 0.0
      %v172 = vrot.slane %v171, 4
      %v173 = vadd.f32 %v171, %v172
      %v174 = vrot.slane %v173, 2
      %v175 = vadd.f32 %v173, %v174
      %v176 = vrot.slane %v175, 1
      %v177 = vadd.f32 %v175, %v176
      %v178 = vmul.f32 %v177, 0.001953125
      %v179 = vsub.f32 %v166, %v178
      %v180 = vmul.f32 %v179, %v179
      %v181 = vsel %vm167, %v180, 0.0
      %182 = vadd.xlane.f32.xlu0 %v181
      %v183 = vpop.xlane.xlu0 %182
      %v184 = vsel %vm167, %v183, 0.0
      %v185 = vrot.slane %v184, 4
      %v186 = vadd.f32 %v184, %v185
      %v187 = vrot.slane %v186, 2
      %v188 = vadd.f32 %v186, %v187
      %v189 = vrot.slane %v188, 1
      %v190 = vadd.f32 %v188, %v189
      %v191 = vmul.f32 %v190, 0.001953125
      %v192 = vadd.f32 %v191, 1e-05
      %v193 = vrsqrt.pop %v192
      %v194 = vmul.f32 %v179, %v193
      %v195 = vld [vmem:[%s1] sm:$0xf]
      %v196 = vmul.f32 %v194, %v195
      %v197 = vld [vmem:[%s2] sm:$0xf]
      %v198 = vadd.f32 %v196, %v197
      %v199 = vmax.f32 %v198, 0.0
      %v200 = vpack.c.bf16 %v199, %v199
      %201 = vst [vmem:[%s165] sm:$0x3] %v200
      %p202 = scmp.lt.s32.totalorder %s14, 1
      %s203 = scalar_select %p202, %s14, 1
      %s204 = smul.addr %s203, 2
      %s205 = scalar_lea.vmem %s3, %s204
      // Predicated region
      $region33: #{block_forward.6} parent=31 // pred_check
        %p206 = pneg %p100
      $region34: #{block_forward.6} parent=31 // pred_check_branch
        %208 = sbr.rel (%p206) target = $region36
      $region35: #{block_forward.6} parent=31 // pred_region
        _
      $region36: #{block_forward.6} parent=31 // pred_fallthru
        _
    $region32: #{block_forward.6} parent=5 // pred_fallthru
      _
    %p209 = scmp.le.s32.totalorder 2, %s9
    // Predicated region
    $region37: #{block_forward.6} parent=5 // pred_check
      %p210 = pneg %p209
    $region38: #{block_forward.6} parent=5 // pred_check_branch
      %212 = sbr.rel (%p210) target = $region40
    $region39: #{block_forward.6} parent=5 // pred_region
      %s213 = ssub.s32 %s9, 2
      // Predicated region
      $region41: #{block_forward.6} parent=39 // pred_check
        %p214 = pneg %p106
      $region42: #{block_forward.6} parent=39 // pred_check_branch
        %216 = sbr.rel (%p214) target = $region44
      $region43: #{block_forward.6} parent=39 // pred_region
        %p217 = scmp.lt.s32.totalorder %s15, 1
        %s218 = scalar_select %p217, %s15, 1
        %s219 = smul.addr %s218, 2
        %s220 = scalar_lea.vmem %s3, %s219
      $region44: #{block_forward.6} parent=39 // pred_fallthru
        _
    $region40: #{block_forward.6} parent=5 // pred_fallthru
      _
  $region6: #{block_forward.6} parent=0 // loop_footer
    %s13 = sadd.s32 1, %s9
  $region7: #{block_forward.6} parent=0 // loop_footer_branch
    %8 = sbr.rel target = $region3
  $region8: #{block_forward.6} parent=0 // loop_exit
    _

// kernel: block_forward.5
$region0: #{block_forward.5}
  #allocation0 [shape = 'u32[]', space=smem, size = 0x4, offset = 0x4, fixed_abs, tag = 'smem constant byte address 0x4 - core index']
  #allocation1 [shape = 'u32[144,128]{1,0:T(1,128)}', space=vmem, size = 0x12000, scoped, tag = 'internal scratch']
  %s0 = inlined_call_operand.vmem [shape: bf16[8,9,9,16], index: 0, kind: input, shape index: {}]
  %s1 = inlined_call_operand.vmem [shape: bf16[9,16,8], index: 1, kind: input, shape index: {}]
  %s2 = inlined_call_operand.vmem [shape: f32[2,64,8], index: 2, kind: output, shape index: {}]
  %s3 = sld [smem:[#allocation0]]
  $region41: #{block_forward.5} parent=0
    _
  %s5 = ssub.s32 1, %s3
  %s6 = scalar_select 0, %s5, %s3
  loop: start=0, step=1, limit=4
  $region2: #{block_forward.5} parent=0 // loop_pre_header
    _
  $region3: #{block_forward.5} parent=0 // loop_header
    %s8 = sphi 0, %s12
    %p9 = scmp.ge.s32.totalorder %s8, 4
    %s18 = sphi 0, %s20
    %s21 = sphi 0, %s18
    %s22 = sphi 0, %s21
    %s38 = sphi 0, %s22
    %s42 = sphi 0, %s42
    %s44 = sphi 0, %s42
    %s45 = sphi 0, %s44
    %s59 = sphi 0, %s45
    %s65 = sphi 0, %s67
    %s68 = sphi 0, %s65
    %s69 = sphi 0, %s68
    %s85 = sphi 0, %s69
  $region4: #{block_forward.5} parent=0 // loop_header_branch
    %11 = sbr.rel (%p9) target = $region8
  $region5: #{block_forward.5} parent=0 // loop_body
    %s13 = ssub.s32 %s8, 1
    %s14 = ssub.s32 %s8, 2
    %s15 = sadd.s32 %s8, 1
    %s16 = ssub.s32 %s8, %s15
    %p17 = scmp.eq.s32.totalorder %s16, 0
    %s19 = sadd.s32 %s18, 1
    %s20 = scalar_select %p17, %s18, %s19
    %p23 = pneg %p17
    %p24 = scmp.eq.s32.totalorder %s8, 1
    %p25 = por %p23, %p24
    %p26 = scmp.ne.s32.totalorder %s18, %s21
    %p27 = scmp.eq.s32.totalorder %s8, 0
    %p28 = por %p26, %p27
    %p29 = scmp.ne.s32.totalorder %s18, %s21
    %p30 = scmp.eq.s32.totalorder %s13, 1
    %p31 = por %p29, %p30
    %p32 = scmp.ne.s32.totalorder %s21, %s22
    %p33 = scmp.eq.s32.totalorder %s13, 0
    %p34 = por %p32, %p33
    %p35 = scmp.ne.s32.totalorder %s21, %s22
    %p36 = scmp.eq.s32.totalorder %s14, 1
    %p37 = por %p35, %p36
    %p39 = scmp.ne.s32.totalorder %s22, %s38
    %p40 = scmp.eq.s32.totalorder %s14, 0
    %p41 = por %p39, %p40
    %s43 = sadd.s32 %s42, 1
    %p46 = scmp.eq.s32.totalorder %s8, 1
    %p47 = scmp.ne.s32.totalorder %s42, %s44
    %p48 = scmp.eq.s32.totalorder %s8, 0
    %p49 = por %p47, %p48
    %p50 = scmp.ne.s32.totalorder %s42, %s44
    %p51 = scmp.eq.s32.totalorder %s13, 1
    %p52 = por %p50, %p51
    %p53 = scmp.ne.s32.totalorder %s44, %s45
    %p54 = scmp.eq.s32.totalorder %s13, 0
    %p55 = por %p53, %p54
    %p56 = scmp.ne.s32.totalorder %s44, %s45
    %p57 = scmp.eq.s32.totalorder %s14, 1
    %p58 = por %p56, %p57
    %p60 = scmp.ne.s32.totalorder %s45, %s59
    %p61 = scmp.eq.s32.totalorder %s14, 0
    %p62 = por %p60, %p61
    %s63 = ssub.s32 %s8, %s15
    %p64 = scmp.eq.s32.totalorder %s63, 0
    %s66 = sadd.s32 %s65, 1
    %s67 = scalar_select %p64, %s65, %s66
    %p70 = pneg %p64
    %p71 = scmp.eq.s32.totalorder %s8, 1
    %p72 = por %p70, %p71
    %p73 = scmp.ne.s32.totalorder %s65, %s68
    %p74 = scmp.eq.s32.totalorder %s8, 0
    %p75 = por %p73, %p74
    %p76 = scmp.ne.s32.totalorder %s65, %s68
    %p77 = scmp.eq.s32.totalorder %s13, 1
    %p78 = por %p76, %p77
    %p79 = scmp.ne.s32.totalorder %s68, %s69
    %p80 = scmp.eq.s32.totalorder %s13, 0
    %p81 = por %p79, %p80
    %p82 = scmp.ne.s32.totalorder %s68, %s69
    %p83 = scmp.eq.s32.totalorder %s14, 1
    %p84 = por %p82, %p83
    %p86 = scmp.ne.s32.totalorder %s69, %s85
    %p87 = scmp.eq.s32.totalorder %s14, 0
    %p88 = por %p86, %p87
    %p89 = scmp.le.s32.totalorder 1, %s8
    %p90 = scmp.lt.s32.totalorder %s8, 3
    %p91 = pnand %p89, %p90
    %p92 = pneg %p91
    // Predicated region
    $region9: #{block_forward.5} parent=5 // pred_check
      _
    $region10: #{block_forward.5} parent=5 // pred_check_branch
      %94 = sbr.rel (%p91) target = $region12
    $region11: #{block_forward.5} parent=5 // pred_region
      %s95 = ssub.s32 %s8, 1
      // Predicated region
      $region13: #{block_forward.5} parent=11 // pred_check
        %p96 = pneg %p55
      $region14: #{block_forward.5} parent=11 // pred_check_branch
        %98 = sbr.rel (%p96) target = $region16
      $region15: #{block_forward.5} parent=11 // pred_region
        _
      $region16: #{block_forward.5} parent=11 // pred_fallthru
        _
    $region12: #{block_forward.5} parent=5 // pred_fallthru
      _
    %p99 = scmp.lt.s32.totalorder %s8, 2
    // Predicated region
    $region17: #{block_forward.5} parent=5 // pred_check
      %p100 = pneg %p99
    $region18: #{block_forward.5} parent=5 // pred_check_branch
      %102 = sbr.rel (%p100) target = $region20
    $region19: #{block_forward.5} parent=5 // pred_region
      // Predicated region
      $region21: #{block_forward.5} parent=19 // pred_check
        %p103 = pneg %p28
      $region22: #{block_forward.5} parent=19 // pred_check_branch
        %105 = sbr.rel (%p103) target = $region24
      $region23: #{block_forward.5} parent=19 // pred_region
        %s106 = smul.u32 4, %s8
        %p107 = scmp.lt.s32.totalorder %s106, 7
        %s108 = scalar_select %p107, %s106, 7
        %s109 = smul.addr %s108, 18
        %s110 = smul.addr %s109, 4
        %s111 = scalar_lea.vmem %s0, %s110
        %s112 = smul.u32 4, %s8
      $region24: #{block_forward.5} parent=19 // pred_fallthru
        _
    $region20: #{block_forward.5} parent=5 // pred_fallthru
      _
    %p113 = scmp.le.s32.totalorder 1, %s8
    %p114 = scmp.lt.s32.totalorder %s8, 3
    %p115 = pnand %p113, %p114
    %p116 = pneg %p115
    // Predicated region
    $region25: #{block_forward.5} parent=5 // pred_check
      _
    $region26: #{block_forward.5} parent=5 // pred_check_branch
      %118 = sbr.rel (%p115) target = $region28
    $region27: #{block_forward.5} parent=5 // pred_region
      %s119 = ssub.s32 %s8, 1
      %s120 = smul.u32 4, %s13
      %p121 = scmp.lt.s32.totalorder %s120, 7
      %s122 = scalar_select %p121, %s120, 7
      %s123 = smul.addr %s122, 18
      %s124 = smul.addr %s123, 4
      %s125 = scalar_lea.vmem %s0, %s124
      %p126 = pneg %p34
      %p127 = pneg %p31
      %p128 = pneg %p55
      %p129 = pneg %p52
      %p130 = pneg %p81
      %p131 = pneg %p78
      %p132 = scmp.lt.s32.totalorder %s13, 1
      %s133 = scalar_select %p132, %s13, 1
      %s134 = smul.addr %s133, 8
      %s135 = smul.addr %s134, 8
      %s136 = scalar_lea.vmem %s2, %s135
      %s137 = smul.u32 4, %s13
      %p138 = scmp.lt.s32.totalorder %s137, 7
      %s139 = scalar_select %p138, %s137, 7
      %s140 = smul.addr %s139, 18
      %s141 = smul.addr %s140, 4
      %s142 = scalar_lea.vmem %s0, %s141
      %s143 = smul.u32 4, %s13
      %p144 = scmp.lt.s32.totalorder %s13, 1
      %s145 = scalar_select %p144, %s13, 1
      %s146 = smul.addr %s145, 8
      %s147 = smul.addr %s146, 8
      %s148 = scalar_lea.vmem %s2, %s147
      %v150 = vld [vmem:[%s142] sm:$0xf]
      %v151 = vld [vmem:[%s142 + $0x8] sm:$0xf]
      %v152 = vld [vmem:[%s142 + $0x10] sm:$0xf]
      %v153 = vld [vmem:[%s142 + $0x18] sm:$0xf]
      %v154 = vld [vmem:[%s142 + $0x20] sm:$0xf]
      %v155 = vld [vmem:[%s142 + $0x28] sm:$0xf]
      %v156 = vld [vmem:[%s142 + $0x30] sm:$0xf]
      %v157 = vld [vmem:[%s142 + $0x38] sm:$0xf]
      %v158 = vld [vmem:[%s1] sm:$0xf]
      %v159 = vld [vmem:[%s1 + $0x4] sm:$0xf]
      %s160 = scalar_lea.vmem %s142, 72
      %v161 = vld [vmem:[%s160] sm:$0xf]
      %v162 = vld [vmem:[%s160 + $0x8] sm:$0xf]
      %v163 = vld [vmem:[%s160 + $0x10] sm:$0xf]
      %v164 = vld [vmem:[%s160 + $0x18] sm:$0xf]
      %v165 = vld [vmem:[%s160 + $0x20] sm:$0xf]
      %v166 = vld [vmem:[%s160 + $0x28] sm:$0xf]
      %v167 = vld [vmem:[%s160 + $0x30] sm:$0xf]
      %v168 = vld [vmem:[%s160 + $0x38] sm:$0xf]
      %s169 = scalar_lea.vmem %s1, 8
      %v170 = vld [vmem:[%s169] sm:$0xf]
      %v171 = vld [vmem:[%s169 + $0x4] sm:$0xf]
      %v180 = vunpack.c.l.b16 %v161
      %v181 = vunpack.c.l.b16 %v162
      %v182 = vunpack.c.l.b16 %v163
      %v183 = vunpack.c.l.b16 %v164
      %v184 = vunpack.c.l.b16 %v165
      %v185 = vunpack.c.l.b16 %v166
      %v186 = vunpack.c.l.b16 %v167
      %v187 = vunpack.c.l.b16 %v168
      %v188 = vpack.c.b16 %v181, %v180
      %v189 = vpack.c.b16 %v183, %v182
      %v190 = vpack.c.b16 %v185, %v184
      %v191 = vpack.c.b16 %v187, %v186
      %v194 = vunpack.c.l.b16 %v170
      %v195 = vunpack.c.l.b16 %v171
      %v196 = vpack.c.b16 %v195, %v194
      %vm198 = vcmask 130048
      %v200 = vsel %vm198, %v188, 0
      %v203 = vsel %vm198, %v189, 0
      %v206 = vsel %vm198, %v190, 0
      %v209 = vsel %vm198, %v191, 0
      %211 = vmatprep.subr.bf16.mxu0 0
      %212 = vmatpush1.bf16.msra.mxu0 0
      %213 = vmatprep.subr.bf16.mxu0 0
      %214 = vmatpush1.bf16.msra.mxu0 0
      %215 = vmatprep.subr.bf16.mxu0 0
      %216 = vmatpush1.bf16.msra.mxu0 0
      %217 = vmatprep.subr.bf16.mxu0 0
      %218 = vmatpush1.bf16.msra.mxu0 0
      %219 = vmatprep.subr.bf16.mxu0 0
      %220 = vmatpush1.bf16.msra.mxu0 0
      %221 = vmatprep.subr.bf16.mxu0 0
      %222 = vmatpush1.bf16.msra.mxu0 0
      %223 = vmatprep.subr.bf16.mxu0 0
      %224 = vmatpush1.bf16.msra.mxu0 0
      %225 = vmatprep.subr.bf16.mxu0 0
      %226 = vmatpush1.bf16.msra.mxu0 %v196
      %227 = vmatprep.subr.bf16.mxu0 0
      %228 = vmatpush2.bf16.msra.mxu0 0
      %229 = vmatprep.subr.bf16.mxu0 0
      %230 = vmatpush2.bf16.msra.mxu0 0
      %231 = vmatprep.subr.bf16.mxu0 0
      %232 = vmatpush2.bf16.msra.mxu0 0
      %233 = vmatprep.subr.bf16.mxu0 0
      %234 = vmatpush2.bf16.msra.mxu0 0
      %235 = vmatprep.subr.bf16.mxu0 0
      %236 = vmatpush2.bf16.msra.mxu0 0
      %237 = vmatprep.subr.bf16.mxu0 0
      %238 = vmatpush2.bf16.msra.mxu0 0
      %239 = vmatprep.subr.bf16.mxu0 0
      %240 = vmatpush2.bf16.msra.mxu0 0
      %241 = vmatprep.subr.bf16.mxu0 0
      %242 = vmatpush2.bf16.msra.mxu0 0
      %243 = vmatprep.mubr.bf16.mxu0 0
      %244 = vmatmul.mubr.bf16.gmra.mxu0 %v200
      %v245 = vpop.f32.mrf.mxu0
      %v246 = vadd.f32 0.0, %v245
      %v247 = vpop.f32.mrf.mxu0
      %v248 = vpop.f32.mrf.mxu0
      %v249 = vadd.f32 0.0, %v248
      %v250 = vpop.f32.mrf.mxu0
      %251 = vmatprep.mubr.bf16.mxu0 0
      %252 = vmatmul.mubr.bf16.gmra.mxu0 %v203
      %v253 = vpop.f32.mrf.mxu0
      %v254 = vadd.f32 0.0, %v253
      %v255 = vpop.f32.mrf.mxu0
      %v256 = vpop.f32.mrf.mxu0
      %v257 = vadd.f32 0.0, %v256
      %v258 = vpop.f32.mrf.mxu0
      %259 = vmatprep.mubr.bf16.mxu0 0
      %260 = vmatmul.mubr.bf16.gmra.mxu0 %v206
      %v261 = vpop.f32.mrf.mxu0
      %v262 = vadd.f32 0.0, %v261
      %v263 = vpop.f32.mrf.mxu0
      %v264 = vpop.f32.mrf.mxu0
      %v265 = vadd.f32 0.0, %v264
      %v266 = vpop.f32.mrf.mxu0
      %267 = vmatprep.mubr.bf16.mxu0 0
      %268 = vmatmul.mubr.bf16.gmra.mxu0 %v209
      %v269 = vpop.f32.mrf.mxu0
      %v270 = vadd.f32 0.0, %v269
      %v271 = vpop.f32.mrf.mxu0
      %v272 = vpop.f32.mrf.mxu0
      %v273 = vadd.f32 0.0, %v272
      %v274 = vpop.f32.mrf.mxu0
      %275 = vdwg.mxu0
      %v284 = vunpack.c.l.b16 %v150
      %v285 = vunpack.c.l.b16 %v151
      %v286 = vunpack.c.l.b16 %v152
      %v287 = vunpack.c.l.b16 %v153
      %v288 = vunpack.c.l.b16 %v154
      %v289 = vunpack.c.l.b16 %v155
      %v290 = vunpack.c.l.b16 %v156
      %v291 = vunpack.c.l.b16 %v157
      %v292 = vpack.c.b16 %v285, %v284
      %v293 = vpack.c.b16 %v287, %v286
      %v294 = vpack.c.b16 %v289, %v288
      %v295 = vpack.c.b16 %v291, %v290
      %v298 = vunpack.c.l.b16 %v158
      %v299 = vunpack.c.l.b16 %v159
      %v300 = vpack.c.b16 %v299, %v298
      %v303 = vsel %vm198, %v292, 0
      %v306 = vsel %vm198, %v293, 0
      %v309 = vsel %vm198, %v294, 0
      %v312 = vsel %vm198, %v295, 0
      %314 = vmatprep.subr.bf16.mxu0 0
      %315 = vmatpush1.bf16.msra.mxu0 0
      %316 = vmatprep.subr.bf16.mxu0 0
      %317 = vmatpush1.bf16.msra.mxu0 0
      %318 = vmatprep.subr.bf16.mxu0 0
      %319 = vmatpush1.bf16.msra.mxu0 0
      %320 = vmatprep.subr.bf16.mxu0 0
      %321 = vmatpush1.bf16.msra.mxu0 0
      %322 = vmatprep.subr.bf16.mxu0 0
      %323 = vmatpush1.bf16.msra.mxu0 0
      %324 = vmatprep.subr.bf16.mxu0 0
      %325 = vmatpush1.bf16.msra.mxu0 0
      %326 = vmatprep.subr.bf16.mxu0 0
      %327 = vmatpush1.bf16.msra.mxu0 0
      %328 = vmatprep.subr.bf16.mxu0 0
      %329 = vmatpush1.bf16.msra.mxu0 %v300
      %330 = vmatprep.subr.bf16.mxu0 0
      %331 = vmatpush2.bf16.msra.mxu0 0
      %332 = vmatprep.subr.bf16.mxu0 0
      %333 = vmatpush2.bf16.msra.mxu0 0
      %334 = vmatprep.subr.bf16.mxu0 0
      %335 = vmatpush2.bf16.msra.mxu0 0
      %336 = vmatprep.subr.bf16.mxu0 0
      %337 = vmatpush2.bf16.msra.mxu0 0
      %338 = vmatprep.subr.bf16.mxu0 0
      %339 = vmatpush2.bf16.msra.mxu0 0
      %340 = vmatprep.subr.bf16.mxu0 0
      %341 = vmatpush2.bf16.msra.mxu0 0
      %342 = vmatprep.subr.bf16.mxu0 0
      %343 = vmatpush2.bf16.msra.mxu0 0
      %344 = vmatprep.subr.bf16.mxu0 0
      %345 = vmatpush2.bf16.msra.mxu0 0
      %346 = vmatprep.mubr.bf16.mxu0 0
      %347 = vmatmul.mubr.bf16.gmra.mxu0 %v303
      %v348 = vpop.f32.mrf.mxu0
      %v349 = vadd.f32 %v246, %v348
      %v350 = vpop.f32.mrf.mxu0
      %v351 = vpop.f32.mrf.mxu0
      %v352 = vadd.f32 %v249, %v351
      %v353 = vpop.f32.mrf.mxu0
      %354 = vmatprep.mubr.bf16.mxu0 0
      %355 = vmatmul.mubr.bf16.gmra.mxu0 %v306
      %v356 = vpop.f32.mrf.mxu0
      %v357 = vadd.f32 %v254, %v356
      %v358 = vpop.f32.mrf.mxu0
      %v359 = vpop.f32.mrf.mxu0
      %v360 = vadd.f32 %v257, %v359
      %v361 = vpop.f32.mrf.mxu0
      %362 = vmatprep.mubr.bf16.mxu0 0
      %363 = vmatmul.mubr.bf16.gmra.mxu0 %v309
      %v364 = vpop.f32.mrf.mxu0
      %v365 = vadd.f32 %v262, %v364
      %v366 = vpop.f32.mrf.mxu0
      %v367 = vpop.f32.mrf.mxu0
      %v368 = vadd.f32 %v265, %v367
      %v369 = vpop.f32.mrf.mxu0
      %370 = vmatprep.mubr.bf16.mxu0 0
      %371 = vmatmul.mubr.bf16.gmra.mxu0 %v312
      %v372 = vpop.f32.mrf.mxu0
      %v373 = vadd.f32 %v270, %v372
      %v374 = vpop.f32.mrf.mxu0
      %v375 = vpop.f32.mrf.mxu0
      %v376 = vadd.f32 %v273, %v375
      %v377 = vpop.f32.mrf.mxu0
      %378 = vdwg.mxu0
      %v379 = vld [vmem:[%s142] sm:$0xf]
      %v380 = vld [vmem:[%s142 + $0x4] sm:$0x1]
      %v381 = vld [vmem:[%s142 + $0x8] sm:$0xf]
      %v382 = vld [vmem:[%s142 + $0xc] sm:$0x1]
      %v383 = vld [vmem:[%s142 + $0x10] sm:$0xf]
      %v384 = vld [vmem:[%s142 + $0x14] sm:$0x1]
      %v385 = vld [vmem:[%s142 + $0x18] sm:$0xf]
      %v386 = vld [vmem:[%s142 + $0x1c] sm:$0x1]
      %v387 = vld [vmem:[%s142 + $0x20] sm:$0xf]
      %v388 = vld [vmem:[%s142 + $0x24] sm:$0x1]
      %v389 = vld [vmem:[%s142 + $0x28] sm:$0xf]
      %v390 = vld [vmem:[%s142 + $0x2c] sm:$0x1]
      %v391 = vld [vmem:[%s142 + $0x30] sm:$0xf]
      %v392 = vld [vmem:[%s142 + $0x34] sm:$0x1]
      %v393 = vld [vmem:[%s142 + $0x38] sm:$0xf]
      %v394 = vld [vmem:[%s142 + $0x3c] sm:$0x1]
      %vm395 = vsmask.f32 3328
      %vm396 = vsmask.f32 7440
      %vm397 = vmor %vm395, %vm396
      %v399 = vshrl.u32 %v379, 16
      %v401 = vrot.slane %v399, 4
      %v402 = vshll.u32 %v379, 16
      %v404 = vrot.slane %v402, 5
      %v405 = vor.u32 %v401, %v404
      %v406 = vrot.slane %v405, 4
      %v408 = vshll.u32 %v380, 16
      %v410 = vrot.slane %v408, 5
      %v411 = vsel %vm397, %v406, %v410
      %v413 = vshrl.u32 %v381, 16
      %v415 = vrot.slane %v413, 4
      %v416 = vshll.u32 %v381, 16
      %v418 = vrot.slane %v416, 5
      %v419 = vor.u32 %v415, %v418
      %v420 = vrot.slane %v419, 4
      %v422 = vshll.u32 %v382, 16
      %v424 = vrot.slane %v422, 5
      %v425 = vsel %vm397, %v420, %v424
      %v427 = vshrl.u32 %v383, 16
      %v429 = vrot.slane %v427, 4
      %v430 = vshll.u32 %v383, 16
      %v432 = vrot.slane %v430, 5
      %v433 = vor.u32 %v429, %v432
      %v434 = vrot.slane %v433, 4
      %v436 = vshll.u32 %v384, 16
      %v438 = vrot.slane %v436, 5
      %v439 = vsel %vm397, %v434, %v438
      %v441 = vshrl.u32 %v385, 16
      %v443 = vrot.slane %v441, 4
      %v444 = vshll.u32 %v385, 16
      %v446 = vrot.slane %v444, 5
      %v447 = vor.u32 %v443, %v446
      %v448 = vrot.slane %v447, 4
      %v450 = vshll.u32 %v386, 16
      %v452 = vrot.slane %v450, 5
      %v453 = vsel %vm397, %v448, %v452
      %v455 = vshrl.u32 %v387, 16
      %v457 = vrot.slane %v455, 4
      %v458 = vshll.u32 %v387, 16
      %v460 = vrot.slane %v458, 5
      %v461 = vor.u32 %v457, %v460
      %v462 = vrot.slane %v461, 4
      %v464 = vshll.u32 %v388, 16
      %v466 = vrot.slane %v464, 5
      %v467 = vsel %vm397, %v462, %v466
      %v469 = vshrl.u32 %v389, 16
      %v471 = vrot.slane %v469, 4
      %v472 = vshll.u32 %v389, 16
      %v474 = vrot.slane %v472, 5
      %v475 = vor.u32 %v471, %v474
      %v476 = vrot.slane %v475, 4
      %v478 = vshll.u32 %v390, 16
      %v480 = vrot.slane %v478, 5
      %v481 = vsel %vm397, %v476, %v480
      %v483 = vshrl.u32 %v391, 16
      %v485 = vrot.slane %v483, 4
      %v486 = vshll.u32 %v391, 16
      %v488 = vrot.slane %v486, 5
      %v489 = vor.u32 %v485, %v488
      %v490 = vrot.slane %v489, 4
      %v492 = vshll.u32 %v392, 16
      %v494 = vrot.slane %v492, 5
      %v495 = vsel %vm397, %v490, %v494
      %v497 = vshrl.u32 %v393, 16
      %v499 = vrot.slane %v497, 4
      %v500 = vshll.u32 %v393, 16
      %v502 = vrot.slane %v500, 5
      %v503 = vor.u32 %v499, %v502
      %v504 = vrot.slane %v503, 4
      %v506 = vshll.u32 %v394, 16
      %v508 = vrot.slane %v506, 5
      %v509 = vsel %vm397, %v504, %v508
      %s510 = scalar_lea.vmem %s1, 16
      %v511 = vld [vmem:[%s510] sm:$0xf]
      %v512 = vld [vmem:[%s510 + $0x4] sm:$0xf]
      %v513 = vunpack.c.l.b16 %v411
      %v514 = vunpack.c.l.b16 %v425
      %v515 = vunpack.c.l.b16 %v439
      %v516 = vunpack.c.l.b16 %v453
      %v517 = vunpack.c.l.b16 %v467
      %v518 = vunpack.c.l.b16 %v481
      %v519 = vunpack.c.l.b16 %v495
      %v520 = vunpack.c.l.b16 %v509
      %v521 = vpack.c.b16 %v514, %v513
      %v522 = vpack.c.b16 %v516, %v515
      %v523 = vpack.c.b16 %v518, %v517
      %v524 = vpack.c.b16 %v520, %v519
      %v527 = vunpack.c.l.b16 %v511
      %v528 = vunpack.c.l.b16 %v512
      %v529 = vpack.c.b16 %v528, %v527
      %v532 = vsel %vm198, %v521, 0
      %v535 = vsel %vm198, %v522, 0
      %v538 = vsel %vm198, %v523, 0
      %v541 = vsel %vm198, %v524, 0
      %543 = vmatprep.subr.bf16.mxu0 0
      %544 = vmatpush1.bf16.msra.mxu0 0
      %545 = vmatprep.subr.bf16.mxu0 0
      %546 = vmatpush1.bf16.msra.mxu0 0
      %547 = vmatprep.subr.bf16.mxu0 0
      %548 = vmatpush1.bf16.msra.mxu0 0
      %549 = vmatprep.subr.bf16.mxu0 0
      %550 = vmatpush1.bf16.msra.mxu0 0
      %551 = vmatprep.subr.bf16.mxu0 0
      %552 = vmatpush1.bf16.msra.mxu0 0
      %553 = vmatprep.subr.bf16.mxu0 0
      %554 = vmatpush1.bf16.msra.mxu0 0
      %555 = vmatprep.subr.bf16.mxu0 0
      %556 = vmatpush1.bf16.msra.mxu0 0
      %557 = vmatprep.subr.bf16.mxu0 0
      %558 = vmatpush1.bf16.msra.mxu0 %v529
      %559 = vmatprep.subr.bf16.mxu0 0
      %560 = vmatpush2.bf16.msra.mxu0 0
      %561 = vmatprep.subr.bf16.mxu0 0
      %562 = vmatpush2.bf16.msra.mxu0 0
      %563 = vmatprep.subr.bf16.mxu0 0
      %564 = vmatpush2.bf16.msra.mxu0 0
      %565 = vmatprep.subr.bf16.mxu0 0
      %566 = vmatpush2.bf16.msra.mxu0 0
      %567 = vmatprep.subr.bf16.mxu0 0
      %568 = vmatpush2.bf16.msra.mxu0 0
      %569 = vmatprep.subr.bf16.mxu0 0
      %570 = vmatpush2.bf16.msra.mxu0 0
      %571 = vmatprep.subr.bf16.mxu0 0
      %572 = vmatpush2.bf16.msra.mxu0 0
      %573 = vmatprep.subr.bf16.mxu0 0
      %574 = vmatpush2.bf16.msra.mxu0 0
      %575 = vmatprep.mubr.bf16.mxu0 0
      %576 = vmatmul.mubr.bf16.gmra.mxu0 %v532
      %v577 = vpop.f32.mrf.mxu0
      %v578 = vadd.f32 0.0, %v577
      %v579 = vpop.f32.mrf.mxu0
      %v580 = vpop.f32.mrf.mxu0
      %v581 = vadd.f32 0.0, %v580
      %v582 = vpop.f32.mrf.mxu0
      %583 = vmatprep.mubr.bf16.mxu0 0
      %584 = vmatmul.mubr.bf16.gmra.mxu0 %v535
      %v585 = vpop.f32.mrf.mxu0
      %v586 = vadd.f32 0.0, %v585
      %v587 = vpop.f32.mrf.mxu0
      %v588 = vpop.f32.mrf.mxu0
      %v589 = vadd.f32 0.0, %v588
      %v590 = vpop.f32.mrf.mxu0
      %591 = vmatprep.mubr.bf16.mxu0 0
      %592 = vmatmul.mubr.bf16.gmra.mxu0 %v538
      %v593 = vpop.f32.mrf.mxu0
      %v594 = vadd.f32 0.0, %v593
      %v595 = vpop.f32.mrf.mxu0
      %v596 = vpop.f32.mrf.mxu0
      %v597 = vadd.f32 0.0, %v596
      %v598 = vpop.f32.mrf.mxu0
      %599 = vmatprep.mubr.bf16.mxu0 0
      %600 = vmatmul.mubr.bf16.gmra.mxu0 %v541
      %v601 = vpop.f32.mrf.mxu0
      %v602 = vadd.f32 0.0, %v601
      %v603 = vpop.f32.mrf.mxu0
      %v604 = vpop.f32.mrf.mxu0
      %v605 = vadd.f32 0.0, %v604
      %v606 = vpop.f32.mrf.mxu0
      %607 = vdwg.mxu0
      %v608 = vadd.f32 %v349, %v578
      %v609 = vadd.f32 %v352, %v581
      %v610 = vadd.f32 %v357, %v586
      %v611 = vadd.f32 %v360, %v589
      %v612 = vadd.f32 %v365, %v594
      %v613 = vadd.f32 %v368, %v597
      %v614 = vadd.f32 %v373, %v602
      %v615 = vadd.f32 %v376, %v605
      %s616 = scalar_lea.vmem %s142, 144
      %v617 = vld [vmem:[%s616] sm:$0xf]
      %v618 = vld [vmem:[%s616 + $0x8] sm:$0xf]
      %v619 = vld [vmem:[%s616 + $0x10] sm:$0xf]
      %v620 = vld [vmem:[%s616 + $0x18] sm:$0xf]
      %v621 = vld [vmem:[%s616 + $0x20] sm:$0xf]
      %v622 = vld [vmem:[%s616 + $0x28] sm:$0xf]
      %v623 = vld [vmem:[%s616 + $0x30] sm:$0xf]
      %v624 = vld [vmem:[%s616 + $0x38] sm:$0xf]
      %s625 = scalar_lea.vmem %s1, 24
      %v626 = vld [vmem:[%s625] sm:$0xf]
      %v627 = vld [vmem:[%s625 + $0x4] sm:$0xf]
      %v636 = vunpack.c.l.b16 %v617
      %v637 = vunpack.c.l.b16 %v618
      %v638 = vunpack.c.l.b16 %v619
      %v639 = vunpack.c.l.b16 %v620
      %v640 = vunpack.c.l.b16 %v621
      %v641 = vunpack.c.l.b16 %v622
      %v642 = vunpack.c.l.b16 %v623
      %v643 = vunpack.c.l.b16 %v624
      %v644 = vpack.c.b16 %v637, %v636
      %v645 = vpack.c.b16 %v639, %v638
      %v646 = vpack.c.b16 %v641, %v640
      %v647 = vpack.c.b16 %v643, %v642
      %v650 = vunpack.c.l.b16 %v626
      %v651 = vunpack.c.l.b16 %v627
      %v652 = vpack.c.b16 %v651, %v650
      %v655 = vsel %vm198, %v644, 0
      %v658 = vsel %vm198, %v645, 0
      %v661 = vsel %vm198, %v646, 0
      %v664 = vsel %vm198, %v647, 0
      %666 = vmatprep.subr.bf16.mxu0 0
      %667 = vmatpush1.bf16.msra.mxu0 0
      %668 = vmatprep.subr.bf16.mxu0 0
      %669 = vmatpush1.bf16.msra.mxu0 0
      %670 = vmatprep.subr.bf16.mxu0 0
      %671 = vmatpush1.bf16.msra.mxu0 0
      %672 = vmatprep.subr.bf16.mxu0 0
      %673 = vmatpush1.bf16.msra.mxu0 0
      %674 = vmatprep.subr.bf16.mxu0 0
      %675 = vmatpush1.bf16.msra.mxu0 0
      %676 = vmatprep.subr.bf16.mxu0 0
      %677 = vmatpush1.bf16.msra.mxu0 0
      %678 = vmatprep.subr.bf16.mxu0 0
      %679 = vmatpush1.bf16.msra.mxu0 0
      %680 = vmatprep.subr.bf16.mxu0 0
      %681 = vmatpush1.bf16.msra.mxu0 %v652
      %682 = vmatprep.subr.bf16.mxu0 0
      %683 = vmatpush2.bf16.msra.mxu0 0
      %684 = vmatprep.subr.bf16.mxu0 0
      %685 = vmatpush2.bf16.msra.mxu0 0
      %686 = vmatprep.subr.bf16.mxu0 0
      %687 = vmatpush2.bf16.msra.mxu0 0
      %688 = vmatprep.subr.bf16.mxu0 0
      %689 = vmatpush2.bf16.msra.mxu0 0
      %690 = vmatprep.subr.bf16.mxu0 0
      %691 = vmatpush2.bf16.msra.mxu0 0
      %692 = vmatprep.subr.bf16.mxu0 0
      %693 = vmatpush2.bf16.msra.mxu0 0
      %694 = vmatprep.subr.bf16.mxu0 0
      %695 = vmatpush2.bf16.msra.mxu0 0
      %696 = vmatprep.subr.bf16.mxu0 0
      %697 = vmatpush2.bf16.msra.mxu0 0
      %698 = vmatprep.mubr.bf16.mxu0 0
      %699 = vmatmul.mubr.bf16.gmra.mxu0 %v655
      %v700 = vpop.f32.mrf.mxu0
      %v701 = vadd.f32 0.0, %v700
      %v702 = vpop.f32.mrf.mxu0
      %v703 = vpop.f32.mrf.mxu0
      %v704 = vadd.f32 0.0, %v703
      %v705 = vpop.f32.mrf.mxu0
      %706 = vmatprep.mubr.bf16.mxu0 0
      %707 = vmatmul.mubr.bf16.gmra.mxu0 %v658
      %v708 = vpop.f32.mrf.mxu0
      %v709 = vadd.f32 0.0, %v708
      %v710 = vpop.f32.mrf.mxu0
      %v711 = vpop.f32.mrf.mxu0
      %v712 = vadd.f32 0.0, %v711
      %v713 = vpop.f32.mrf.mxu0
      %714 = vmatprep.mubr.bf16.mxu0 0
      %715 = vmatmul.mubr.bf16.gmra.mxu0 %v661
      %v716 = vpop.f32.mrf.mxu0
      %v717 = vadd.f32 0.0, %v716
      %v718 = vpop.f32.mrf.mxu0
      %v719 = vpop.f32.mrf.mxu0
      %v720 = vadd.f32 0.0, %v719
      %v721 = vpop.f32.mrf.mxu0
      %722 = vmatprep.mubr.bf16.mxu0 0
      %723 = vmatmul.mubr.bf16.gmra.mxu0 %v664
      %v724 = vpop.f32.mrf.mxu0
      %v725 = vadd.f32 0.0, %v724
      %v726 = vpop.f32.mrf.mxu0
      %v727 = vpop.f32.mrf.mxu0
      %v728 = vadd.f32 0.0, %v727
      %v729 = vpop.f32.mrf.mxu0
      %730 = vdwg.mxu0
      %v731 = vadd.f32 %v608, %v701
      %v732 = vadd.f32 %v609, %v704
      %v733 = vadd.f32 %v610, %v709
      %v734 = vadd.f32 %v611, %v712
      %v735 = vadd.f32 %v612, %v717
      %v736 = vadd.f32 %v613, %v720
      %v737 = vadd.f32 %v614, %v725
      %v738 = vadd.f32 %v615, %v728
      %s739 = scalar_lea.vmem %s142, 216
      %v740 = vld [vmem:[%s739] sm:$0xf]
      %v741 = vld [vmem:[%s739 + $0x8] sm:$0xf]
      %v742 = vld [vmem:[%s739 + $0x10] sm:$0xf]
      %v743 = vld [vmem:[%s739 + $0x18] sm:$0xf]
      %v744 = vld [vmem:[%s739 + $0x20] sm:$0xf]
      %v745 = vld [vmem:[%s739 + $0x28] sm:$0xf]
      %v746 = vld [vmem:[%s739 + $0x30] sm:$0xf]
      %v747 = vld [vmem:[%s739 + $0x38] sm:$0xf]
      %s748 = scalar_lea.vmem %s1, 32
      %v749 = vld [vmem:[%s748] sm:$0xf]
      %v750 = vld [vmem:[%s748 + $0x4] sm:$0xf]
      %v759 = vunpack.c.l.b16 %v740
      %v760 = vunpack.c.l.b16 %v741
      %v761 = vunpack.c.l.b16 %v742
      %v762 = vunpack.c.l.b16 %v743
      %v763 = vunpack.c.l.b16 %v744
      %v764 = vunpack.c.l.b16 %v745
      %v765 = vunpack.c.l.b16 %v746
      %v766 = vunpack.c.l.b16 %v747
      %v767 = vpack.c.b16 %v760, %v759
      %v768 = vpack.c.b16 %v762, %v761
      %v769 = vpack.c.b16 %v764, %v763
      %v770 = vpack.c.b16 %v766, %v765
      %v773 = vunpack.c.l.b16 %v749
      %v774 = vunpack.c.l.b16 %v750
      %v775 = vpack.c.b16 %v774, %v773
      %v778 = vsel %vm198, %v767, 0
      %v781 = vsel %vm198, %v768, 0
      %v784 = vsel %vm198, %v769, 0
      %v787 = vsel %vm198, %v770, 0
      %789 = vmatprep.subr.bf16.mxu0 0
      %790 = vmatpush1.bf16.msra.mxu0 0
      %791 = vmatprep.subr.bf16.mxu0 0
      %792 = vmatpush1.bf16.msra.mxu0 0
      %793 = vmatprep.subr.bf16.mxu0 0
      %794 = vmatpush1.bf16.msra.mxu0 0
      %795 = vmatprep.subr.bf16.mxu0 0
      %796 = vmatpush1.bf16.msra.mxu0 0
      %797 = vmatprep.subr.bf16.mxu0 0
      %798 = vmatpush1.bf16.msra.mxu0 0
      %799 = vmatprep.subr.bf16.mxu0 0
      %800 = vmatpush1.bf16.msra.mxu0 0
      %801 = vmatprep.subr.bf16.mxu0 0
      %802 = vmatpush1.bf16.msra.mxu0 0
      %803 = vmatprep.subr.bf16.mxu0 0
      %804 = vmatpush1.bf16.msra.mxu0 %v775
      %805 = vmatprep.subr.bf16.mxu0 0
      %806 = vmatpush2.bf16.msra.mxu0 0
      %807 = vmatprep.subr.bf16.mxu0 0
      %808 = vmatpush2.bf16.msra.mxu0 0
      %809 = vmatprep.subr.bf16.mxu0 0
      %810 = vmatpush2.bf16.msra.mxu0 0
      %811 = vmatprep.subr.bf16.mxu0 0
      %812 = vmatpush2.bf16.msra.mxu0 0
      %813 = vmatprep.subr.bf16.mxu0 0
      %814 = vmatpush2.bf16.msra.mxu0 0
      %815 = vmatprep.subr.bf16.mxu0 0
      %816 = vmatpush2.bf16.msra.mxu0 0
      %817 = vmatprep.subr.bf16.mxu0 0
      %818 = vmatpush2.bf16.msra.mxu0 0
      %819 = vmatprep.subr.bf16.mxu0 0
      %820 = vmatpush2.bf16.msra.mxu0 0
      %821 = vmatprep.mubr.bf16.mxu0 0
      %822 = vmatmul.mubr.bf16.gmra.mxu0 %v778
      %v823 = vpop.f32.mrf.mxu0
      %v824 = vadd.f32 0.0, %v823
      %v825 = vpop.f32.mrf.mxu0
      %v826 = vpop.f32.mrf.mxu0
      %v827 = vadd.f32 0.0, %v826
      %v828 = vpop.f32.mrf.mxu0
      %829 = vmatprep.mubr.bf16.mxu0 0
      %830 = vmatmul.mubr.bf16.gmra.mxu0 %v781
      %v831 = vpop.f32.mrf.mxu0
      %v832 = vadd.f32 0.0, %v831
      %v833 = vpop.f32.mrf.mxu0
      %v834 = vpop.f32.mrf.mxu0
      %v835 = vadd.f32 0.0, %v834
      %v836 = vpop.f32.mrf.mxu0
      %837 = vmatprep.mubr.bf16.mxu0 0
      %838 = vmatmul.mubr.bf16.gmra.mxu0 %v784
      %v839 = vpop.f32.mrf.mxu0
      %v840 = vadd.f32 0.0, %v839
      %v841 = vpop.f32.mrf.mxu0
      %v842 = vpop.f32.mrf.mxu0
      %v843 = vadd.f32 0.0, %v842
      %v844 = vpop.f32.mrf.mxu0
      %845 = vmatprep.mubr.bf16.mxu0 0
      %846 = vmatmul.mubr.bf16.gmra.mxu0 %v787
      %v847 = vpop.f32.mrf.mxu0
      %v848 = vadd.f32 0.0, %v847
      %v849 = vpop.f32.mrf.mxu0
      %v850 = vpop.f32.mrf.mxu0
      %v851 = vadd.f32 0.0, %v850
      %v852 = vpop.f32.mrf.mxu0
      %853 = vdwg.mxu0
      %v854 = vadd.f32 %v731, %v824
      %v855 = vadd.f32 %v732, %v827
      %v856 = vadd.f32 %v733, %v832
      %v857 = vadd.f32 %v734, %v835
      %v858 = vadd.f32 %v735, %v840
      %v859 = vadd.f32 %v736, %v843
      %v860 = vadd.f32 %v737, %v848
      %v861 = vadd.f32 %v738, %v851
      %v862 = vld [vmem:[%s616] sm:$0xf]
      %v863 = vld [vmem:[%s616 + $0x4] sm:$0x1]
      %v864 = vld [vmem:[%s616 + $0x8] sm:$0xf]
      %v865 = vld [vmem:[%s616 + $0xc] sm:$0x1]
      %v866 = vld [vmem:[%s616 + $0x10] sm:$0xf]
      %v867 = vld [vmem:[%s616 + $0x14] sm:$0x1]
      %v868 = vld [vmem:[%s616 + $0x18] sm:$0xf]
      %v869 = vld [vmem:[%s616 + $0x1c] sm:$0x1]
      %v870 = vld [vmem:[%s616 + $0x20] sm:$0xf]
      %v871 = vld [vmem:[%s616 + $0x24] sm:$0x1]
      %v872 = vld [vmem:[%s616 + $0x28] sm:$0xf]
      %v873 = vld [vmem:[%s616 + $0x2c] sm:$0x1]
      %v874 = vld [vmem:[%s616 + $0x30] sm:$0xf]
      %v875 = vld [vmem:[%s616 + $0x34] sm:$0x1]
      %v876 = vld [vmem:[%s616 + $0x38] sm:$0xf]
      %v877 = vld [vmem:[%s616 + $0x3c] sm:$0x1]
      %v879 = vshrl.u32 %v862, 16
      %v881 = vrot.slane %v879, 4
      %v882 = vshll.u32 %v862, 16
      %v884 = vrot.slane %v882, 5
      %v885 = vor.u32 %v881, %v884
      %v886 = vrot.slane %v885, 4
      %v888 = vshll.u32 %v863, 16
      %v890 = vrot.slane %v888, 5
      %v891 = vsel %vm397, %v886, %v890
      %v893 = vshrl.u32 %v864, 16
      %v895 = vrot.slane %v893, 4
      %v896 = vshll.u32 %v864, 16
      %v898 = vrot.slane %v896, 5
      %v899 = vor.u32 %v895, %v898
      %v900 = vrot.slane %v899, 4
      %v902 = vshll.u32 %v865, 16
      %v904 = vrot.slane %v902, 5
      %v905 = vsel %vm397, %v900, %v904
      %v907 = vshrl.u32 %v866, 16
      %v909 = vrot.slane %v907, 4
      %v910 = vshll.u32 %v866, 16
      %v912 = vrot.slane %v910, 5
      %v913 = vor.u32 %v909, %v912
      %v914 = vrot.slane %v913, 4
      %v916 = vshll.u32 %v867, 16
      %v918 = vrot.slane %v916, 5
      %v919 = vsel %vm397, %v914, %v918
      %v921 = vshrl.u32 %v868, 16
      %v923 = vrot.slane %v921, 4
      %v924 = vshll.u32 %v868, 16
      %v926 = vrot.slane %v924, 5
      %v927 = vor.u32 %v923, %v926
      %v928 = vrot.slane %v927, 4
      %v930 = vshll.u32 %v869, 16
      %v932 = vrot.slane %v930, 5
      %v933 = vsel %vm397, %v928, %v932
      %v935 = vshrl.u32 %v870, 16
      %v937 = vrot.slane %v935, 4
      %v938 = vshll.u32 %v870, 16
      %v940 = vrot.slane %v938, 5
      %v941 = vor.u32 %v937, %v940
      %v942 = vrot.slane %v941, 4
      %v944 = vshll.u32 %v871, 16
      %v946 = vrot.slane %v944, 5
      %v947 = vsel %vm397, %v942, %v946
      %v949 = vshrl.u32 %v872, 16
      %v951 = vrot.slane %v949, 4
      %v952 = vshll.u32 %v872, 16
      %v954 = vrot.slane %v952, 5
      %v955 = vor.u32 %v951, %v954
      %v956 = vrot.slane %v955, 4
      %v958 = vshll.u32 %v873, 16
      %v960 = vrot.slane %v958, 5
      %v961 = vsel %vm397, %v956, %v960
      %v963 = vshrl.u32 %v874, 16
      %v965 = vrot.slane %v963, 4
      %v966 = vshll.u32 %v874, 16
      %v968 = vrot.slane %v966, 5
      %v969 = vor.u32 %v965, %v968
      %v970 = vrot.slane %v969, 4
      %v972 = vshll.u32 %v875, 16
      %v974 = vrot.slane %v972, 5
      %v975 = vsel %vm397, %v970, %v974
      %v977 = vshrl.u32 %v876, 16
      %v979 = vrot.slane %v977, 4
      %v980 = vshll.u32 %v876, 16
      %v982 = vrot.slane %v980, 5
      %v983 = vor.u32 %v979, %v982
      %v984 = vrot.slane %v983, 4
      %v986 = vshll.u32 %v877, 16
      %v988 = vrot.slane %v986, 5
      %v989 = vsel %vm397, %v984, %v988
      %s990 = scalar_lea.vmem %s1, 40
      %v991 = vld [vmem:[%s990] sm:$0xf]
      %v992 = vld [vmem:[%s990 + $0x4] sm:$0xf]
      %v993 = vunpack.c.l.b16 %v891
      %v994 = vunpack.c.l.b16 %v905
      %v995 = vunpack.c.l.b16 %v919
      %v996 = vunpack.c.l.b16 %v933
      %v997 = vunpack.c.l.b16 %v947
      %v998 = vunpack.c.l.b16 %v961
      %v999 = vunpack.c.l.b16 %v975
      %v1000 = vunpack.c.l.b16 %v989
      %v1001 = vpack.c.b16 %v994, %v993
      %v1002 = vpack.c.b16 %v996, %v995
      %v1003 = vpack.c.b16 %v998, %v997
      %v1004 = vpack.c.b16 %v1000, %v999
      %v1007 = vunpack.c.l.b16 %v991
      %v1008 = vunpack.c.l.b16 %v992
      %v1009 = vpack.c.b16 %v1008, %v1007
      %v1012 = vsel %vm198, %v1001, 0
      %v1015 = vsel %vm198, %v1002, 0
      %v1018 = vsel %vm198, %v1003, 0
      %v1021 = vsel %vm198, %v1004, 0
      %1023 = vmatprep.subr.bf16.mxu0 0
      %1024 = vmatpush1.bf16.msra.mxu0 0
      %1025 = vmatprep.subr.bf16.mxu0 0
      %1026 = vmatpush1.bf16.msra.mxu0 0
      %1027 = vmatprep.subr.bf16.mxu0 0
      %1028 = vmatpush1.bf16.msra.mxu0 0
      %1029 = vmatprep.subr.bf16.mxu0 0
      %1030 = vmatpush1.bf16.msra.mxu0 0
      %1031 = vmatprep.subr.bf16.mxu0 0
      %1032 = vmatpush1.bf16.msra.mxu0 0
      %1033 = vmatprep.subr.bf16.mxu0 0
      %1034 = vmatpush1.bf16.msra.mxu0 0
      %1035 = vmatprep.subr.bf16.mxu0 0
      %1036 = vmatpush1.bf16.msra.mxu0 0
      %1037 = vmatprep.subr.bf16.mxu0 0
      %1038 = vmatpush1.bf16.msra.mxu0 %v1009
      %1039 = vmatprep.subr.bf16.mxu0 0
      %1040 = vmatpush2.bf16.msra.mxu0 0
      %1041 = vmatprep.subr.bf16.mxu0 0
      %1042 = vmatpush2.bf16.msra.mxu0 0
      %1043 = vmatprep.subr.bf16.mxu0 0
      %1044 = vmatpush2.bf16.msra.mxu0 0
      %1045 = vmatprep.subr.bf16.mxu0 0
      %1046 = vmatpush2.bf16.msra.mxu0 0
      %1047 = vmatprep.subr.bf16.mxu0 0
      %1048 = vmatpush2.bf16.msra.mxu0 0
      %1049 = vmatprep.subr.bf16.mxu0 0
      %1050 = vmatpush2.bf16.msra.mxu0 0
      %1051 = vmatprep.subr.bf16.mxu0 0
      %1052 = vmatpush2.bf16.msra.mxu0 0
      %1053 = vmatprep.subr.bf16.mxu0 0
      %1054 = vmatpush2.bf16.msra.mxu0 0
      %1055 = vmatprep.mubr.bf16.mxu0 0
      %1056 = vmatmul.mubr.bf16.gmra.mxu0 %v1012
      %v1057 = vpop.f32.mrf.mxu0
      %v1058 = vadd.f32 0.0, %v1057
      %v1059 = vpop.f32.mrf.mxu0
      %v1060 = vpop.f32.mrf.mxu0
      %v1061 = vadd.f32 0.0, %v1060
      %v1062 = vpop.f32.mrf.mxu0
      %1063 = vmatprep.mubr.bf16.mxu0 0
      %1064 = vmatmul.mubr.bf16.gmra.mxu0 %v1015
      %v1065 = vpop.f32.mrf.mxu0
      %v1066 = vadd.f32 0.0, %v1065
      %v1067 = vpop.f32.mrf.mxu0
      %v1068 = vpop.f32.mrf.mxu0
      %v1069 = vadd.f32 0.0, %v1068
      %v1070 = vpop.f32.mrf.mxu0
      %1071 = vmatprep.mubr.bf16.mxu0 0
      %1072 = vmatmul.mubr.bf16.gmra.mxu0 %v1018
      %v1073 = vpop.f32.mrf.mxu0
      %v1074 = vadd.f32 0.0, %v1073
      %v1075 = vpop.f32.mrf.mxu0
      %v1076 = vpop.f32.mrf.mxu0
      %v1077 = vadd.f32 0.0, %v1076
      %v1078 = vpop.f32.mrf.mxu0
      %1079 = vmatprep.mubr.bf16.mxu0 0
      %1080 = vmatmul.mubr.bf16.gmra.mxu0 %v1021
      %v1081 = vpop.f32.mrf.mxu0
      %v1082 = vadd.f32 0.0, %v1081
      %v1083 = vpop.f32.mrf.mxu0
      %v1084 = vpop.f32.mrf.mxu0
      %v1085 = vadd.f32 0.0, %v1084
      %v1086 = vpop.f32.mrf.mxu0
      %1087 = vdwg.mxu0
      %v1088 = vadd.f32 %v854, %v1058
      %v1089 = vadd.f32 %v855, %v1061
      %v1090 = vadd.f32 %v856, %v1066
      %v1091 = vadd.f32 %v857, %v1069
      %v1092 = vadd.f32 %v858, %v1074
      %v1093 = vadd.f32 %v859, %v1077
      %v1094 = vadd.f32 %v860, %v1082
      %v1095 = vadd.f32 %v861, %v1085
      %s1096 = scalar_lea.vmem %s142, 8
      %v1097 = vld [vmem:[%s1096] sm:$0xf]
      %v1098 = vld [vmem:[%s1096 + $0x8] sm:$0xf]
      %v1099 = vld [vmem:[%s1096 + $0x10] sm:$0xf]
      %v1100 = vld [vmem:[%s1096 + $0x18] sm:$0xf]
      %v1101 = vld [vmem:[%s1096 + $0x20] sm:$0xf]
      %v1102 = vld [vmem:[%s1096 + $0x28] sm:$0xf]
      %v1103 = vld [vmem:[%s1096 + $0x30] sm:$0xf]
      %v1104 = vld [vmem:[%s1096 + $0x38] sm:$0xf]
      %s1105 = scalar_lea.vmem %s1, 48
      %v1106 = vld [vmem:[%s1105] sm:$0xf]
      %v1107 = vld [vmem:[%s1105 + $0x4] sm:$0xf]
      %v1116 = vunpack.c.l.b16 %v1097
      %v1117 = vunpack.c.l.b16 %v1098
      %v1118 = vunpack.c.l.b16 %v1099
      %v1119 = vunpack.c.l.b16 %v1100
      %v1120 = vunpack.c.l.b16 %v1101
      %v1121 = vunpack.c.l.b16 %v1102
      %v1122 = vunpack.c.l.b16 %v1103
      %v1123 = vunpack.c.l.b16 %v1104
      %v1124 = vpack.c.b16 %v1117, %v1116
      %v1125 = vpack.c.b16 %v1119, %v1118
      %v1126 = vpack.c.b16 %v1121, %v1120
      %v1127 = vpack.c.b16 %v1123, %v1122
      %v1130 = vunpack.c.l.b16 %v1106
      %v1131 = vunpack.c.l.b16 %v1107
      %v1132 = vpack.c.b16 %v1131, %v1130
      %v1135 = vsel %vm198, %v1124, 0
      %v1138 = vsel %vm198, %v1125, 0
      %v1141 = vsel %vm198, %v1126, 0
      %v1144 = vsel %vm198, %v1127, 0
      %1146 = vmatprep.subr.bf16.mxu0 0
      %1147 = vmatpush1.bf16.msra.mxu0 0
      %1148 = vmatprep.subr.bf16.mxu0 0
      %1149 = vmatpush1.bf16.msra.mxu0 0
      %1150 = vmatprep.subr.bf16.mxu0 0
      %1151 = vmatpush1.bf16.msra.mxu0 0
      %1152 = vmatprep.subr.bf16.mxu0 0
      %1153 = vmatpush1.bf16.msra.mxu0 0
      %1154 = vmatprep.subr.bf16.mxu0 0
      %1155 = vmatpush1.bf16.msra.mxu0 0
      %1156 = vmatprep.subr.bf16.mxu0 0
      %1157 = vmatpush1.bf16.msra.mxu0 0
      %1158 = vmatprep.subr.bf16.mxu0 0
      %1159 = vmatpush1.bf16.msra.mxu0 0
      %1160 = vmatprep.subr.bf16.mxu0 0
      %1161 = vmatpush1.bf16.msra.mxu0 %v1132
      %1162 = vmatprep.subr.bf16.mxu0 0
      %1163 = vmatpush2.bf16.msra.mxu0 0
      %1164 = vmatprep.subr.bf16.mxu0 0
      %1165 = vmatpush2.bf16.msra.mxu0 0
      %1166 = vmatprep.subr.bf16.mxu0 0
      %1167 = vmatpush2.bf16.msra.mxu0 0
      %1168 = vmatprep.subr.bf16.mxu0 0
      %1169 = vmatpush2.bf16.msra.mxu0 0
      %1170 = vmatprep.subr.bf16.mxu0 0
      %1171 = vmatpush2.bf16.msra.mxu0 0
      %1172 = vmatprep.subr.bf16.mxu0 0
      %1173 = vmatpush2.bf16.msra.mxu0 0
      %1174 = vmatprep.subr.bf16.mxu0 0
      %1175 = vmatpush2.bf16.msra.mxu0 0
      %1176 = vmatprep.subr.bf16.mxu0 0
      %1177 = vmatpush2.bf16.msra.mxu0 0
      %1178 = vmatprep.mubr.bf16.mxu0 0
      %1179 = vmatmul.mubr.bf16.gmra.mxu0 %v1135
      %v1180 = vpop.f32.mrf.mxu0
      %v1181 = vadd.f32 0.0, %v1180
      %v1182 = vpop.f32.mrf.mxu0
      %v1183 = vpop.f32.mrf.mxu0
      %v1184 = vadd.f32 0.0, %v1183
      %v1185 = vpop.f32.mrf.mxu0
      %1186 = vmatprep.mubr.bf16.mxu0 0
      %1187 = vmatmul.mubr.bf16.gmra.mxu0 %v1138
      %v1188 = vpop.f32.mrf.mxu0
      %v1189 = vadd.f32 0.0, %v1188
      %v1190 = vpop.f32.mrf.mxu0
      %v1191 = vpop.f32.mrf.mxu0
      %v1192 = vadd.f32 0.0, %v1191
      %v1193 = vpop.f32.mrf.mxu0
      %1194 = vmatprep.mubr.bf16.mxu0 0
      %1195 = vmatmul.mubr.bf16.gmra.mxu0 %v1141
      %v1196 = vpop.f32.mrf.mxu0
      %v1197 = vadd.f32 0.0, %v1196
      %v1198 = vpop.f32.mrf.mxu0
      %v1199 = vpop.f32.mrf.mxu0
      %v1200 = vadd.f32 0.0, %v1199
      %v1201 = vpop.f32.mrf.mxu0
      %1202 = vmatprep.mubr.bf16.mxu0 0
      %1203 = vmatmul.mubr.bf16.gmra.mxu0 %v1144
      %v1204 = vpop.f32.mrf.mxu0
      %v1205 = vadd.f32 0.0, %v1204
      %v1206 = vpop.f32.mrf.mxu0
      %v1207 = vpop.f32.mrf.mxu0
      %v1208 = vadd.f32 0.0, %v1207
      %v1209 = vpop.f32.mrf.mxu0
      %1210 = vdwg.mxu0
      %v1211 = vadd.f32 %v1088, %v1181
      %v1212 = vadd.f32 %v1089, %v1184
      %v1213 = vadd.f32 %v1090, %v1189
      %v1214 = vadd.f32 %v1091, %v1192
      %v1215 = vadd.f32 %v1092, %v1197
      %v1216 = vadd.f32 %v1093, %v1200
      %v1217 = vadd.f32 %v1094, %v1205
      %v1218 = vadd.f32 %v1095, %v1208
      %s1219 = scalar_lea.vmem %s142, 80
      %v1220 = vld [vmem:[%s1219] sm:$0xf]
      %v1221 = vld [vmem:[%s1219 + $0x8] sm:$0xf]
      %v1222 = vld [vmem:[%s1219 + $0x10] sm:$0xf]
      %v1223 = vld [vmem:[%s1219 + $0x18] sm:$0xf]
      %v1224 = vld [vmem:[%s1219 + $0x20] sm:$0xf]
      %v1225 = vld [vmem:[%s1219 + $0x28] sm:$0xf]
      %v1226 = vld [vmem:[%s1219 + $0x30] sm:$0xf]
      %v1227 = vld [vmem:[%s1219 + $0x38] sm:$0xf]
      %s1228 = scalar_lea.vmem %s1, 56
      %v1229 = vld [vmem:[%s1228] sm:$0xf]
      %v1230 = vld [vmem:[%s1228 + $0x4] sm:$0xf]
      %v1239 = vunpack.c.l.b16 %v1220
      %v1240 = vunpack.c.l.b16 %v1221
      %v1241 = vunpack.c.l.b16 %v1222
      %v1242 = vunpack.c.l.b16 %v1223
      %v1243 = vunpack.c.l.b16 %v1224
      %v1244 = vunpack.c.l.b16 %v1225
      %v1245 = vunpack.c.l.b16 %v1226
      %v1246 = vunpack.c.l.b16 %v1227
      %v1247 = vpack.c.b16 %v1240, %v1239
      %v1248 = vpack.c.b16 %v1242, %v1241
      %v1249 = vpack.c.b16 %v1244, %v1243
      %v1250 = vpack.c.b16 %v1246, %v1245
      %v1253 = vunpack.c.l.b16 %v1229
      %v1254 = vunpack.c.l.b16 %v1230
      %v1255 = vpack.c.b16 %v1254, %v1253
      %v1258 = vsel %vm198, %v1247, 0
      %v1261 = vsel %vm198, %v1248, 0
      %v1264 = vsel %vm198, %v1249, 0
      %v1267 = vsel %vm198, %v1250, 0
      %1269 = vmatprep.subr.bf16.mxu0 0
      %1270 = vmatpush1.bf16.msra.mxu0 0
      %1271 = vmatprep.subr.bf16.mxu0 0
      %1272 = vmatpush1.bf16.msra.mxu0 0
      %1273 = vmatprep.subr.bf16.mxu0 0
      %1274 = vmatpush1.bf16.msra.mxu0 0
      %1275 = vmatprep.subr.bf16.mxu0 0
      %1276 = vmatpush1.bf16.msra.mxu0 0
      %1277 = vmatprep.subr.bf16.mxu0 0
      %1278 = vmatpush1.bf16.msra.mxu0 0
      %1279 = vmatprep.subr.bf16.mxu0 0
      %1280 = vmatpush1.bf16.msra.mxu0 0
      %1281 = vmatprep.subr.bf16.mxu0 0
      %1282 = vmatpush1.bf16.msra.mxu0 0
      %1283 = vmatprep.subr.bf16.mxu0 0
      %1284 = vmatpush1.bf16.msra.mxu0 %v1255
      %1285 = vmatprep.subr.bf16.mxu0 0
      %1286 = vmatpush2.bf16.msra.mxu0 0
      %1287 = vmatprep.subr.bf16.mxu0 0
      %1288 = vmatpush2.bf16.msra.mxu0 0
      %1289 = vmatprep.subr.bf16.mxu0 0
      %1290 = vmatpush2.bf16.msra.mxu0 0
      %1291 = vmatprep.subr.bf16.mxu0 0
      %1292 = vmatpush2.bf16.msra.mxu0 0
      %1293 = vmatprep.subr.bf16.mxu0 0
      %1294 = vmatpush2.bf16.msra.mxu0 0
      %1295 = vmatprep.subr.bf16.mxu0 0
      %1296 = vmatpush2.bf16.msra.mxu0 0
      %1297 = vmatprep.subr.bf16.mxu0 0
      %1298 = vmatpush2.bf16.msra.mxu0 0
      %1299 = vmatprep.subr.bf16.mxu0 0
      %1300 = vmatpush2.bf16.msra.mxu0 0
      %1301 = vmatprep.mubr.bf16.mxu0 0
      %1302 = vmatmul.mubr.bf16.gmra.mxu0 %v1258
      %v1303 = vpop.f32.mrf.mxu0
      %v1304 = vadd.f32 0.0, %v1303
      %v1305 = vpop.f32.mrf.mxu0
      %v1306 = vpop.f32.mrf.mxu0
      %v1307 = vadd.f32 0.0, %v1306
      %v1308 = vpop.f32.mrf.mxu0
      %1309 = vmatprep.mubr.bf16.mxu0 0
      %1310 = vmatmul.mubr.bf16.gmra.mxu0 %v1261
      %v1311 = vpop.f32.mrf.mxu0
      %v1312 = vadd.f32 0.0, %v1311
      %v1313 = vpop.f32.mrf.mxu0
      %v1314 = vpop.f32.mrf.mxu0
      %v1315 = vadd.f32 0.0, %v1314
      %v1316 = vpop.f32.mrf.mxu0
      %1317 = vmatprep.mubr.bf16.mxu0 0
      %1318 = vmatmul.mubr.bf16.gmra.mxu0 %v1264
      %v1319 = vpop.f32.mrf.mxu0
      %v1320 = vadd.f32 0.0, %v1319
      %v1321 = vpop.f32.mrf.mxu0
      %v1322 = vpop.f32.mrf.mxu0
      %v1323 = vadd.f32 0.0, %v1322
      %v1324 = vpop.f32.mrf.mxu0
      %1325 = vmatprep.mubr.bf16.mxu0 0
      %1326 = vmatmul.mubr.bf16.gmra.mxu0 %v1267
      %v1327 = vpop.f32.mrf.mxu0
      %v1328 = vadd.f32 0.0, %v1327
      %v1329 = vpop.f32.mrf.mxu0
      %v1330 = vpop.f32.mrf.mxu0
      %v1331 = vadd.f32 0.0, %v1330
      %v1332 = vpop.f32.mrf.mxu0
      %1333 = vdwg.mxu0
      %v1334 = vadd.f32 %v1211, %v1304
      %v1335 = vadd.f32 %v1212, %v1307
      %v1336 = vadd.f32 %v1213, %v1312
      %v1337 = vadd.f32 %v1214, %v1315
      %v1338 = vadd.f32 %v1215, %v1320
      %v1339 = vadd.f32 %v1216, %v1323
      %v1340 = vadd.f32 %v1217, %v1328
      %v1341 = vadd.f32 %v1218, %v1331
      %v1342 = vld [vmem:[%s1096] sm:$0xf]
      %v1343 = vld [vmem:[%s1096 + $0x4] sm:$0x1]
      %v1344 = vld [vmem:[%s1096 + $0x8] sm:$0xf]
      %v1345 = vld [vmem:[%s1096 + $0xc] sm:$0x1]
      %v1346 = vld [vmem:[%s1096 + $0x10] sm:$0xf]
      %v1347 = vld [vmem:[%s1096 + $0x14] sm:$0x1]
      %v1348 = vld [vmem:[%s1096 + $0x18] sm:$0xf]
      %v1349 = vld [vmem:[%s1096 + $0x1c] sm:$0x1]
      %v1350 = vld [vmem:[%s1096 + $0x20] sm:$0xf]
      %v1351 = vld [vmem:[%s1096 + $0x24] sm:$0x1]
      %v1352 = vld [vmem:[%s1096 + $0x28] sm:$0xf]
      %v1353 = vld [vmem:[%s1096 + $0x2c] sm:$0x1]
      %v1354 = vld [vmem:[%s1096 + $0x30] sm:$0xf]
      %v1355 = vld [vmem:[%s1096 + $0x34] sm:$0x1]
      %v1356 = vld [vmem:[%s1096 + $0x38] sm:$0xf]
      %v1357 = vld [vmem:[%s1096 + $0x3c] sm:$0x1]
      %v1359 = vshrl.u32 %v1342, 16
      %v1361 = vrot.slane %v1359, 4
      %v1362 = vshll.u32 %v1342, 16
      %v1364 = vrot.slane %v1362, 5
      %v1365 = vor.u32 %v1361, %v1364
      %v1366 = vrot.slane %v1365, 4
      %v1368 = vshll.u32 %v1343, 16
      %v1370 = vrot.slane %v1368, 5
      %v1371 = vsel %vm397, %v1366, %v1370
      %v1373 = vshrl.u32 %v1344, 16
      %v1375 = vrot.slane %v1373, 4
      %v1376 = vshll.u32 %v1344, 16
      %v1378 = vrot.slane %v1376, 5
      %v1379 = vor.u32 %v1375, %v1378
      %v1380 = vrot.slane %v1379, 4
      %v1382 = vshll.u32 %v1345, 16
      %v1384 = vrot.slane %v1382, 5
      %v1385 = vsel %vm397, %v1380, %v1384
      %v1387 = vshrl.u32 %v1346, 16
      %v1389 = vrot.slane %v1387, 4
      %v1390 = vshll.u32 %v1346, 16
      %v1392 = vrot.slane %v1390, 5
      %v1393 = vor.u32 %v1389, %v1392
      %v1394 = vrot.slane %v1393, 4
      %v1396 = vshll.u32 %v1347, 16
      %v1398 = vrot.slane %v1396, 5
      %v1399 = vsel %vm397, %v1394, %v1398
      %v1401 = vshrl.u32 %v1348, 16
      %v1403 = vrot.slane %v1401, 4
      %v1404 = vshll.u32 %v1348, 16
      %v1406 = vrot.slane %v1404, 5
      %v1407 = vor.u32 %v1403, %v1406
      %v1408 = vrot.slane %v1407, 4
      %v1410 = vshll.u32 %v1349, 16
      %v1412 = vrot.slane %v1410, 5
      %v1413 = vsel %vm397, %v1408, %v1412
      %v1415 = vshrl.u32 %v1350, 16
      %v1417 = vrot.slane %v1415, 4
      %v1418 = vshll.u32 %v1350, 16
      %v1420 = vrot.slane %v1418, 5
      %v1421 = vor.u32 %v1417, %v1420
      %v1422 = vrot.slane %v1421, 4
      %v1424 = vshll.u32 %v1351, 16
      %v1426 = vrot.slane %v1424, 5
      %v1427 = vsel %vm397, %v1422, %v1426
      %v1429 = vshrl.u32 %v1352, 16
      %v1431 = vrot.slane %v1429, 4
      %v1432 = vshll.u32 %v1352, 16
      %v1434 = vrot.slane %v1432, 5
      %v1435 = vor.u32 %v1431, %v1434
      %v1436 = vrot.slane %v1435, 4
      %v1438 = vshll.u32 %v1353, 16
      %v1440 = vrot.slane %v1438, 5
      %v1441 = vsel %vm397, %v1436, %v1440
      %v1443 = vshrl.u32 %v1354, 16
      %v1445 = vrot.slane %v1443, 4
      %v1446 = vshll.u32 %v1354, 16
      %v1448 = vrot.slane %v1446, 5
      %v1449 = vor.u32 %v1445, %v1448
      %v1450 = vrot.slane %v1449, 4
      %v1452 = vshll.u32 %v1355, 16
      %v1454 = vrot.slane %v1452, 5
      %v1455 = vsel %vm397, %v1450, %v1454
      %v1457 = vshrl.u32 %v1356, 16
      %v1459 = vrot.slane %v1457, 4
      %v1460 = vshll.u32 %v1356, 16
      %v1462 = vrot.slane %v1460, 5
      %v1463 = vor.u32 %v1459, %v1462
      %v1464 = vrot.slane %v1463, 4
      %v1466 = vshll.u32 %v1357, 16
      %v1468 = vrot.slane %v1466, 5
      %v1469 = vsel %vm397, %v1464, %v1468
      %s1470 = scalar_lea.vmem %s1, 64
      %v1471 = vld [vmem:[%s1470] sm:$0xf]
      %v1472 = vld [vmem:[%s1470 + $0x4] sm:$0xf]
      %v1473 = vunpack.c.l.b16 %v1371
      %v1474 = vunpack.c.l.b16 %v1385
      %v1475 = vunpack.c.l.b16 %v1399
      %v1476 = vunpack.c.l.b16 %v1413
      %v1477 = vunpack.c.l.b16 %v1427
      %v1478 = vunpack.c.l.b16 %v1441
      %v1479 = vunpack.c.l.b16 %v1455
      %v1480 = vunpack.c.l.b16 %v1469
      %v1481 = vpack.c.b16 %v1474, %v1473
      %v1482 = vpack.c.b16 %v1476, %v1475
      %v1483 = vpack.c.b16 %v1478, %v1477
      %v1484 = vpack.c.b16 %v1480, %v1479
      %v1487 = vunpack.c.l.b16 %v1471
      %v1488 = vunpack.c.l.b16 %v1472
      %v1489 = vpack.c.b16 %v1488, %v1487
      %v1492 = vsel %vm198, %v1481, 0
      %v1495 = vsel %vm198, %v1482, 0
      %v1498 = vsel %vm198, %v1483, 0
      %v1501 = vsel %vm198, %v1484, 0
      %1503 = vmatprep.subr.bf16.mxu0 0
      %1504 = vmatpush1.bf16.msra.mxu0 0
      %1505 = vmatprep.subr.bf16.mxu0 0
      %1506 = vmatpush1.bf16.msra.mxu0 0
      %1507 = vmatprep.subr.bf16.mxu0 0
      %1508 = vmatpush1.bf16.msra.mxu0 0
      %1509 = vmatprep.subr.bf16.mxu0 0
      %1510 = vmatpush1.bf16.msra.mxu0 0
      %1511 = vmatprep.subr.bf16.mxu0 0
      %1512 = vmatpush1.bf16.msra.mxu0 0
      %1513 = vmatprep.subr.bf16.mxu0 0
      %1514 = vmatpush1.bf16.msra.mxu0 0
      %1515 = vmatprep.subr.bf16.mxu0 0
      %1516 = vmatpush1.bf16.msra.mxu0 0
      %1517 = vmatprep.subr.bf16.mxu0 0
      %1518 = vmatpush1.bf16.msra.mxu0 %v1489
      %1519 = vmatprep.subr.bf16.mxu0 0
      %1520 = vmatpush2.bf16.msra.mxu0 0
      %1521 = vmatprep.subr.bf16.mxu0 0
      %1522 = vmatpush2.bf16.msra.mxu0 0
      %1523 = vmatprep.subr.bf16.mxu0 0
      %1524 = vmatpush2.bf16.msra.mxu0 0
      %1525 = vmatprep.subr.bf16.mxu0 0
      %1526 = vmatpush2.bf16.msra.mxu0 0
      %1527 = vmatprep.subr.bf16.mxu0 0
      %1528 = vmatpush2.bf16.msra.mxu0 0
      %1529 = vmatprep.subr.bf16.mxu0 0
      %1530 = vmatpush2.bf16.msra.mxu0 0
      %1531 = vmatprep.subr.bf16.mxu0 0
      %1532 = vmatpush2.bf16.msra.mxu0 0
      %1533 = vmatprep.subr.bf16.mxu0 0
      %1534 = vmatpush2.bf16.msra.mxu0 0
      %1535 = vmatprep.mubr.bf16.mxu0 0
      %1536 = vmatmul.mubr.bf16.gmra.mxu0 %v1492
      %v1537 = vpop.f32.mrf.mxu0
      %v1538 = vadd.f32 0.0, %v1537
      %v1539 = vpop.f32.mrf.mxu0
      %v1540 = vpop.f32.mrf.mxu0
      %v1541 = vadd.f32 0.0, %v1540
      %v1542 = vpop.f32.mrf.mxu0
      %1543 = vmatprep.mubr.bf16.mxu0 0
      %1544 = vmatmul.mubr.bf16.gmra.mxu0 %v1495
      %v1545 = vpop.f32.mrf.mxu0
      %v1546 = vadd.f32 0.0, %v1545
      %v1547 = vpop.f32.mrf.mxu0
      %v1548 = vpop.f32.mrf.mxu0
      %v1549 = vadd.f32 0.0, %v1548
      %v1550 = vpop.f32.mrf.mxu0
      %1551 = vmatprep.mubr.bf16.mxu0 0
      %1552 = vmatmul.mubr.bf16.gmra.mxu0 %v1498
      %v1553 = vpop.f32.mrf.mxu0
      %v1554 = vadd.f32 0.0, %v1553
      %v1555 = vpop.f32.mrf.mxu0
      %v1556 = vpop.f32.mrf.mxu0
      %v1557 = vadd.f32 0.0, %v1556
      %v1558 = vpop.f32.mrf.mxu0
      %1559 = vmatprep.mubr.bf16.mxu0 0
      %1560 = vmatmul.mubr.bf16.gmra.mxu0 %v1501
      %v1561 = vpop.f32.mrf.mxu0
      %v1562 = vadd.f32 0.0, %v1561
      %v1563 = vpop.f32.mrf.mxu0
      %v1564 = vpop.f32.mrf.mxu0
      %v1565 = vadd.f32 0.0, %v1564
      %v1566 = vpop.f32.mrf.mxu0
      %1567 = vdwg.mxu0
      %v1568 = vadd.f32 %v1334, %v1538
      %v1569 = vadd.f32 %v1335, %v1541
      %v1570 = vadd.f32 %v1336, %v1546
      %v1571 = vadd.f32 %v1337, %v1549
      %v1572 = vadd.f32 %v1338, %v1554
      %v1573 = vadd.f32 %v1339, %v1557
      %v1574 = vadd.f32 %v1340, %v1562
      %v1575 = vadd.f32 %v1341, %v1565
      %vm1576 = vcmask 64512
      %1577 = vst.msk [vmem:[%s148] sm:$0xff] %vm1576, %v1568
      %1578 = vst.msk [vmem:[%s148 + $0x8] sm:$0xff] %vm1576, %v1569
      %1579 = vst.msk [vmem:[%s148 + $0x10] sm:$0xff] %vm1576, %v1570
      %1580 = vst.msk [vmem:[%s148 + $0x18] sm:$0xff] %vm1576, %v1571
      %1581 = vst.msk [vmem:[%s148 + $0x20] sm:$0xff] %vm1576, %v1572
      %1582 = vst.msk [vmem:[%s148 + $0x28] sm:$0xff] %vm1576, %v1573
      %1583 = vst.msk [vmem:[%s148 + $0x30] sm:$0xff] %vm1576, %v1574
      %1584 = vst.msk [vmem:[%s148 + $0x38] sm:$0xff] %vm1576, %v1575
      %p1585 = scmp.lt.s32.totalorder %s13, 1
      %s1586 = scalar_select %p1585, %s13, 1
      %s1587 = smul.addr %s1586, 8
      %s1588 = smul.addr %s1587, 8
      %s1589 = scalar_lea.vmem %s2, %s1588
      // Predicated region
      $region29: #{block_forward.5} parent=27 // pred_check
        %p1590 = pneg %p78
      $region30: #{block_forward.5} parent=27 // pred_check_branch
        %1592 = sbr.rel (%p1590) target = $region32
      $region31: #{block_forward.5} parent=27 // pred_region
        _
      $region32: #{block_forward.5} parent=27 // pred_fallthru
        _
    $region28: #{block_forward.5} parent=5 // pred_fallthru
      _
    %p1593 = scmp.le.s32.totalorder 2, %s8
    // Predicated region
    $region33: #{block_forward.5} parent=5 // pred_check
      %p1594 = pneg %p1593
    $region34: #{block_forward.5} parent=5 // pred_check_branch
      %1596 = sbr.rel (%p1594) target = $region36
    $region35: #{block_forward.5} parent=5 // pred_region
      %s1597 = ssub.s32 %s8, 2
      // Predicated region
      $region37: #{block_forward.5} parent=35 // pred_check
        %p1598 = pneg %p84
      $region38: #{block_forward.5} parent=35 // pred_check_branch
        %1600 = sbr.rel (%p1598) target = $region40
      $region39: #{block_forward.5} parent=35 // pred_region
        %p1601 = scmp.lt.s32.totalorder %s14, 1
        %s1602 = scalar_select %p1601, %s14, 1
        %s1603 = smul.addr %s1602, 8
        %s1604 = smul.addr %s1603, 8
        %s1605 = scalar_lea.vmem %s2, %s1604
      $region40: #{block_forward.5} parent=35 // pred_fallthru
        _
    $region36: #{block_forward.5} parent=5 // pred_fallthru
      _
  $region6: #{block_forward.5} parent=0 // loop_footer
    %s12 = sadd.s32 1, %s8
  $region7: #{block_forward.5} parent=0 // loop_footer_branch
    %7 = sbr.rel target = $region3
  $region8: #{block_forward.5} parent=0 // loop_exit
    _

// kernel: block_forward.7
$region0: #{block_forward.7}
  #allocation0 [shape = 'u32[]', space=smem, size = 0x4, offset = 0x4, fixed_abs, tag = 'smem constant byte address 0x4 - core index']
  #allocation1 [shape = 'u32[144,128]{1,0:T(1,128)}', space=vmem, size = 0x12000, scoped, tag = 'internal scratch']
  %s0 = inlined_call_operand.vmem [shape: bf16[2,10,10,16], index: 0, kind: input, shape index: {}]
  %s1 = inlined_call_operand.vmem [shape: bf16[9,16,8], index: 1, kind: input, shape index: {}]
  %s2 = inlined_call_operand.vmem [shape: bf16[2,64,16], index: 2, kind: input, shape index: {}]
  %s3 = inlined_call_operand.vmem [shape: bf16[16,8], index: 3, kind: input, shape index: {}]
  %s4 = inlined_call_operand.vmem [shape: f32[2,64,8], index: 4, kind: output, shape index: {}]
  %s5 = sld [smem:[#allocation0]]
  $region49: #{block_forward.7} parent=0
    _
  %s7 = ssub.s32 1, %s5
  %s8 = scalar_select 0, %s7, %s5
  loop: start=0, step=1, limit=4
  $region2: #{block_forward.7} parent=0 // loop_pre_header
    _
  $region3: #{block_forward.7} parent=0 // loop_header
    %s10 = sphi 0, %s14
    %p11 = scmp.ge.s32.totalorder %s10, 4
    %s20 = sphi 0, %s22
    %s23 = sphi 0, %s20
    %s24 = sphi 0, %s23
    %s40 = sphi 0, %s24
    %s44 = sphi 0, %s44
    %s46 = sphi 0, %s44
    %s47 = sphi 0, %s46
    %s61 = sphi 0, %s47
    %s67 = sphi 0, %s69
    %s70 = sphi 0, %s67
    %s71 = sphi 0, %s70
    %s87 = sphi 0, %s71
    %s91 = sphi 0, %s91
    %s93 = sphi 0, %s91
    %s94 = sphi 0, %s93
    %s108 = sphi 0, %s94
    %s114 = sphi 0, %s116
    %s117 = sphi 0, %s114
    %s118 = sphi 0, %s117
    %s134 = sphi 0, %s118
  $region4: #{block_forward.7} parent=0 // loop_header_branch
    %13 = sbr.rel (%p11) target = $region8
  $region5: #{block_forward.7} parent=0 // loop_body
    %s15 = ssub.s32 %s10, 1
    %s16 = ssub.s32 %s10, 2
    %s17 = sadd.s32 %s10, 1
    %s18 = ssub.s32 %s10, %s17
    %p19 = scmp.eq.s32.totalorder %s18, 0
    %s21 = sadd.s32 %s20, 1
    %s22 = scalar_select %p19, %s20, %s21
    %p25 = pneg %p19
    %p26 = scmp.eq.s32.totalorder %s10, 1
    %p27 = por %p25, %p26
    %p28 = scmp.ne.s32.totalorder %s20, %s23
    %p29 = scmp.eq.s32.totalorder %s10, 0
    %p30 = por %p28, %p29
    %p31 = scmp.ne.s32.totalorder %s20, %s23
    %p32 = scmp.eq.s32.totalorder %s15, 1
    %p33 = por %p31, %p32
    %p34 = scmp.ne.s32.totalorder %s23, %s24
    %p35 = scmp.eq.s32.totalorder %s15, 0
    %p36 = por %p34, %p35
    %p37 = scmp.ne.s32.totalorder %s23, %s24
    %p38 = scmp.eq.s32.totalorder %s16, 1
    %p39 = por %p37, %p38
    %p41 = scmp.ne.s32.totalorder %s24, %s40
    %p42 = scmp.eq.s32.totalorder %s16, 0
    %p43 = por %p41, %p42
    %s45 = sadd.s32 %s44, 1
    %p48 = scmp.eq.s32.totalorder %s10, 1
    %p49 = scmp.ne.s32.totalorder %s44, %s46
    %p50 = scmp.eq.s32.totalorder %s10, 0
    %p51 = por %p49, %p50
    %p52 = scmp.ne.s32.totalorder %s44, %s46
    %p53 = scmp.eq.s32.totalorder %s15, 1
    %p54 = por %p52, %p53
    %p55 = scmp.ne.s32.totalorder %s46, %s47
    %p56 = scmp.eq.s32.totalorder %s15, 0
    %p57 = por %p55, %p56
    %p58 = scmp.ne.s32.totalorder %s46, %s47
    %p59 = scmp.eq.s32.totalorder %s16, 1
    %p60 = por %p58, %p59
    %p62 = scmp.ne.s32.totalorder %s47, %s61
    %p63 = scmp.eq.s32.totalorder %s16, 0
    %p64 = por %p62, %p63
    %s65 = ssub.s32 %s10, %s17
    %p66 = scmp.eq.s32.totalorder %s65, 0
    %s68 = sadd.s32 %s67, 1
    %s69 = scalar_select %p66, %s67, %s68
    %p72 = pneg %p66
    %p73 = scmp.eq.s32.totalorder %s10, 1
    %p74 = por %p72, %p73
    %p75 = scmp.ne.s32.totalorder %s67, %s70
    %p76 = scmp.eq.s32.totalorder %s10, 0
    %p77 = por %p75, %p76
    %p78 = scmp.ne.s32.totalorder %s67, %s70
    %p79 = scmp.eq.s32.totalorder %s15, 1
    %p80 = por %p78, %p79
    %p81 = scmp.ne.s32.totalorder %s70, %s71
    %p82 = scmp.eq.s32.totalorder %s15, 0
    %p83 = por %p81, %p82
    %p84 = scmp.ne.s32.totalorder %s70, %s71
    %p85 = scmp.eq.s32.totalorder %s16, 1
    %p86 = por %p84, %p85
    %p88 = scmp.ne.s32.totalorder %s71, %s87
    %p89 = scmp.eq.s32.totalorder %s16, 0
    %p90 = por %p88, %p89
    %s92 = sadd.s32 %s91, 1
    %p95 = scmp.eq.s32.totalorder %s10, 1
    %p96 = scmp.ne.s32.totalorder %s91, %s93
    %p97 = scmp.eq.s32.totalorder %s10, 0
    %p98 = por %p96, %p97
    %p99 = scmp.ne.s32.totalorder %s91, %s93
    %p100 = scmp.eq.s32.totalorder %s15, 1
    %p101 = por %p99, %p100
    %p102 = scmp.ne.s32.totalorder %s93, %s94
    %p103 = scmp.eq.s32.totalorder %s15, 0
    %p104 = por %p102, %p103
    %p105 = scmp.ne.s32.totalorder %s93, %s94
    %p106 = scmp.eq.s32.totalorder %s16, 1
    %p107 = por %p105, %p106
    %p109 = scmp.ne.s32.totalorder %s94, %s108
    %p110 = scmp.eq.s32.totalorder %s16, 0
    %p111 = por %p109, %p110
    %s112 = ssub.s32 %s10, %s17
    %p113 = scmp.eq.s32.totalorder %s112, 0
    %s115 = sadd.s32 %s114, 1
    %s116 = scalar_select %p113, %s114, %s115
    %p119 = pneg %p113
    %p120 = scmp.eq.s32.totalorder %s10, 1
    %p121 = por %p119, %p120
    %p122 = scmp.ne.s32.totalorder %s114, %s117
    %p123 = scmp.eq.s32.totalorder %s10, 0
    %p124 = por %p122, %p123
    %p125 = scmp.ne.s32.totalorder %s114, %s117
    %p126 = scmp.eq.s32.totalorder %s15, 1
    %p127 = por %p125, %p126
    %p128 = scmp.ne.s32.totalorder %s117, %s118
    %p129 = scmp.eq.s32.totalorder %s15, 0
    %p130 = por %p128, %p129
    %p131 = scmp.ne.s32.totalorder %s117, %s118
    %p132 = scmp.eq.s32.totalorder %s16, 1
    %p133 = por %p131, %p132
    %p135 = scmp.ne.s32.totalorder %s118, %s134
    %p136 = scmp.eq.s32.totalorder %s16, 0
    %p137 = por %p135, %p136
    %p138 = scmp.le.s32.totalorder 1, %s10
    %p139 = scmp.lt.s32.totalorder %s10, 3
    %p140 = pnand %p138, %p139
    %p141 = pneg %p140
    // Predicated region
    $region9: #{block_forward.7} parent=5 // pred_check
      _
    $region10: #{block_forward.7} parent=5 // pred_check_branch
      %143 = sbr.rel (%p140) target = $region12
    $region11: #{block_forward.7} parent=5 // pred_region
      %s144 = ssub.s32 %s10, 1
      // Predicated region
      $region13: #{block_forward.7} parent=11 // pred_check
        %p145 = pneg %p57
      $region14: #{block_forward.7} parent=11 // pred_check_branch
        %147 = sbr.rel (%p145) target = $region16
      $region15: #{block_forward.7} parent=11 // pred_region
        _
      $region16: #{block_forward.7} parent=11 // pred_fallthru
        _
      // Predicated region
      $region17: #{block_forward.7} parent=11 // pred_check
        %p148 = pneg %p104
      $region18: #{block_forward.7} parent=11 // pred_check_branch
        %150 = sbr.rel (%p148) target = $region20
      $region19: #{block_forward.7} parent=11 // pred_region
        _
      $region20: #{block_forward.7} parent=11 // pred_fallthru
        _
    $region12: #{block_forward.7} parent=5 // pred_fallthru
      _
    %p151 = scmp.lt.s32.totalorder %s10, 2
    // Predicated region
    $region21: #{block_forward.7} parent=5 // pred_check
      %p152 = pneg %p151
    $region22: #{block_forward.7} parent=5 // pred_check_branch
      %154 = sbr.rel (%p152) target = $region24
    $region23: #{block_forward.7} parent=5 // pred_region
      // Predicated region
      $region25: #{block_forward.7} parent=23 // pred_check
        %p155 = pneg %p30
      $region26: #{block_forward.7} parent=23 // pred_check_branch
        %157 = sbr.rel (%p155) target = $region28
      $region27: #{block_forward.7} parent=23 // pred_region
        %p158 = scmp.lt.s32.totalorder %s10, 1
        %s159 = scalar_select %p158, %s10, 1
        %s160 = smul.addr %s159, 20
        %s161 = smul.addr %s160, 4
        %s162 = scalar_lea.vmem %s0, %s161
      $region28: #{block_forward.7} parent=23 // pred_fallthru
        _
      // Predicated region
      $region29: #{block_forward.7} parent=23 // pred_check
        %p163 = pneg %p77
      $region30: #{block_forward.7} parent=23 // pred_check_branch
        %165 = sbr.rel (%p163) target = $region32
      $region31: #{block_forward.7} parent=23 // pred_region
        %p166 = scmp.lt.s32.totalorder %s10, 1
        %s167 = scalar_select %p166, %s10, 1
        %s168 = smul.addr %s167, 8
        %s169 = smul.addr %s168, 4
        %s170 = scalar_lea.vmem %s2, %s169
      $region32: #{block_forward.7} parent=23 // pred_fallthru
        _
    $region24: #{block_forward.7} parent=5 // pred_fallthru
      _
    %p171 = scmp.le.s32.totalorder 1, %s10
    %p172 = scmp.lt.s32.totalorder %s10, 3
    %p173 = pnand %p171, %p172
    %p174 = pneg %p173
    // Predicated region
    $region33: #{block_forward.7} parent=5 // pred_check
      _
    $region34: #{block_forward.7} parent=5 // pred_check_branch
      %176 = sbr.rel (%p173) target = $region36
    $region35: #{block_forward.7} parent=5 // pred_region
      %s177 = ssub.s32 %s10, 1
      %p178 = scmp.lt.s32.totalorder %s15, 1
      %s179 = scalar_select %p178, %s15, 1
      %s180 = smul.addr %s179, 20
      %s181 = smul.addr %s180, 4
      %s182 = scalar_lea.vmem %s0, %s181
      %p183 = pneg %p36
      %p184 = pneg %p33
      %p185 = pneg %p57
      %p186 = pneg %p54
      %p187 = scmp.lt.s32.totalorder %s15, 1
      %s188 = scalar_select %p187, %s15, 1
      %s189 = smul.addr %s188, 8
      %s190 = smul.addr %s189, 4
      %s191 = scalar_lea.vmem %s2, %s190
      %p192 = pneg %p83
      %p193 = pneg %p80
      %p194 = pneg %p104
      %p195 = pneg %p101
      %p196 = pneg %p130
      %p197 = pneg %p127
      %p198 = scmp.lt.s32.totalorder %s15, 1
      %s199 = scalar_select %p198, %s15, 1
      %s200 = smul.addr %s199, 8
      %s201 = smul.addr %s200, 8
      %s202 = scalar_lea.vmem %s4, %s201
      %p203 = scmp.lt.s32.totalorder %s15, 1
      %s204 = scalar_select %p203, %s15, 1
      %s205 = smul.addr %s204, 20
      %s206 = smul.addr %s205, 4
      %s207 = scalar_lea.vmem %s0, %s206
      %p208 = scmp.lt.s32.totalorder %s15, 1
      %s209 = scalar_select %p208, %s15, 1
      %s210 = smul.addr %s209, 8
      %s211 = smul.addr %s210, 4
      %s212 = scalar_lea.vmem %s2, %s211
      %p213 = scmp.lt.s32.totalorder %s15, 1
      %s214 = scalar_select %p213, %s15, 1
      %s215 = smul.addr %s214, 8
      %s216 = smul.addr %s215, 8
      %s217 = scalar_lea.vmem %s4, %s216
      %v219 = vld [vmem:[%s207] sm:$0xf]
      %v220 = vld [vmem:[%s207 + $0x8] sm:$0xf]
      %v221 = vld [vmem:[%s207 + $0x10] sm:$0xf]
      %v222 = vld [vmem:[%s207 + $0x18] sm:$0xf]
      %v223 = vld [vmem:[%s207 + $0x20] sm:$0xf]
      %v224 = vld [vmem:[%s207 + $0x28] sm:$0xf]
      %v225 = vld [vmem:[%s207 + $0x30] sm:$0xf]
      %v226 = vld [vmem:[%s207 + $0x38] sm:$0xf]
      %v227 = vld [vmem:[%s1] sm:$0xf]
      %v228 = vld [vmem:[%s1 + $0x4] sm:$0xf]
      %v229 = vld [vmem:[%s207 + $0x4] sm:$0x1]
      %v230 = vld [vmem:[%s207 + $0xc] sm:$0x1]
      %v231 = vld [vmem:[%s207 + $0x14] sm:$0x1]
      %v232 = vld [vmem:[%s207 + $0x1c] sm:$0x1]
      %v233 = vld [vmem:[%s207 + $0x24] sm:$0x1]
      %v234 = vld [vmem:[%s207 + $0x2c] sm:$0x1]
      %v235 = vld [vmem:[%s207 + $0x34] sm:$0x1]
      %v236 = vld [vmem:[%s207 + $0x3c] sm:$0x1]
      %vm237 = vsmask.f32 3328
      %vm238 = vsmask.f32 7440
      %vm239 = vmor %vm237, %vm238
      %v241 = vshrl.u32 %v219, 16
      %v243 = vrot.slane %v241, 4
      %v244 = vshll.u32 %v219, 16
      %v246 = vrot.slane %v244, 5
      %v247 = vor.u32 %v243, %v246
      %v248 = vrot.slane %v247, 4
      %v250 = vshll.u32 %v229, 16
      %v252 = vrot.slane %v250, 5
      %v253 = vsel %vm239, %v248, %v252
      %v255 = vshrl.u32 %v220, 16
      %v257 = vrot.slane %v255, 4
      %v258 = vshll.u32 %v220, 16
      %v260 = vrot.slane %v258, 5
      %v261 = vor.u32 %v257, %v260
      %v262 = vrot.slane %v261, 4
      %v264 = vshll.u32 %v230, 16
      %v266 = vrot.slane %v264, 5
      %v267 = vsel %vm239, %v262, %v266
      %v269 = vshrl.u32 %v221, 16
      %v271 = vrot.slane %v269, 4
      %v272 = vshll.u32 %v221, 16
      %v274 = vrot.slane %v272, 5
      %v275 = vor.u32 %v271, %v274
      %v276 = vrot.slane %v275, 4
      %v278 = vshll.u32 %v231, 16
      %v280 = vrot.slane %v278, 5
      %v281 = vsel %vm239, %v276, %v280
      %v283 = vshrl.u32 %v222, 16
      %v285 = vrot.slane %v283, 4
      %v286 = vshll.u32 %v222, 16
      %v288 = vrot.slane %v286, 5
      %v289 = vor.u32 %v285, %v288
      %v290 = vrot.slane %v289, 4
      %v292 = vshll.u32 %v232, 16
      %v294 = vrot.slane %v292, 5
      %v295 = vsel %vm239, %v290, %v294
      %v297 = vshrl.u32 %v223, 16
      %v299 = vrot.slane %v297, 4
      %v300 = vshll.u32 %v223, 16
      %v302 = vrot.slane %v300, 5
      %v303 = vor.u32 %v299, %v302
      %v304 = vrot.slane %v303, 4
      %v306 = vshll.u32 %v233, 16
      %v308 = vrot.slane %v306, 5
      %v309 = vsel %vm239, %v304, %v308
      %v311 = vshrl.u32 %v224, 16
      %v313 = vrot.slane %v311, 4
      %v314 = vshll.u32 %v224, 16
      %v316 = vrot.slane %v314, 5
      %v317 = vor.u32 %v313, %v316
      %v318 = vrot.slane %v317, 4
      %v320 = vshll.u32 %v234, 16
      %v322 = vrot.slane %v320, 5
      %v323 = vsel %vm239, %v318, %v322
      %v325 = vshrl.u32 %v225, 16
      %v327 = vrot.slane %v325, 4
      %v328 = vshll.u32 %v225, 16
      %v330 = vrot.slane %v328, 5
      %v331 = vor.u32 %v327, %v330
      %v332 = vrot.slane %v331, 4
      %v334 = vshll.u32 %v235, 16
      %v336 = vrot.slane %v334, 5
      %v337 = vsel %vm239, %v332, %v336
      %v339 = vshrl.u32 %v226, 16
      %v341 = vrot.slane %v339, 4
      %v342 = vshll.u32 %v226, 16
      %v344 = vrot.slane %v342, 5
      %v345 = vor.u32 %v341, %v344
      %v346 = vrot.slane %v345, 4
      %v348 = vshll.u32 %v236, 16
      %v350 = vrot.slane %v348, 5
      %v351 = vsel %vm239, %v346, %v350
      %s352 = scalar_lea.vmem %s1, 8
      %v353 = vld [vmem:[%s352] sm:$0xf]
      %v354 = vld [vmem:[%s352 + $0x4] sm:$0xf]
      %v355 = vunpack.c.l.b16 %v253
      %v356 = vunpack.c.l.b16 %v267
      %v357 = vunpack.c.l.b16 %v281
      %v358 = vunpack.c.l.b16 %v295
      %v359 = vunpack.c.l.b16 %v309
      %v360 = vunpack.c.l.b16 %v323
      %v361 = vunpack.c.l.b16 %v337
      %v362 = vunpack.c.l.b16 %v351
      %v363 = vpack.c.b16 %v356, %v355
      %v364 = vpack.c.b16 %v358, %v357
      %v365 = vpack.c.b16 %v360, %v359
      %v366 = vpack.c.b16 %v362, %v361
      %v369 = vunpack.c.l.b16 %v353
      %v370 = vunpack.c.l.b16 %v354
      %v371 = vpack.c.b16 %v370, %v369
      %vm373 = vcmask 130048
      %v375 = vsel %vm373, %v363, 0
      %v378 = vsel %vm373, %v364, 0
      %v381 = vsel %vm373, %v365, 0
      %v384 = vsel %vm373, %v366, 0
      %386 = vmatprep.subr.bf16.mxu0 0
      %387 = vmatpush1.bf16.msra.mxu0 0
      %388 = vmatprep.subr.bf16.mxu0 0
      %389 = vmatpush1.bf16.msra.mxu0 0
      %390 = vmatprep.subr.bf16.mxu0 0
      %391 = vmatpush1.bf16.msra.mxu0 0
      %392 = vmatprep.subr.bf16.mxu0 0
      %393 = vmatpush1.bf16.msra.mxu0 0
      %394 = vmatprep.subr.bf16.mxu0 0
      %395 = vmatpush1.bf16.msra.mxu0 0
      %396 = vmatprep.subr.bf16.mxu0 0
      %397 = vmatpush1.bf16.msra.mxu0 0
      %398 = vmatprep.subr.bf16.mxu0 0
      %399 = vmatpush1.bf16.msra.mxu0 0
      %400 = vmatprep.subr.bf16.mxu0 0
      %401 = vmatpush1.bf16.msra.mxu0 %v371
      %402 = vmatprep.subr.bf16.mxu0 0
      %403 = vmatpush2.bf16.msra.mxu0 0
      %404 = vmatprep.subr.bf16.mxu0 0
      %405 = vmatpush2.bf16.msra.mxu0 0
      %406 = vmatprep.subr.bf16.mxu0 0
      %407 = vmatpush2.bf16.msra.mxu0 0
      %408 = vmatprep.subr.bf16.mxu0 0
      %409 = vmatpush2.bf16.msra.mxu0 0
      %410 = vmatprep.subr.bf16.mxu0 0
      %411 = vmatpush2.bf16.msra.mxu0 0
      %412 = vmatprep.subr.bf16.mxu0 0
      %413 = vmatpush2.bf16.msra.mxu0 0
      %414 = vmatprep.subr.bf16.mxu0 0
      %415 = vmatpush2.bf16.msra.mxu0 0
      %416 = vmatprep.subr.bf16.mxu0 0
      %417 = vmatpush2.bf16.msra.mxu0 0
      %418 = vmatprep.mubr.bf16.mxu0 0
      %419 = vmatmul.mubr.bf16.gmra.mxu0 %v375
      %v420 = vpop.f32.mrf.mxu0
      %v421 = vadd.f32 0.0, %v420
      %v422 = vpop.f32.mrf.mxu0
      %v423 = vpop.f32.mrf.mxu0
      %v424 = vadd.f32 0.0, %v423
      %v425 = vpop.f32.mrf.mxu0
      %426 = vmatprep.mubr.bf16.mxu0 0
      %427 = vmatmul.mubr.bf16.gmra.mxu0 %v378
      %v428 = vpop.f32.mrf.mxu0
      %v429 = vadd.f32 0.0, %v428
      %v430 = vpop.f32.mrf.mxu0
      %v431 = vpop.f32.mrf.mxu0
      %v432 = vadd.f32 0.0, %v431
      %v433 = vpop.f32.mrf.mxu0
      %434 = vmatprep.mubr.bf16.mxu0 0
      %435 = vmatmul.mubr.bf16.gmra.mxu0 %v381
      %v436 = vpop.f32.mrf.mxu0
      %v437 = vadd.f32 0.0, %v436
      %v438 = vpop.f32.mrf.mxu0
      %v439 = vpop.f32.mrf.mxu0
      %v440 = vadd.f32 0.0, %v439
      %v441 = vpop.f32.mrf.mxu0
      %442 = vmatprep.mubr.bf16.mxu0 0
      %443 = vmatmul.mubr.bf16.gmra.mxu0 %v384
      %v444 = vpop.f32.mrf.mxu0
      %v445 = vadd.f32 0.0, %v444
      %v446 = vpop.f32.mrf.mxu0
      %v447 = vpop.f32.mrf.mxu0
      %v448 = vadd.f32 0.0, %v447
      %v449 = vpop.f32.mrf.mxu0
      %450 = vdwg.mxu0
      %v459 = vunpack.c.l.b16 %v219
      %v460 = vunpack.c.l.b16 %v220
      %v461 = vunpack.c.l.b16 %v221
      %v462 = vunpack.c.l.b16 %v222
      %v463 = vunpack.c.l.b16 %v223
      %v464 = vunpack.c.l.b16 %v224
      %v465 = vunpack.c.l.b16 %v225
      %v466 = vunpack.c.l.b16 %v226
      %v467 = vpack.c.b16 %v460, %v459
      %v468 = vpack.c.b16 %v462, %v461
      %v469 = vpack.c.b16 %v464, %v463
      %v470 = vpack.c.b16 %v466, %v465
      %v473 = vunpack.c.l.b16 %v227
      %v474 = vunpack.c.l.b16 %v228
      %v475 = vpack.c.b16 %v474, %v473
      %v478 = vsel %vm373, %v467, 0
      %v481 = vsel %vm373, %v468, 0
      %v484 = vsel %vm373, %v469, 0
      %v487 = vsel %vm373, %v470, 0
      %489 = vmatprep.subr.bf16.mxu0 0
      %490 = vmatpush1.bf16.msra.mxu0 0
      %491 = vmatprep.subr.bf16.mxu0 0
      %492 = vmatpush1.bf16.msra.mxu0 0
      %493 = vmatprep.subr.bf16.mxu0 0
      %494 = vmatpush1.bf16.msra.mxu0 0
      %495 = vmatprep.subr.bf16.mxu0 0
      %496 = vmatpush1.bf16.msra.mxu0 0
      %497 = vmatprep.subr.bf16.mxu0 0
      %498 = vmatpush1.bf16.msra.mxu0 0
      %499 = vmatprep.subr.bf16.mxu0 0
      %500 = vmatpush1.bf16.msra.mxu0 0
      %501 = vmatprep.subr.bf16.mxu0 0
      %502 = vmatpush1.bf16.msra.mxu0 0
      %503 = vmatprep.subr.bf16.mxu0 0
      %504 = vmatpush1.bf16.msra.mxu0 %v475
      %505 = vmatprep.subr.bf16.mxu0 0
      %506 = vmatpush2.bf16.msra.mxu0 0
      %507 = vmatprep.subr.bf16.mxu0 0
      %508 = vmatpush2.bf16.msra.mxu0 0
      %509 = vmatprep.subr.bf16.mxu0 0
      %510 = vmatpush2.bf16.msra.mxu0 0
      %511 = vmatprep.subr.bf16.mxu0 0
      %512 = vmatpush2.bf16.msra.mxu0 0
      %513 = vmatprep.subr.bf16.mxu0 0
      %514 = vmatpush2.bf16.msra.mxu0 0
      %515 = vmatprep.subr.bf16.mxu0 0
      %516 = vmatpush2.bf16.msra.mxu0 0
      %517 = vmatprep.subr.bf16.mxu0 0
      %518 = vmatpush2.bf16.msra.mxu0 0
      %519 = vmatprep.subr.bf16.mxu0 0
      %520 = vmatpush2.bf16.msra.mxu0 0
      %521 = vmatprep.mubr.bf16.mxu0 0
      %522 = vmatmul.mubr.bf16.gmra.mxu0 %v478
      %v523 = vpop.f32.mrf.mxu0
      %v524 = vadd.f32 %v421, %v523
      %v525 = vpop.f32.mrf.mxu0
      %v526 = vpop.f32.mrf.mxu0
      %v527 = vadd.f32 %v424, %v526
      %v528 = vpop.f32.mrf.mxu0
      %529 = vmatprep.mubr.bf16.mxu0 0
      %530 = vmatmul.mubr.bf16.gmra.mxu0 %v481
      %v531 = vpop.f32.mrf.mxu0
      %v532 = vadd.f32 %v429, %v531
      %v533 = vpop.f32.mrf.mxu0
      %v534 = vpop.f32.mrf.mxu0
      %v535 = vadd.f32 %v432, %v534
      %v536 = vpop.f32.mrf.mxu0
      %537 = vmatprep.mubr.bf16.mxu0 0
      %538 = vmatmul.mubr.bf16.gmra.mxu0 %v484
      %v539 = vpop.f32.mrf.mxu0
      %v540 = vadd.f32 %v437, %v539
      %v541 = vpop.f32.mrf.mxu0
      %v542 = vpop.f32.mrf.mxu0
      %v543 = vadd.f32 %v440, %v542
      %v544 = vpop.f32.mrf.mxu0
      %545 = vmatprep.mubr.bf16.mxu0 0
      %546 = vmatmul.mubr.bf16.gmra.mxu0 %v487
      %v547 = vpop.f32.mrf.mxu0
      %v548 = vadd.f32 %v445, %v547
      %v549 = vpop.f32.mrf.mxu0
      %v550 = vpop.f32.mrf.mxu0
      %v551 = vadd.f32 %v448, %v550
      %v552 = vpop.f32.mrf.mxu0
      %553 = vdwg.mxu0
      %v554 = vld [vmem:[%s207] sm:$0xe]
      %v555 = vld [vmem:[%s207 + $0x8] sm:$0xe]
      %v556 = vld [vmem:[%s207 + $0x10] sm:$0xe]
      %v557 = vld [vmem:[%s207 + $0x18] sm:$0xe]
      %v558 = vld [vmem:[%s207 + $0x20] sm:$0xe]
      %v559 = vld [vmem:[%s207 + $0x28] sm:$0xe]
      %v560 = vld [vmem:[%s207 + $0x30] sm:$0xe]
      %v561 = vld [vmem:[%s207 + $0x38] sm:$0xe]
      %vm578 = vcmask 1042432
      %vm579 = vcmask 1046532
      %vm580 = vmor %vm578, %vm579
      %v581 = vrot.slane %v554, 5
      %v582 = vrot.slane %v581, 4
      %v583 = vrot.slane %v229, 5
      %v584 = vsel %vm580, %v582, %v583
      %v585 = vrot.slane %v555, 5
      %v586 = vrot.slane %v585, 4
      %v587 = vrot.slane %v230, 5
      %v588 = vsel %vm580, %v586, %v587
      %v589 = vrot.slane %v556, 5
      %v590 = vrot.slane %v589, 4
      %v591 = vrot.slane %v231, 5
      %v592 = vsel %vm580, %v590, %v591
      %v593 = vrot.slane %v557, 5
      %v594 = vrot.slane %v593, 4
      %v595 = vrot.slane %v232, 5
      %v596 = vsel %vm580, %v594, %v595
      %v597 = vrot.slane %v558, 5
      %v598 = vrot.slane %v597, 4
      %v599 = vrot.slane %v233, 5
      %v600 = vsel %vm580, %v598, %v599
      %v601 = vrot.slane %v559, 5
      %v602 = vrot.slane %v601, 4
      %v603 = vrot.slane %v234, 5
      %v604 = vsel %vm580, %v602, %v603
      %v605 = vrot.slane %v560, 5
      %v606 = vrot.slane %v605, 4
      %v607 = vrot.slane %v235, 5
      %v608 = vsel %vm580, %v606, %v607
      %v609 = vrot.slane %v561, 5
      %v610 = vrot.slane %v609, 4
      %v611 = vrot.slane %v236, 5
      %v612 = vsel %vm580, %v610, %v611
      %s613 = scalar_lea.vmem %s1, 16
      %v614 = vld [vmem:[%s613] sm:$0xf]
      %v615 = vld [vmem:[%s613 + $0x4] sm:$0xf]
      %v616 = vunpack.c.l.b16 %v584
      %v617 = vunpack.c.l.b16 %v588
      %v618 = vunpack.c.l.b16 %v592
      %v619 = vunpack.c.l.b16 %v596
      %v620 = vunpack.c.l.b16 %v600
      %v621 = vunpack.c.l.b16 %v604
      %v622 = vunpack.c.l.b16 %v608
      %v623 = vunpack.c.l.b16 %v612
      %v624 = vpack.c.b16 %v617, %v616
      %v625 = vpack.c.b16 %v619, %v618
      %v626 = vpack.c.b16 %v621, %v620
      %v627 = vpack.c.b16 %v623, %v622
      %v630 = vunpack.c.l.b16 %v614
      %v631 = vunpack.c.l.b16 %v615
      %v632 = vpack.c.b16 %v631, %v630
      %v635 = vsel %vm373, %v624, 0
      %v638 = vsel %vm373, %v625, 0
      %v641 = vsel %vm373, %v626, 0
      %v644 = vsel %vm373, %v627, 0
      %646 = vmatprep.subr.bf16.mxu0 0
      %647 = vmatpush1.bf16.msra.mxu0 0
      %648 = vmatprep.subr.bf16.mxu0 0
      %649 = vmatpush1.bf16.msra.mxu0 0
      %650 = vmatprep.subr.bf16.mxu0 0
      %651 = vmatpush1.bf16.msra.mxu0 0
      %652 = vmatprep.subr.bf16.mxu0 0
      %653 = vmatpush1.bf16.msra.mxu0 0
      %654 = vmatprep.subr.bf16.mxu0 0
      %655 = vmatpush1.bf16.msra.mxu0 0
      %656 = vmatprep.subr.bf16.mxu0 0
      %657 = vmatpush1.bf16.msra.mxu0 0
      %658 = vmatprep.subr.bf16.mxu0 0
      %659 = vmatpush1.bf16.msra.mxu0 0
      %660 = vmatprep.subr.bf16.mxu0 0
      %661 = vmatpush1.bf16.msra.mxu0 %v632
      %662 = vmatprep.subr.bf16.mxu0 0
      %663 = vmatpush2.bf16.msra.mxu0 0
      %664 = vmatprep.subr.bf16.mxu0 0
      %665 = vmatpush2.bf16.msra.mxu0 0
      %666 = vmatprep.subr.bf16.mxu0 0
      %667 = vmatpush2.bf16.msra.mxu0 0
      %668 = vmatprep.subr.bf16.mxu0 0
      %669 = vmatpush2.bf16.msra.mxu0 0
      %670 = vmatprep.subr.bf16.mxu0 0
      %671 = vmatpush2.bf16.msra.mxu0 0
      %672 = vmatprep.subr.bf16.mxu0 0
      %673 = vmatpush2.bf16.msra.mxu0 0
      %674 = vmatprep.subr.bf16.mxu0 0
      %675 = vmatpush2.bf16.msra.mxu0 0
      %676 = vmatprep.subr.bf16.mxu0 0
      %677 = vmatpush2.bf16.msra.mxu0 0
      %678 = vmatprep.mubr.bf16.mxu0 0
      %679 = vmatmul.mubr.bf16.gmra.mxu0 %v635
      %v680 = vpop.f32.mrf.mxu0
      %v681 = vadd.f32 0.0, %v680
      %v682 = vpop.f32.mrf.mxu0
      %v683 = vpop.f32.mrf.mxu0
      %v684 = vadd.f32 0.0, %v683
      %v685 = vpop.f32.mrf.mxu0
      %686 = vmatprep.mubr.bf16.mxu0 0
      %687 = vmatmul.mubr.bf16.gmra.mxu0 %v638
      %v688 = vpop.f32.mrf.mxu0
      %v689 = vadd.f32 0.0, %v688
      %v690 = vpop.f32.mrf.mxu0
      %v691 = vpop.f32.mrf.mxu0
      %v692 = vadd.f32 0.0, %v691
      %v693 = vpop.f32.mrf.mxu0
      %694 = vmatprep.mubr.bf16.mxu0 0
      %695 = vmatmul.mubr.bf16.gmra.mxu0 %v641
      %v696 = vpop.f32.mrf.mxu0
      %v697 = vadd.f32 0.0, %v696
      %v698 = vpop.f32.mrf.mxu0
      %v699 = vpop.f32.mrf.mxu0
      %v700 = vadd.f32 0.0, %v699
      %v701 = vpop.f32.mrf.mxu0
      %702 = vmatprep.mubr.bf16.mxu0 0
      %703 = vmatmul.mubr.bf16.gmra.mxu0 %v644
      %v704 = vpop.f32.mrf.mxu0
      %v705 = vadd.f32 0.0, %v704
      %v706 = vpop.f32.mrf.mxu0
      %v707 = vpop.f32.mrf.mxu0
      %v708 = vadd.f32 0.0, %v707
      %v709 = vpop.f32.mrf.mxu0
      %710 = vdwg.mxu0
      %v711 = vadd.f32 %v524, %v681
      %v712 = vadd.f32 %v527, %v684
      %v713 = vadd.f32 %v532, %v689
      %v714 = vadd.f32 %v535, %v692
      %v715 = vadd.f32 %v540, %v697
      %v716 = vadd.f32 %v543, %v700
      %v717 = vadd.f32 %v548, %v705
      %v718 = vadd.f32 %v551, %v708
      %s719 = scalar_lea.vmem %s207, 8
      %v720 = vld [vmem:[%s719] sm:$0xf]
      %v721 = vld [vmem:[%s719 + $0x8] sm:$0xf]
      %v722 = vld [vmem:[%s719 + $0x10] sm:$0xf]
      %v723 = vld [vmem:[%s719 + $0x18] sm:$0xf]
      %v724 = vld [vmem:[%s719 + $0x20] sm:$0xf]
      %v725 = vld [vmem:[%s719 + $0x28] sm:$0xf]
      %v726 = vld [vmem:[%s719 + $0x30] sm:$0xf]
      %v727 = vld [vmem:[%s719 + $0x38] sm:$0xf]
      %s728 = scalar_lea.vmem %s1, 24
      %v729 = vld [vmem:[%s728] sm:$0xf]
      %v730 = vld [vmem:[%s728 + $0x4] sm:$0xf]
      %v739 = vunpack.c.l.b16 %v720
      %v740 = vunpack.c.l.b16 %v721
      %v741 = vunpack.c.l.b16 %v722
      %v742 = vunpack.c.l.b16 %v723
      %v743 = vunpack.c.l.b16 %v724
      %v744 = vunpack.c.l.b16 %v725
      %v745 = vunpack.c.l.b16 %v726
      %v746 = vunpack.c.l.b16 %v727
      %v747 = vpack.c.b16 %v740, %v739
      %v748 = vpack.c.b16 %v742, %v741
      %v749 = vpack.c.b16 %v744, %v743
      %v750 = vpack.c.b16 %v746, %v745
      %v753 = vunpack.c.l.b16 %v729
      %v754 = vunpack.c.l.b16 %v730
      %v755 = vpack.c.b16 %v754, %v753
      %v758 = vsel %vm373, %v747, 0
      %v761 = vsel %vm373, %v748, 0
      %v764 = vsel %vm373, %v749, 0
      %v767 = vsel %vm373, %v750, 0
      %769 = vmatprep.subr.bf16.mxu0 0
      %770 = vmatpush1.bf16.msra.mxu0 0
      %771 = vmatprep.subr.bf16.mxu0 0
      %772 = vmatpush1.bf16.msra.mxu0 0
      %773 = vmatprep.subr.bf16.mxu0 0
      %774 = vmatpush1.bf16.msra.mxu0 0
      %775 = vmatprep.subr.bf16.mxu0 0
      %776 = vmatpush1.bf16.msra.mxu0 0
      %777 = vmatprep.subr.bf16.mxu0 0
      %778 = vmatpush1.bf16.msra.mxu0 0
      %779 = vmatprep.subr.bf16.mxu0 0
      %780 = vmatpush1.bf16.msra.mxu0 0
      %781 = vmatprep.subr.bf16.mxu0 0
      %782 = vmatpush1.bf16.msra.mxu0 0
      %783 = vmatprep.subr.bf16.mxu0 0
      %784 = vmatpush1.bf16.msra.mxu0 %v755
      %785 = vmatprep.subr.bf16.mxu0 0
      %786 = vmatpush2.bf16.msra.mxu0 0
      %787 = vmatprep.subr.bf16.mxu0 0
      %788 = vmatpush2.bf16.msra.mxu0 0
      %789 = vmatprep.subr.bf16.mxu0 0
      %790 = vmatpush2.bf16.msra.mxu0 0
      %791 = vmatprep.subr.bf16.mxu0 0
      %792 = vmatpush2.bf16.msra.mxu0 0
      %793 = vmatprep.subr.bf16.mxu0 0
      %794 = vmatpush2.bf16.msra.mxu0 0
      %795 = vmatprep.subr.bf16.mxu0 0
      %796 = vmatpush2.bf16.msra.mxu0 0
      %797 = vmatprep.subr.bf16.mxu0 0
      %798 = vmatpush2.bf16.msra.mxu0 0
      %799 = vmatprep.subr.bf16.mxu0 0
      %800 = vmatpush2.bf16.msra.mxu0 0
      %801 = vmatprep.mubr.bf16.mxu0 0
      %802 = vmatmul.mubr.bf16.gmra.mxu0 %v758
      %v803 = vpop.f32.mrf.mxu0
      %v804 = vadd.f32 0.0, %v803
      %v805 = vpop.f32.mrf.mxu0
      %v806 = vpop.f32.mrf.mxu0
      %v807 = vadd.f32 0.0, %v806
      %v808 = vpop.f32.mrf.mxu0
      %809 = vmatprep.mubr.bf16.mxu0 0
      %810 = vmatmul.mubr.bf16.gmra.mxu0 %v761
      %v811 = vpop.f32.mrf.mxu0
      %v812 = vadd.f32 0.0, %v811
      %v813 = vpop.f32.mrf.mxu0
      %v814 = vpop.f32.mrf.mxu0
      %v815 = vadd.f32 0.0, %v814
      %v816 = vpop.f32.mrf.mxu0
      %817 = vmatprep.mubr.bf16.mxu0 0
      %818 = vmatmul.mubr.bf16.gmra.mxu0 %v764
      %v819 = vpop.f32.mrf.mxu0
      %v820 = vadd.f32 0.0, %v819
      %v821 = vpop.f32.mrf.mxu0
      %v822 = vpop.f32.mrf.mxu0
      %v823 = vadd.f32 0.0, %v822
      %v824 = vpop.f32.mrf.mxu0
      %825 = vmatprep.mubr.bf16.mxu0 0
      %826 = vmatmul.mubr.bf16.gmra.mxu0 %v767
      %v827 = vpop.f32.mrf.mxu0
      %v828 = vadd.f32 0.0, %v827
      %v829 = vpop.f32.mrf.mxu0
      %v830 = vpop.f32.mrf.mxu0
      %v831 = vadd.f32 0.0, %v830
      %v832 = vpop.f32.mrf.mxu0
      %833 = vdwg.mxu0
      %v834 = vadd.f32 %v711, %v804
      %v835 = vadd.f32 %v712, %v807
      %v836 = vadd.f32 %v713, %v812
      %v837 = vadd.f32 %v714, %v815
      %v838 = vadd.f32 %v715, %v820
      %v839 = vadd.f32 %v716, %v823
      %v840 = vadd.f32 %v717, %v828
      %v841 = vadd.f32 %v718, %v831
      %v842 = vld [vmem:[%s719] sm:$0xf]
      %v843 = vld [vmem:[%s719 + $0x4] sm:$0x1]
      %v844 = vld [vmem:[%s719 + $0x8] sm:$0xf]
      %v845 = vld [vmem:[%s719 + $0xc] sm:$0x1]
      %v846 = vld [vmem:[%s719 + $0x10] sm:$0xf]
      %v847 = vld [vmem:[%s719 + $0x14] sm:$0x1]
      %v848 = vld [vmem:[%s719 + $0x18] sm:$0xf]
      %v849 = vld [vmem:[%s719 + $0x1c] sm:$0x1]
      %v850 = vld [vmem:[%s719 + $0x20] sm:$0xf]
      %v851 = vld [vmem:[%s719 + $0x24] sm:$0x1]
      %v852 = vld [vmem:[%s719 + $0x28] sm:$0xf]
      %v853 = vld [vmem:[%s719 + $0x2c] sm:$0x1]
      %v854 = vld [vmem:[%s719 + $0x30] sm:$0xf]
      %v855 = vld [vmem:[%s719 + $0x34] sm:$0x1]
      %v856 = vld [vmem:[%s719 + $0x38] sm:$0xf]
      %v857 = vld [vmem:[%s719 + $0x3c] sm:$0x1]
      %v859 = vshrl.u32 %v842, 16
      %v861 = vrot.slane %v859, 4
      %v862 = vshll.u32 %v842, 16
      %v864 = vrot.slane %v862, 5
      %v865 = vor.u32 %v861, %v864
      %v866 = vrot.slane %v865, 4
      %v868 = vshll.u32 %v843, 16
      %v870 = vrot.slane %v868, 5
      %v871 = vsel %vm239, %v866, %v870
      %v873 = vshrl.u32 %v844, 16
      %v875 = vrot.slane %v873, 4
      %v876 = vshll.u32 %v844, 16
      %v878 = vrot.slane %v876, 5
      %v879 = vor.u32 %v875, %v878
      %v880 = vrot.slane %v879, 4
      %v882 = vshll.u32 %v845, 16
      %v884 = vrot.slane %v882, 5
      %v885 = vsel %vm239, %v880, %v884
      %v887 = vshrl.u32 %v846, 16
      %v889 = vrot.slane %v887, 4
      %v890 = vshll.u32 %v846, 16
      %v892 = vrot.slane %v890, 5
      %v893 = vor.u32 %v889, %v892
      %v894 = vrot.slane %v893, 4
      %v896 = vshll.u32 %v847, 16
      %v898 = vrot.slane %v896, 5
      %v899 = vsel %vm239, %v894, %v898
      %v901 = vshrl.u32 %v848, 16
      %v903 = vrot.slane %v901, 4
      %v904 = vshll.u32 %v848, 16
      %v906 = vrot.slane %v904, 5
      %v907 = vor.u32 %v903, %v906
      %v908 = vrot.slane %v907, 4
      %v910 = vshll.u32 %v849, 16
      %v912 = vrot.slane %v910, 5
      %v913 = vsel %vm239, %v908, %v912
      %v915 = vshrl.u32 %v850, 16
      %v917 = vrot.slane %v915, 4
      %v918 = vshll.u32 %v850, 16
      %v920 = vrot.slane %v918, 5
      %v921 = vor.u32 %v917, %v920
      %v922 = vrot.slane %v921, 4
      %v924 = vshll.u32 %v851, 16
      %v926 = vrot.slane %v924, 5
      %v927 = vsel %vm239, %v922, %v926
      %v929 = vshrl.u32 %v852, 16
      %v931 = vrot.slane %v929, 4
      %v932 = vshll.u32 %v852, 16
      %v934 = vrot.slane %v932, 5
      %v935 = vor.u32 %v931, %v934
      %v936 = vrot.slane %v935, 4
      %v938 = vshll.u32 %v853, 16
      %v940 = vrot.slane %v938, 5
      %v941 = vsel %vm239, %v936, %v940
      %v943 = vshrl.u32 %v854, 16
      %v945 = vrot.slane %v943, 4
      %v946 = vshll.u32 %v854, 16
      %v948 = vrot.slane %v946, 5
      %v949 = vor.u32 %v945, %v948
      %v950 = vrot.slane %v949, 4
      %v952 = vshll.u32 %v855, 16
      %v954 = vrot.slane %v952, 5
      %v955 = vsel %vm239, %v950, %v954
      %v957 = vshrl.u32 %v856, 16
      %v959 = vrot.slane %v957, 4
      %v960 = vshll.u32 %v856, 16
      %v962 = vrot.slane %v960, 5
      %v963 = vor.u32 %v959, %v962
      %v964 = vrot.slane %v963, 4
      %v966 = vshll.u32 %v857, 16
      %v968 = vrot.slane %v966, 5
      %v969 = vsel %vm239, %v964, %v968
      %s970 = scalar_lea.vmem %s1, 32
      %v971 = vld [vmem:[%s970] sm:$0xf]
      %v972 = vld [vmem:[%s970 + $0x4] sm:$0xf]
      %v973 = vunpack.c.l.b16 %v871
      %v974 = vunpack.c.l.b16 %v885
      %v975 = vunpack.c.l.b16 %v899
      %v976 = vunpack.c.l.b16 %v913
      %v977 = vunpack.c.l.b16 %v927
      %v978 = vunpack.c.l.b16 %v941
      %v979 = vunpack.c.l.b16 %v955
      %v980 = vunpack.c.l.b16 %v969
      %v981 = vpack.c.b16 %v974, %v973
      %v982 = vpack.c.b16 %v976, %v975
      %v983 = vpack.c.b16 %v978, %v977
      %v984 = vpack.c.b16 %v980, %v979
      %v987 = vunpack.c.l.b16 %v971
      %v988 = vunpack.c.l.b16 %v972
      %v989 = vpack.c.b16 %v988, %v987
      %v992 = vsel %vm373, %v981, 0
      %v995 = vsel %vm373, %v982, 0
      %v998 = vsel %vm373, %v983, 0
      %v1001 = vsel %vm373, %v984, 0
      %1003 = vmatprep.subr.bf16.mxu0 0
      %1004 = vmatpush1.bf16.msra.mxu0 0
      %1005 = vmatprep.subr.bf16.mxu0 0
      %1006 = vmatpush1.bf16.msra.mxu0 0
      %1007 = vmatprep.subr.bf16.mxu0 0
      %1008 = vmatpush1.bf16.msra.mxu0 0
      %1009 = vmatprep.subr.bf16.mxu0 0
      %1010 = vmatpush1.bf16.msra.mxu0 0
      %1011 = vmatprep.subr.bf16.mxu0 0
      %1012 = vmatpush1.bf16.msra.mxu0 0
      %1013 = vmatprep.subr.bf16.mxu0 0
      %1014 = vmatpush1.bf16.msra.mxu0 0
      %1015 = vmatprep.subr.bf16.mxu0 0
      %1016 = vmatpush1.bf16.msra.mxu0 0
      %1017 = vmatprep.subr.bf16.mxu0 0
      %1018 = vmatpush1.bf16.msra.mxu0 %v989
      %1019 = vmatprep.subr.bf16.mxu0 0
      %1020 = vmatpush2.bf16.msra.mxu0 0
      %1021 = vmatprep.subr.bf16.mxu0 0
      %1022 = vmatpush2.bf16.msra.mxu0 0
      %1023 = vmatprep.subr.bf16.mxu0 0
      %1024 = vmatpush2.bf16.msra.mxu0 0
      %1025 = vmatprep.subr.bf16.mxu0 0
      %1026 = vmatpush2.bf16.msra.mxu0 0
      %1027 = vmatprep.subr.bf16.mxu0 0
      %1028 = vmatpush2.bf16.msra.mxu0 0
      %1029 = vmatprep.subr.bf16.mxu0 0
      %1030 = vmatpush2.bf16.msra.mxu0 0
      %1031 = vmatprep.subr.bf16.mxu0 0
      %1032 = vmatpush2.bf16.msra.mxu0 0
      %1033 = vmatprep.subr.bf16.mxu0 0
      %1034 = vmatpush2.bf16.msra.mxu0 0
      %1035 = vmatprep.mubr.bf16.mxu0 0
      %1036 = vmatmul.mubr.bf16.gmra.mxu0 %v992
      %v1037 = vpop.f32.mrf.mxu0
      %v1038 = vadd.f32 0.0, %v1037
      %v1039 = vpop.f32.mrf.mxu0
      %v1040 = vpop.f32.mrf.mxu0
      %v1041 = vadd.f32 0.0, %v1040
      %v1042 = vpop.f32.mrf.mxu0
      %1043 = vmatprep.mubr.bf16.mxu0 0
      %1044 = vmatmul.mubr.bf16.gmra.mxu0 %v995
      %v1045 = vpop.f32.mrf.mxu0
      %v1046 = vadd.f32 0.0, %v1045
      %v1047 = vpop.f32.mrf.mxu0
      %v1048 = vpop.f32.mrf.mxu0
      %v1049 = vadd.f32 0.0, %v1048
      %v1050 = vpop.f32.mrf.mxu0
      %1051 = vmatprep.mubr.bf16.mxu0 0
      %1052 = vmatmul.mubr.bf16.gmra.mxu0 %v998
      %v1053 = vpop.f32.mrf.mxu0
      %v1054 = vadd.f32 0.0, %v1053
      %v1055 = vpop.f32.mrf.mxu0
      %v1056 = vpop.f32.mrf.mxu0
      %v1057 = vadd.f32 0.0, %v1056
      %v1058 = vpop.f32.mrf.mxu0
      %1059 = vmatprep.mubr.bf16.mxu0 0
      %1060 = vmatmul.mubr.bf16.gmra.mxu0 %v1001
      %v1061 = vpop.f32.mrf.mxu0
      %v1062 = vadd.f32 0.0, %v1061
      %v1063 = vpop.f32.mrf.mxu0
      %v1064 = vpop.f32.mrf.mxu0
      %v1065 = vadd.f32 0.0, %v1064
      %v1066 = vpop.f32.mrf.mxu0
      %1067 = vdwg.mxu0
      %v1068 = vadd.f32 %v834, %v1038
      %v1069 = vadd.f32 %v835, %v1041
      %v1070 = vadd.f32 %v836, %v1046
      %v1071 = vadd.f32 %v837, %v1049
      %v1072 = vadd.f32 %v838, %v1054
      %v1073 = vadd.f32 %v839, %v1057
      %v1074 = vadd.f32 %v840, %v1062
      %v1075 = vadd.f32 %v841, %v1065
      %v1076 = vld [vmem:[%s719] sm:$0xe]
      %v1077 = vld [vmem:[%s719 + $0x8] sm:$0xe]
      %v1078 = vld [vmem:[%s719 + $0x10] sm:$0xe]
      %v1079 = vld [vmem:[%s719 + $0x18] sm:$0xe]
      %v1080 = vld [vmem:[%s719 + $0x20] sm:$0xe]
      %v1081 = vld [vmem:[%s719 + $0x28] sm:$0xe]
      %v1082 = vld [vmem:[%s719 + $0x30] sm:$0xe]
      %v1083 = vld [vmem:[%s719 + $0x38] sm:$0xe]
      %v1100 = vrot.slane %v1076, 5
      %v1101 = vrot.slane %v1100, 4
      %v1102 = vrot.slane %v843, 5
      %v1103 = vsel %vm580, %v1101, %v1102
      %v1104 = vrot.slane %v1077, 5
      %v1105 = vrot.slane %v1104, 4
      %v1106 = vrot.slane %v845, 5
      %v1107 = vsel %vm580, %v1105, %v1106
      %v1108 = vrot.slane %v1078, 5
      %v1109 = vrot.slane %v1108, 4
      %v1110 = vrot.slane %v847, 5
      %v1111 = vsel %vm580, %v1109, %v1110
      %v1112 = vrot.slane %v1079, 5
      %v1113 = vrot.slane %v1112, 4
      %v1114 = vrot.slane %v849, 5
      %v1115 = vsel %vm580, %v1113, %v1114
      %v1116 = vrot.slane %v1080, 5
      %v1117 = vrot.slane %v1116, 4
      %v1118 = vrot.slane %v851, 5
      %v1119 = vsel %vm580, %v1117, %v1118
      %v1120 = vrot.slane %v1081, 5
      %v1121 = vrot.slane %v1120, 4
      %v1122 = vrot.slane %v853, 5
      %v1123 = vsel %vm580, %v1121, %v1122
      %v1124 = vrot.slane %v1082, 5
      %v1125 = vrot.slane %v1124, 4
      %v1126 = vrot.slane %v855, 5
      %v1127 = vsel %vm580, %v1125, %v1126
      %v1128 = vrot.slane %v1083, 5
      %v1129 = vrot.slane %v1128, 4
      %v1130 = vrot.slane %v857, 5
      %v1131 = vsel %vm580, %v1129, %v1130
      %s1132 = scalar_lea.vmem %s1, 40
      %v1133 = vld [vmem:[%s1132] sm:$0xf]
      %v1134 = vld [vmem:[%s1132 + $0x4] sm:$0xf]
      %v1135 = vunpack.c.l.b16 %v1103
      %v1136 = vunpack.c.l.b16 %v1107
      %v1137 = vunpack.c.l.b16 %v1111
      %v1138 = vunpack.c.l.b16 %v1115
      %v1139 = vunpack.c.l.b16 %v1119
      %v1140 = vunpack.c.l.b16 %v1123
      %v1141 = vunpack.c.l.b16 %v1127
      %v1142 = vunpack.c.l.b16 %v1131
      %v1143 = vpack.c.b16 %v1136, %v1135
      %v1144 = vpack.c.b16 %v1138, %v1137
      %v1145 = vpack.c.b16 %v1140, %v1139
      %v1146 = vpack.c.b16 %v1142, %v1141
      %v1149 = vunpack.c.l.b16 %v1133
      %v1150 = vunpack.c.l.b16 %v1134
      %v1151 = vpack.c.b16 %v1150, %v1149
      %v1154 = vsel %vm373, %v1143, 0
      %v1157 = vsel %vm373, %v1144, 0
      %v1160 = vsel %vm373, %v1145, 0
      %v1163 = vsel %vm373, %v1146, 0
      %1165 = vmatprep.subr.bf16.mxu0 0
      %1166 = vmatpush1.bf16.msra.mxu0 0
      %1167 = vmatprep.subr.bf16.mxu0 0
      %1168 = vmatpush1.bf16.msra.mxu0 0
      %1169 = vmatprep.subr.bf16.mxu0 0
      %1170 = vmatpush1.bf16.msra.mxu0 0
      %1171 = vmatprep.subr.bf16.mxu0 0
      %1172 = vmatpush1.bf16.msra.mxu0 0
      %1173 = vmatprep.subr.bf16.mxu0 0
      %1174 = vmatpush1.bf16.msra.mxu0 0
      %1175 = vmatprep.subr.bf16.mxu0 0
      %1176 = vmatpush1.bf16.msra.mxu0 0
      %1177 = vmatprep.subr.bf16.mxu0 0
      %1178 = vmatpush1.bf16.msra.mxu0 0
      %1179 = vmatprep.subr.bf16.mxu0 0
      %1180 = vmatpush1.bf16.msra.mxu0 %v1151
      %1181 = vmatprep.subr.bf16.mxu0 0
      %1182 = vmatpush2.bf16.msra.mxu0 0
      %1183 = vmatprep.subr.bf16.mxu0 0
      %1184 = vmatpush2.bf16.msra.mxu0 0
      %1185 = vmatprep.subr.bf16.mxu0 0
      %1186 = vmatpush2.bf16.msra.mxu0 0
      %1187 = vmatprep.subr.bf16.mxu0 0
      %1188 = vmatpush2.bf16.msra.mxu0 0
      %1189 = vmatprep.subr.bf16.mxu0 0
      %1190 = vmatpush2.bf16.msra.mxu0 0
      %1191 = vmatprep.subr.bf16.mxu0 0
      %1192 = vmatpush2.bf16.msra.mxu0 0
      %1193 = vmatprep.subr.bf16.mxu0 0
      %1194 = vmatpush2.bf16.msra.mxu0 0
      %1195 = vmatprep.subr.bf16.mxu0 0
      %1196 = vmatpush2.bf16.msra.mxu0 0
      %1197 = vmatprep.mubr.bf16.mxu0 0
      %1198 = vmatmul.mubr.bf16.gmra.mxu0 %v1154
      %v1199 = vpop.f32.mrf.mxu0
      %v1200 = vadd.f32 0.0, %v1199
      %v1201 = vpop.f32.mrf.mxu0
      %v1202 = vpop.f32.mrf.mxu0
      %v1203 = vadd.f32 0.0, %v1202
      %v1204 = vpop.f32.mrf.mxu0
      %1205 = vmatprep.mubr.bf16.mxu0 0
      %1206 = vmatmul.mubr.bf16.gmra.mxu0 %v1157
      %v1207 = vpop.f32.mrf.mxu0
      %v1208 = vadd.f32 0.0, %v1207
      %v1209 = vpop.f32.mrf.mxu0
      %v1210 = vpop.f32.mrf.mxu0
      %v1211 = vadd.f32 0.0, %v1210
      %v1212 = vpop.f32.mrf.mxu0
      %1213 = vmatprep.mubr.bf16.mxu0 0
      %1214 = vmatmul.mubr.bf16.gmra.mxu0 %v1160
      %v1215 = vpop.f32.mrf.mxu0
      %v1216 = vadd.f32 0.0, %v1215
      %v1217 = vpop.f32.mrf.mxu0
      %v1218 = vpop.f32.mrf.mxu0
      %v1219 = vadd.f32 0.0, %v1218
      %v1220 = vpop.f32.mrf.mxu0
      %1221 = vmatprep.mubr.bf16.mxu0 0
      %1222 = vmatmul.mubr.bf16.gmra.mxu0 %v1163
      %v1223 = vpop.f32.mrf.mxu0
      %v1224 = vadd.f32 0.0, %v1223
      %v1225 = vpop.f32.mrf.mxu0
      %v1226 = vpop.f32.mrf.mxu0
      %v1227 = vadd.f32 0.0, %v1226
      %v1228 = vpop.f32.mrf.mxu0
      %1229 = vdwg.mxu0
      %v1230 = vadd.f32 %v1068, %v1200
      %v1231 = vadd.f32 %v1069, %v1203
      %v1232 = vadd.f32 %v1070, %v1208
      %v1233 = vadd.f32 %v1071, %v1211
      %v1234 = vadd.f32 %v1072, %v1216
      %v1235 = vadd.f32 %v1073, %v1219
      %v1236 = vadd.f32 %v1074, %v1224
      %v1237 = vadd.f32 %v1075, %v1227
      %s1238 = scalar_lea.vmem %s207, 16
      %v1239 = vld [vmem:[%s1238] sm:$0xf]
      %v1240 = vld [vmem:[%s1238 + $0x8] sm:$0xf]
      %v1241 = vld [vmem:[%s1238 + $0x10] sm:$0xf]
      %v1242 = vld [vmem:[%s1238 + $0x18] sm:$0xf]
      %v1243 = vld [vmem:[%s1238 + $0x20] sm:$0xf]
      %v1244 = vld [vmem:[%s1238 + $0x28] sm:$0xf]
      %v1245 = vld [vmem:[%s1238 + $0x30] sm:$0xf]
      %v1246 = vld [vmem:[%s1238 + $0x38] sm:$0xf]
      %s1247 = scalar_lea.vmem %s1, 48
      %v1248 = vld [vmem:[%s1247] sm:$0xf]
      %v1249 = vld [vmem:[%s1247 + $0x4] sm:$0xf]
      %v1258 = vunpack.c.l.b16 %v1239
      %v1259 = vunpack.c.l.b16 %v1240
      %v1260 = vunpack.c.l.b16 %v1241
      %v1261 = vunpack.c.l.b16 %v1242
      %v1262 = vunpack.c.l.b16 %v1243
      %v1263 = vunpack.c.l.b16 %v1244
      %v1264 = vunpack.c.l.b16 %v1245
      %v1265 = vunpack.c.l.b16 %v1246
      %v1266 = vpack.c.b16 %v1259, %v1258
      %v1267 = vpack.c.b16 %v1261, %v1260
      %v1268 = vpack.c.b16 %v1263, %v1262
      %v1269 = vpack.c.b16 %v1265, %v1264
      %v1272 = vunpack.c.l.b16 %v1248
      %v1273 = vunpack.c.l.b16 %v1249
      %v1274 = vpack.c.b16 %v1273, %v1272
      %v1277 = vsel %vm373, %v1266, 0
      %v1280 = vsel %vm373, %v1267, 0
      %v1283 = vsel %vm373, %v1268, 0
      %v1286 = vsel %vm373, %v1269, 0
      %1288 = vmatprep.subr.bf16.mxu0 0
      %1289 = vmatpush1.bf16.msra.mxu0 0
      %1290 = vmatprep.subr.bf16.mxu0 0
      %1291 = vmatpush1.bf16.msra.mxu0 0
      %1292 = vmatprep.subr.bf16.mxu0 0
      %1293 = vmatpush1.bf16.msra.mxu0 0
      %1294 = vmatprep.subr.bf16.mxu0 0
      %1295 = vmatpush1.bf16.msra.mxu0 0
      %1296 = vmatprep.subr.bf16.mxu0 0
      %1297 = vmatpush1.bf16.msra.mxu0 0
      %1298 = vmatprep.subr.bf16.mxu0 0
      %1299 = vmatpush1.bf16.msra.mxu0 0
      %1300 = vmatprep.subr.bf16.mxu0 0
      %1301 = vmatpush1.bf16.msra.mxu0 0
      %1302 = vmatprep.subr.bf16.mxu0 0
      %1303 = vmatpush1.bf16.msra.mxu0 %v1274
      %1304 = vmatprep.subr.bf16.mxu0 0
      %1305 = vmatpush2.bf16.msra.mxu0 0
      %1306 = vmatprep.subr.bf16.mxu0 0
      %1307 = vmatpush2.bf16.msra.mxu0 0
      %1308 = vmatprep.subr.bf16.mxu0 0
      %1309 = vmatpush2.bf16.msra.mxu0 0
      %1310 = vmatprep.subr.bf16.mxu0 0
      %1311 = vmatpush2.bf16.msra.mxu0 0
      %1312 = vmatprep.subr.bf16.mxu0 0
      %1313 = vmatpush2.bf16.msra.mxu0 0
      %1314 = vmatprep.subr.bf16.mxu0 0
      %1315 = vmatpush2.bf16.msra.mxu0 0
      %1316 = vmatprep.subr.bf16.mxu0 0
      %1317 = vmatpush2.bf16.msra.mxu0 0
      %1318 = vmatprep.subr.bf16.mxu0 0
      %1319 = vmatpush2.bf16.msra.mxu0 0
      %1320 = vmatprep.mubr.bf16.mxu0 0
      %1321 = vmatmul.mubr.bf16.gmra.mxu0 %v1277
      %v1322 = vpop.f32.mrf.mxu0
      %v1323 = vadd.f32 0.0, %v1322
      %v1324 = vpop.f32.mrf.mxu0
      %v1325 = vpop.f32.mrf.mxu0
      %v1326 = vadd.f32 0.0, %v1325
      %v1327 = vpop.f32.mrf.mxu0
      %1328 = vmatprep.mubr.bf16.mxu0 0
      %1329 = vmatmul.mubr.bf16.gmra.mxu0 %v1280
      %v1330 = vpop.f32.mrf.mxu0
      %v1331 = vadd.f32 0.0, %v1330
      %v1332 = vpop.f32.mrf.mxu0
      %v1333 = vpop.f32.mrf.mxu0
      %v1334 = vadd.f32 0.0, %v1333
      %v1335 = vpop.f32.mrf.mxu0
      %1336 = vmatprep.mubr.bf16.mxu0 0
      %1337 = vmatmul.mubr.bf16.gmra.mxu0 %v1283
      %v1338 = vpop.f32.mrf.mxu0
      %v1339 = vadd.f32 0.0, %v1338
      %v1340 = vpop.f32.mrf.mxu0
      %v1341 = vpop.f32.mrf.mxu0
      %v1342 = vadd.f32 0.0, %v1341
      %v1343 = vpop.f32.mrf.mxu0
      %1344 = vmatprep.mubr.bf16.mxu0 0
      %1345 = vmatmul.mubr.bf16.gmra.mxu0 %v1286
      %v1346 = vpop.f32.mrf.mxu0
      %v1347 = vadd.f32 0.0, %v1346
      %v1348 = vpop.f32.mrf.mxu0
      %v1349 = vpop.f32.mrf.mxu0
      %v1350 = vadd.f32 0.0, %v1349
      %v1351 = vpop.f32.mrf.mxu0
      %1352 = vdwg.mxu0
      %v1353 = vadd.f32 %v1230, %v1323
      %v1354 = vadd.f32 %v1231, %v1326
      %v1355 = vadd.f32 %v1232, %v1331
      %v1356 = vadd.f32 %v1233, %v1334
      %v1357 = vadd.f32 %v1234, %v1339
      %v1358 = vadd.f32 %v1235, %v1342
      %v1359 = vadd.f32 %v1236, %v1347
      %v1360 = vadd.f32 %v1237, %v1350
      %v1361 = vld [vmem:[%s1238] sm:$0xf]
      %v1362 = vld [vmem:[%s1238 + $0x4] sm:$0x1]
      %v1363 = vld [vmem:[%s1238 + $0x8] sm:$0xf]
      %v1364 = vld [vmem:[%s1238 + $0xc] sm:$0x1]
      %v1365 = vld [vmem:[%s1238 + $0x10] sm:$0xf]
      %v1366 = vld [vmem:[%s1238 + $0x14] sm:$0x1]
      %v1367 = vld [vmem:[%s1238 + $0x18] sm:$0xf]
      %v1368 = vld [vmem:[%s1238 + $0x1c] sm:$0x1]
      %v1369 = vld [vmem:[%s1238 + $0x20] sm:$0xf]
      %v1370 = vld [vmem:[%s1238 + $0x24] sm:$0x1]
      %v1371 = vld [vmem:[%s1238 + $0x28] sm:$0xf]
      %v1372 = vld [vmem:[%s1238 + $0x2c] sm:$0x1]
      %v1373 = vld [vmem:[%s1238 + $0x30] sm:$0xf]
      %v1374 = vld [vmem:[%s1238 + $0x34] sm:$0x1]
      %v1375 = vld [vmem:[%s1238 + $0x38] sm:$0xf]
      %v1376 = vld [vmem:[%s1238 + $0x3c] sm:$0x1]
      %v1378 = vshrl.u32 %v1361, 16
      %v1380 = vrot.slane %v1378, 4
      %v1381 = vshll.u32 %v1361, 16
      %v1383 = vrot.slane %v1381, 5
      %v1384 = vor.u32 %v1380, %v1383
      %v1385 = vrot.slane %v1384, 4
      %v1387 = vshll.u32 %v1362, 16
      %v1389 = vrot.slane %v1387, 5
      %v1390 = vsel %vm239, %v1385, %v1389
      %v1392 = vshrl.u32 %v1363, 16
      %v1394 = vrot.slane %v1392, 4
      %v1395 = vshll.u32 %v1363, 16
      %v1397 = vrot.slane %v1395, 5
      %v1398 = vor.u32 %v1394, %v1397
      %v1399 = vrot.slane %v1398, 4
      %v1401 = vshll.u32 %v1364, 16
      %v1403 = vrot.slane %v1401, 5
      %v1404 = vsel %vm239, %v1399, %v1403
      %v1406 = vshrl.u32 %v1365, 16
      %v1408 = vrot.slane %v1406, 4
      %v1409 = vshll.u32 %v1365, 16
      %v1411 = vrot.slane %v1409, 5
      %v1412 = vor.u32 %v1408, %v1411
      %v1413 = vrot.slane %v1412, 4
      %v1415 = vshll.u32 %v1366, 16
      %v1417 = vrot.slane %v1415, 5
      %v1418 = vsel %vm239, %v1413, %v1417
      %v1420 = vshrl.u32 %v1367, 16
      %v1422 = vrot.slane %v1420, 4
      %v1423 = vshll.u32 %v1367, 16
      %v1425 = vrot.slane %v1423, 5
      %v1426 = vor.u32 %v1422, %v1425
      %v1427 = vrot.slane %v1426, 4
      %v1429 = vshll.u32 %v1368, 16
      %v1431 = vrot.slane %v1429, 5
      %v1432 = vsel %vm239, %v1427, %v1431
      %v1434 = vshrl.u32 %v1369, 16
      %v1436 = vrot.slane %v1434, 4
      %v1437 = vshll.u32 %v1369, 16
      %v1439 = vrot.slane %v1437, 5
      %v1440 = vor.u32 %v1436, %v1439
      %v1441 = vrot.slane %v1440, 4
      %v1443 = vshll.u32 %v1370, 16
      %v1445 = vrot.slane %v1443, 5
      %v1446 = vsel %vm239, %v1441, %v1445
      %v1448 = vshrl.u32 %v1371, 16
      %v1450 = vrot.slane %v1448, 4
      %v1451 = vshll.u32 %v1371, 16
      %v1453 = vrot.slane %v1451, 5
      %v1454 = vor.u32 %v1450, %v1453
      %v1455 = vrot.slane %v1454, 4
      %v1457 = vshll.u32 %v1372, 16
      %v1459 = vrot.slane %v1457, 5
      %v1460 = vsel %vm239, %v1455, %v1459
      %v1462 = vshrl.u32 %v1373, 16
      %v1464 = vrot.slane %v1462, 4
      %v1465 = vshll.u32 %v1373, 16
      %v1467 = vrot.slane %v1465, 5
      %v1468 = vor.u32 %v1464, %v1467
      %v1469 = vrot.slane %v1468, 4
      %v1471 = vshll.u32 %v1374, 16
      %v1473 = vrot.slane %v1471, 5
      %v1474 = vsel %vm239, %v1469, %v1473
      %v1476 = vshrl.u32 %v1375, 16
      %v1478 = vrot.slane %v1476, 4
      %v1479 = vshll.u32 %v1375, 16
      %v1481 = vrot.slane %v1479, 5
      %v1482 = vor.u32 %v1478, %v1481
      %v1483 = vrot.slane %v1482, 4
      %v1485 = vshll.u32 %v1376, 16
      %v1487 = vrot.slane %v1485, 5
      %v1488 = vsel %vm239, %v1483, %v1487
      %s1489 = scalar_lea.vmem %s1, 56
      %v1490 = vld [vmem:[%s1489] sm:$0xf]
      %v1491 = vld [vmem:[%s1489 + $0x4] sm:$0xf]
      %v1492 = vunpack.c.l.b16 %v1390
      %v1493 = vunpack.c.l.b16 %v1404
      %v1494 = vunpack.c.l.b16 %v1418
      %v1495 = vunpack.c.l.b16 %v1432
      %v1496 = vunpack.c.l.b16 %v1446
      %v1497 = vunpack.c.l.b16 %v1460
      %v1498 = vunpack.c.l.b16 %v1474
      %v1499 = vunpack.c.l.b16 %v1488
      %v1500 = vpack.c.b16 %v1493, %v1492
      %v1501 = vpack.c.b16 %v1495, %v1494
      %v1502 = vpack.c.b16 %v1497, %v1496
      %v1503 = vpack.c.b16 %v1499, %v1498
      %v1506 = vunpack.c.l.b16 %v1490
      %v1507 = vunpack.c.l.b16 %v1491
      %v1508 = vpack.c.b16 %v1507, %v1506
      %v1511 = vsel %vm373, %v1500, 0
      %v1514 = vsel %vm373, %v1501, 0
      %v1517 = vsel %vm373, %v1502, 0
      %v1520 = vsel %vm373, %v1503, 0
      %1522 = vmatprep.subr.bf16.mxu0 0
      %1523 = vmatpush1.bf16.msra.mxu0 0
      %1524 = vmatprep.subr.bf16.mxu0 0
      %1525 = vmatpush1.bf16.msra.mxu0 0
      %1526 = vmatprep.subr.bf16.mxu0 0
      %1527 = vmatpush1.bf16.msra.mxu0 0
      %1528 = vmatprep.subr.bf16.mxu0 0
      %1529 = vmatpush1.bf16.msra.mxu0 0
      %1530 = vmatprep.subr.bf16.mxu0 0
      %1531 = vmatpush1.bf16.msra.mxu0 0
      %1532 = vmatprep.subr.bf16.mxu0 0
      %1533 = vmatpush1.bf16.msra.mxu0 0
      %1534 = vmatprep.subr.bf16.mxu0 0
      %1535 = vmatpush1.bf16.msra.mxu0 0
      %1536 = vmatprep.subr.bf16.mxu0 0
      %1537 = vmatpush1.bf16.msra.mxu0 %v1508
      %1538 = vmatprep.subr.bf16.mxu0 0
      %1539 = vmatpush2.bf16.msra.mxu0 0
      %1540 = vmatprep.subr.bf16.mxu0 0
      %1541 = vmatpush2.bf16.msra.mxu0 0
      %1542 = vmatprep.subr.bf16.mxu0 0
      %1543 = vmatpush2.bf16.msra.mxu0 0
      %1544 = vmatprep.subr.bf16.mxu0 0
      %1545 = vmatpush2.bf16.msra.mxu0 0
      %1546 = vmatprep.subr.bf16.mxu0 0
      %1547 = vmatpush2.bf16.msra.mxu0 0
      %1548 = vmatprep.subr.bf16.mxu0 0
      %1549 = vmatpush2.bf16.msra.mxu0 0
      %1550 = vmatprep.subr.bf16.mxu0 0
      %1551 = vmatpush2.bf16.msra.mxu0 0
      %1552 = vmatprep.subr.bf16.mxu0 0
      %1553 = vmatpush2.bf16.msra.mxu0 0
      %1554 = vmatprep.mubr.bf16.mxu0 0
      %1555 = vmatmul.mubr.bf16.gmra.mxu0 %v1511
      %v1556 = vpop.f32.mrf.mxu0
      %v1557 = vadd.f32 0.0, %v1556
      %v1558 = vpop.f32.mrf.mxu0
      %v1559 = vpop.f32.mrf.mxu0
      %v1560 = vadd.f32 0.0, %v1559
      %v1561 = vpop.f32.mrf.mxu0
      %1562 = vmatprep.mubr.bf16.mxu0 0
      %1563 = vmatmul.mubr.bf16.gmra.mxu0 %v1514
      %v1564 = vpop.f32.mrf.mxu0
      %v1565 = vadd.f32 0.0, %v1564
      %v1566 = vpop.f32.mrf.mxu0
      %v1567 = vpop.f32.mrf.mxu0
      %v1568 = vadd.f32 0.0, %v1567
      %v1569 = vpop.f32.mrf.mxu0
      %1570 = vmatprep.mubr.bf16.mxu0 0
      %1571 = vmatmul.mubr.bf16.gmra.mxu0 %v1517
      %v1572 = vpop.f32.mrf.mxu0
      %v1573 = vadd.f32 0.0, %v1572
      %v1574 = vpop.f32.mrf.mxu0
      %v1575 = vpop.f32.mrf.mxu0
      %v1576 = vadd.f32 0.0, %v1575
      %v1577 = vpop.f32.mrf.mxu0
      %1578 = vmatprep.mubr.bf16.mxu0 0
      %1579 = vmatmul.mubr.bf16.gmra.mxu0 %v1520
      %v1580 = vpop.f32.mrf.mxu0
      %v1581 = vadd.f32 0.0, %v1580
      %v1582 = vpop.f32.mrf.mxu0
      %v1583 = vpop.f32.mrf.mxu0
      %v1584 = vadd.f32 0.0, %v1583
      %v1585 = vpop.f32.mrf.mxu0
      %1586 = vdwg.mxu0
      %v1587 = vadd.f32 %v1353, %v1557
      %v1588 = vadd.f32 %v1354, %v1560
      %v1589 = vadd.f32 %v1355, %v1565
      %v1590 = vadd.f32 %v1356, %v1568
      %v1591 = vadd.f32 %v1357, %v1573
      %v1592 = vadd.f32 %v1358, %v1576
      %v1593 = vadd.f32 %v1359, %v1581
      %v1594 = vadd.f32 %v1360, %v1584
      %v1595 = vld [vmem:[%s1238] sm:$0xe]
      %v1596 = vld [vmem:[%s1238 + $0x8] sm:$0xe]
      %v1597 = vld [vmem:[%s1238 + $0x10] sm:$0xe]
      %v1598 = vld [vmem:[%s1238 + $0x18] sm:$0xe]
      %v1599 = vld [vmem:[%s1238 + $0x20] sm:$0xe]
      %v1600 = vld [vmem:[%s1238 + $0x28] sm:$0xe]
      %v1601 = vld [vmem:[%s1238 + $0x30] sm:$0xe]
      %v1602 = vld [vmem:[%s1238 + $0x38] sm:$0xe]
      %v1619 = vrot.slane %v1595, 5
      %v1620 = vrot.slane %v1619, 4
      %v1621 = vrot.slane %v1362, 5
      %v1622 = vsel %vm580, %v1620, %v1621
      %v1623 = vrot.slane %v1596, 5
      %v1624 = vrot.slane %v1623, 4
      %v1625 = vrot.slane %v1364, 5
      %v1626 = vsel %vm580, %v1624, %v1625
      %v1627 = vrot.slane %v1597, 5
      %v1628 = vrot.slane %v1627, 4
      %v1629 = vrot.slane %v1366, 5
      %v1630 = vsel %vm580, %v1628, %v1629
      %v1631 = vrot.slane %v1598, 5
      %v1632 = vrot.slane %v1631, 4
      %v1633 = vrot.slane %v1368, 5
      %v1634 = vsel %vm580, %v1632, %v1633
      %v1635 = vrot.slane %v1599, 5
      %v1636 = vrot.slane %v1635, 4
      %v1637 = vrot.slane %v1370, 5
      %v1638 = vsel %vm580, %v1636, %v1637
      %v1639 = vrot.slane %v1600, 5
      %v1640 = vrot.slane %v1639, 4
      %v1641 = vrot.slane %v1372, 5
      %v1642 = vsel %vm580, %v1640, %v1641
      %v1643 = vrot.slane %v1601, 5
      %v1644 = vrot.slane %v1643, 4
      %v1645 = vrot.slane %v1374, 5
      %v1646 = vsel %vm580, %v1644, %v1645
      %v1647 = vrot.slane %v1602, 5
      %v1648 = vrot.slane %v1647, 4
      %v1649 = vrot.slane %v1376, 5
      %v1650 = vsel %vm580, %v1648, %v1649
      %s1651 = scalar_lea.vmem %s1, 64
      %v1652 = vld [vmem:[%s1651] sm:$0xf]
      %v1653 = vld [vmem:[%s1651 + $0x4] sm:$0xf]
      %v1654 = vunpack.c.l.b16 %v1622
      %v1655 = vunpack.c.l.b16 %v1626
      %v1656 = vunpack.c.l.b16 %v1630
      %v1657 = vunpack.c.l.b16 %v1634
      %v1658 = vunpack.c.l.b16 %v1638
      %v1659 = vunpack.c.l.b16 %v1642
      %v1660 = vunpack.c.l.b16 %v1646
      %v1661 = vunpack.c.l.b16 %v1650
      %v1662 = vpack.c.b16 %v1655, %v1654
      %v1663 = vpack.c.b16 %v1657, %v1656
      %v1664 = vpack.c.b16 %v1659, %v1658
      %v1665 = vpack.c.b16 %v1661, %v1660
      %v1668 = vunpack.c.l.b16 %v1652
      %v1669 = vunpack.c.l.b16 %v1653
      %v1670 = vpack.c.b16 %v1669, %v1668
      %v1673 = vsel %vm373, %v1662, 0
      %v1676 = vsel %vm373, %v1663, 0
      %v1679 = vsel %vm373, %v1664, 0
      %v1682 = vsel %vm373, %v1665, 0
      %1684 = vmatprep.subr.bf16.mxu0 0
      %1685 = vmatpush1.bf16.msra.mxu0 0
      %1686 = vmatprep.subr.bf16.mxu0 0
      %1687 = vmatpush1.bf16.msra.mxu0 0
      %1688 = vmatprep.subr.bf16.mxu0 0
      %1689 = vmatpush1.bf16.msra.mxu0 0
      %1690 = vmatprep.subr.bf16.mxu0 0
      %1691 = vmatpush1.bf16.msra.mxu0 0
      %1692 = vmatprep.subr.bf16.mxu0 0
      %1693 = vmatpush1.bf16.msra.mxu0 0
      %1694 = vmatprep.subr.bf16.mxu0 0
      %1695 = vmatpush1.bf16.msra.mxu0 0
      %1696 = vmatprep.subr.bf16.mxu0 0
      %1697 = vmatpush1.bf16.msra.mxu0 0
      %1698 = vmatprep.subr.bf16.mxu0 0
      %1699 = vmatpush1.bf16.msra.mxu0 %v1670
      %1700 = vmatprep.subr.bf16.mxu0 0
      %1701 = vmatpush2.bf16.msra.mxu0 0
      %1702 = vmatprep.subr.bf16.mxu0 0
      %1703 = vmatpush2.bf16.msra.mxu0 0
      %1704 = vmatprep.subr.bf16.mxu0 0
      %1705 = vmatpush2.bf16.msra.mxu0 0
      %1706 = vmatprep.subr.bf16.mxu0 0
      %1707 = vmatpush2.bf16.msra.mxu0 0
      %1708 = vmatprep.subr.bf16.mxu0 0
      %1709 = vmatpush2.bf16.msra.mxu0 0
      %1710 = vmatprep.subr.bf16.mxu0 0
      %1711 = vmatpush2.bf16.msra.mxu0 0
      %1712 = vmatprep.subr.bf16.mxu0 0
      %1713 = vmatpush2.bf16.msra.mxu0 0
      %1714 = vmatprep.subr.bf16.mxu0 0
      %1715 = vmatpush2.bf16.msra.mxu0 0
      %1716 = vmatprep.mubr.bf16.mxu0 0
      %1717 = vmatmul.mubr.bf16.gmra.mxu0 %v1673
      %v1718 = vpop.f32.mrf.mxu0
      %v1719 = vadd.f32 0.0, %v1718
      %v1720 = vpop.f32.mrf.mxu0
      %v1721 = vpop.f32.mrf.mxu0
      %v1722 = vadd.f32 0.0, %v1721
      %v1723 = vpop.f32.mrf.mxu0
      %1724 = vmatprep.mubr.bf16.mxu0 0
      %1725 = vmatmul.mubr.bf16.gmra.mxu0 %v1676
      %v1726 = vpop.f32.mrf.mxu0
      %v1727 = vadd.f32 0.0, %v1726
      %v1728 = vpop.f32.mrf.mxu0
      %v1729 = vpop.f32.mrf.mxu0
      %v1730 = vadd.f32 0.0, %v1729
      %v1731 = vpop.f32.mrf.mxu0
      %1732 = vmatprep.mubr.bf16.mxu0 0
      %1733 = vmatmul.mubr.bf16.gmra.mxu0 %v1679
      %v1734 = vpop.f32.mrf.mxu0
      %v1735 = vadd.f32 0.0, %v1734
      %v1736 = vpop.f32.mrf.mxu0
      %v1737 = vpop.f32.mrf.mxu0
      %v1738 = vadd.f32 0.0, %v1737
      %v1739 = vpop.f32.mrf.mxu0
      %1740 = vmatprep.mubr.bf16.mxu0 0
      %1741 = vmatmul.mubr.bf16.gmra.mxu0 %v1682
      %v1742 = vpop.f32.mrf.mxu0
      %v1743 = vadd.f32 0.0, %v1742
      %v1744 = vpop.f32.mrf.mxu0
      %v1745 = vpop.f32.mrf.mxu0
      %v1746 = vadd.f32 0.0, %v1745
      %v1747 = vpop.f32.mrf.mxu0
      %1748 = vdwg.mxu0
      %v1749 = vadd.f32 %v1587, %v1719
      %v1750 = vadd.f32 %v1588, %v1722
      %v1751 = vadd.f32 %v1589, %v1727
      %v1752 = vadd.f32 %v1590, %v1730
      %v1753 = vadd.f32 %v1591, %v1735
      %v1754 = vadd.f32 %v1592, %v1738
      %v1755 = vadd.f32 %v1593, %v1743
      %v1756 = vadd.f32 %v1594, %v1746
      %v1757 = vld [vmem:[%s212] sm:$0xf]
      %v1758 = vld [vmem:[%s212 + $0x4] sm:$0xf]
      %v1759 = vld [vmem:[%s212 + $0x8] sm:$0xf]
      %v1760 = vld [vmem:[%s212 + $0xc] sm:$0xf]
      %v1761 = vld [vmem:[%s212 + $0x10] sm:$0xf]
      %v1762 = vld [vmem:[%s212 + $0x14] sm:$0xf]
      %v1763 = vld [vmem:[%s212 + $0x18] sm:$0xf]
      %v1764 = vld [vmem:[%s212 + $0x1c] sm:$0xf]
      %v1765 = vld [vmem:[%s3] sm:$0xf]
      %v1766 = vld [vmem:[%s3 + $0x4] sm:$0xf]
      %v1775 = vunpack.c.l.b16 %v1757
      %v1776 = vunpack.c.l.b16 %v1758
      %v1777 = vunpack.c.l.b16 %v1759
      %v1778 = vunpack.c.l.b16 %v1760
      %v1779 = vunpack.c.l.b16 %v1761
      %v1780 = vunpack.c.l.b16 %v1762
      %v1781 = vunpack.c.l.b16 %v1763
      %v1782 = vunpack.c.l.b16 %v1764
      %v1783 = vpack.c.b16 %v1776, %v1775
      %v1784 = vpack.c.b16 %v1778, %v1777
      %v1785 = vpack.c.b16 %v1780, %v1779
      %v1786 = vpack.c.b16 %v1782, %v1781
      %v1789 = vunpack.c.l.b16 %v1765
      %v1790 = vunpack.c.l.b16 %v1766
      %v1791 = vpack.c.b16 %v1790, %v1789
      %v1794 = vsel %vm373, %v1783, 0
      %v1797 = vsel %vm373, %v1784, 0
      %v1800 = vsel %vm373, %v1785, 0
      %v1803 = vsel %vm373, %v1786, 0
      %1805 = vmatprep.subr.bf16.mxu0 0
      %1806 = vmatpush1.bf16.msra.mxu0 0
      %1807 = vmatprep.subr.bf16.mxu0 0
      %1808 = vmatpush1.bf16.msra.mxu0 0
      %1809 = vmatprep.subr.bf16.mxu0 0
      %1810 = vmatpush1.bf16.msra.mxu0 0
      %1811 = vmatprep.subr.bf16.mxu0 0
      %1812 = vmatpush1.bf16.msra.mxu0 0
      %1813 = vmatprep.subr.bf16.mxu0 0
      %1814 = vmatpush1.bf16.msra.mxu0 0
      %1815 = vmatprep.subr.bf16.mxu0 0
      %1816 = vmatpush1.bf16.msra.mxu0 0
      %1817 = vmatprep.subr.bf16.mxu0 0
      %1818 = vmatpush1.bf16.msra.mxu0 0
      %1819 = vmatprep.subr.bf16.mxu0 0
      %1820 = vmatpush1.bf16.msra.mxu0 %v1791
      %1821 = vmatprep.subr.bf16.mxu0 0
      %1822 = vmatpush2.bf16.msra.mxu0 0
      %1823 = vmatprep.subr.bf16.mxu0 0
      %1824 = vmatpush2.bf16.msra.mxu0 0
      %1825 = vmatprep.subr.bf16.mxu0 0
      %1826 = vmatpush2.bf16.msra.mxu0 0
      %1827 = vmatprep.subr.bf16.mxu0 0
      %1828 = vmatpush2.bf16.msra.mxu0 0
      %1829 = vmatprep.subr.bf16.mxu0 0
      %1830 = vmatpush2.bf16.msra.mxu0 0
      %1831 = vmatprep.subr.bf16.mxu0 0
      %1832 = vmatpush2.bf16.msra.mxu0 0
      %1833 = vmatprep.subr.bf16.mxu0 0
      %1834 = vmatpush2.bf16.msra.mxu0 0
      %1835 = vmatprep.subr.bf16.mxu0 0
      %1836 = vmatpush2.bf16.msra.mxu0 0
      %1837 = vmatprep.mubr.bf16.mxu0 0
      %1838 = vmatmul.mubr.bf16.gmra.mxu0 %v1794
      %v1839 = vpop.f32.mrf.mxu0
      %v1840 = vadd.f32 0.0, %v1839
      %v1841 = vpop.f32.mrf.mxu0
      %v1842 = vpop.f32.mrf.mxu0
      %v1843 = vadd.f32 0.0, %v1842
      %v1844 = vpop.f32.mrf.mxu0
      %1845 = vmatprep.mubr.bf16.mxu0 0
      %1846 = vmatmul.mubr.bf16.gmra.mxu0 %v1797
      %v1847 = vpop.f32.mrf.mxu0
      %v1848 = vadd.f32 0.0, %v1847
      %v1849 = vpop.f32.mrf.mxu0
      %v1850 = vpop.f32.mrf.mxu0
      %v1851 = vadd.f32 0.0, %v1850
      %v1852 = vpop.f32.mrf.mxu0
      %1853 = vmatprep.mubr.bf16.mxu0 0
      %1854 = vmatmul.mubr.bf16.gmra.mxu0 %v1800
      %v1855 = vpop.f32.mrf.mxu0
      %v1856 = vadd.f32 0.0, %v1855
      %v1857 = vpop.f32.mrf.mxu0
      %v1858 = vpop.f32.mrf.mxu0
      %v1859 = vadd.f32 0.0, %v1858
      %v1860 = vpop.f32.mrf.mxu0
      %1861 = vmatprep.mubr.bf16.mxu0 0
      %1862 = vmatmul.mubr.bf16.gmra.mxu0 %v1803
      %v1863 = vpop.f32.mrf.mxu0
      %v1864 = vadd.f32 0.0, %v1863
      %v1865 = vpop.f32.mrf.mxu0
      %v1866 = vpop.f32.mrf.mxu0
      %v1867 = vadd.f32 0.0, %v1866
      %v1868 = vpop.f32.mrf.mxu0
      %1869 = vdwg.mxu0
      %v1870 = vadd.f32 %v1749, %v1840
      %v1871 = vadd.f32 %v1750, %v1843
      %v1872 = vadd.f32 %v1751, %v1848
      %v1873 = vadd.f32 %v1752, %v1851
      %v1874 = vadd.f32 %v1753, %v1856
      %v1875 = vadd.f32 %v1754, %v1859
      %v1876 = vadd.f32 %v1755, %v1864
      %v1877 = vadd.f32 %v1756, %v1867
      %vm1878 = vcmask 64512
      %1879 = vst.msk [vmem:[%s217] sm:$0xff] %vm1878, %v1870
      %1880 = vst.msk [vmem:[%s217 + $0x8] sm:$0xff] %vm1878, %v1871
      %1881 = vst.msk [vmem:[%s217 + $0x10] sm:$0xff] %vm1878, %v1872
      %1882 = vst.msk [vmem:[%s217 + $0x18] sm:$0xff] %vm1878, %v1873
      %1883 = vst.msk [vmem:[%s217 + $0x20] sm:$0xff] %vm1878, %v1874
      %1884 = vst.msk [vmem:[%s217 + $0x28] sm:$0xff] %vm1878, %v1875
      %1885 = vst.msk [vmem:[%s217 + $0x30] sm:$0xff] %vm1878, %v1876
      %1886 = vst.msk [vmem:[%s217 + $0x38] sm:$0xff] %vm1878, %v1877
      %p1887 = scmp.lt.s32.totalorder %s15, 1
      %s1888 = scalar_select %p1887, %s15, 1
      %s1889 = smul.addr %s1888, 8
      %s1890 = smul.addr %s1889, 8
      %s1891 = scalar_lea.vmem %s4, %s1890
      // Predicated region
      $region37: #{block_forward.7} parent=35 // pred_check
        %p1892 = pneg %p127
      $region38: #{block_forward.7} parent=35 // pred_check_branch
        %1894 = sbr.rel (%p1892) target = $region40
      $region39: #{block_forward.7} parent=35 // pred_region
        _
      $region40: #{block_forward.7} parent=35 // pred_fallthru
        _
    $region36: #{block_forward.7} parent=5 // pred_fallthru
      _
    %p1895 = scmp.le.s32.totalorder 2, %s10
    // Predicated region
    $region41: #{block_forward.7} parent=5 // pred_check
      %p1896 = pneg %p1895
    $region42: #{block_forward.7} parent=5 // pred_check_branch
      %1898 = sbr.rel (%p1896) target = $region44
    $region43: #{block_forward.7} parent=5 // pred_region
      %s1899 = ssub.s32 %s10, 2
      // Predicated region
      $region45: #{block_forward.7} parent=43 // pred_check
        %p1900 = pneg %p133
      $region46: #{block_forward.7} parent=43 // pred_check_branch
        %1902 = sbr.rel (%p1900) target = $region48
      $region47: #{block_forward.7} parent=43 // pred_region
        %p1903 = scmp.lt.s32.totalorder %s16, 1
        %s1904 = scalar_select %p1903, %s16, 1
        %s1905 = smul.addr %s1904, 8
        %s1906 = smul.addr %s1905, 8
        %s1907 = scalar_lea.vmem %s4, %s1906
      $region48: #{block_forward.7} parent=43 // pred_fallthru
        _
    $region44: #{block_forward.7} parent=5 // pred_fallthru
      _
  $region6: #{block_forward.7} parent=0 // loop_footer
    %s14 = sadd.s32 1, %s10
  $region7: #{block_forward.7} parent=0 // loop_footer_branch
    %9 = sbr.rel target = $region3
  $region8: #{block_forward.7} parent=0 // loop_exit
    _

</llo_original>
